<compile_context>
chip_gen: v6e
topology: v6e:2x2x1
jax: 0.10.0
libtpu: 0.0.40
codegen_flags: <defaults>
</compile_context>

<pallas_src>
import functools

import jax
import jax.numpy as jnp
from jax import lax
from jax.experimental import pallas as pl
from jax.experimental.pallas import tpu as pltpu

_LANE = 128  # lane width of a vreg


def _encoder_head_kernel(pcl_ref, w1a_ref, w1b_ref, b1_ref, w2_ref, b2_ref, out_ref, *, d):
    pcl = pcl_ref[...]                        # [tb, nd] f32, nd % 128 == 0, lane-dense
    tb, nd = pcl.shape

    # First point's features live in lanes [0, d) of the leading 128-lane slab.
    first_slab = pcl[:, :_LANE]               # tile-aligned slice, no relayout

    # Max over points 1..N-1:
    #  1) mask point 0's d lanes with -inf (one lane-slab worth of select),
    #  2) fold the remaining 128-lane slabs with elementwise max,
    #  3) butterfly-reduce the d-lane groups inside the slab with pltpu.roll
    #     (XLU slot, essentially free next to the VALU maxes).
    lane = lax.broadcasted_iota(jnp.int32, (tb, _LANE), 1)
    m = jnp.where(lane < d, -jnp.inf, first_slab)
    for c in range(1, nd // _LANE):
        m = jnp.maximum(m, pcl[:, c * _LANE:(c + 1) * _LANE])
    w = _LANE
    while w > d:
        w //= 2
        m = jnp.maximum(m, pltpu.roll(m, shift=w, axis=1))
    # Every d-lane group of `m` now equals max over points 1..N-1 (all finite
    # since N >= 2 guarantees at least one unmasked point per group).

    # Layer 1: w1a/w1b are zero-padded to K=128, so the full slabs go straight
    # into the MXU — no lane select/shift, padded rows contribute exactly 0.
    h = (
        jnp.dot(first_slab, w1a_ref[...], preferred_element_type=jnp.float32)
        + jnp.dot(m, w1b_ref[...], preferred_element_type=jnp.float32)
        + b1_ref[...]
    )

    # Exact (erf) GELU in f32 — matches PyTorch nn.GELU() default.
    h = 0.5 * h * (1.0 + lax.erf(h * jnp.float32(0.7071067811865476)))

    # Layer 2.
    out = jnp.dot(h, w2_ref[...], preferred_element_type=jnp.float32) + b2_ref[...]
    out_ref[...] = out.astype(out_ref.dtype)


def _pick_tb(B, tb):
    """Batch tile: large enough to amortize per-step overhead, >=2 grid steps at
    large B (so v7x's 2 TCs both get work), sublane-aligned, VMEM-safe."""
    if tb is None:
        tb = 4096                      # ~1 MB pcl/step at N*D=256, ~12 MB VMEM total
    tb = min(tb, B)
    if B >= 1024:
        tb = min(tb, -(-B // 2))       # keep at least 2 grid steps
    if tb < B:
        tb = max(8, (tb // 8) * 8)     # sublane-align partial blocks
    return tb


@functools.partial(jax.jit, static_argnames=("tb",))
def encoder_head_pallas(encoded_pcl, w1, b1, w2, b2, *, tb=None):
    B, N, D = encoded_pcl.shape
    encoded_dim, latent_dim = w1.shape
    assert encoded_dim == 2 * D, "encoded_dim must equal 2 * per-point feature dim"
    assert N >= 2, "EncoderHead requires N >= 2 points (max over points 1..N-1)"
    ND = N * D
    # Fast-path layout constraints for the lane-dense kernel.
    assert ND % _LANE == 0, "N*D must be a multiple of 128 for the Pallas path"
    assert D <= _LANE and _LANE % D == 0, "per-point dim must divide 128"

    # Free wrapper-side reshape: same HBM bytes, now fully lane-dense.
    pcl2d = encoded_pcl.reshape(B, ND)

    # Zero-pad w1's two D-row halves to the 128-lane K tile (rows D..127 = 0).
    w1a = jnp.zeros((_LANE, latent_dim), w1.dtype).at[:D].set(w1[:D])   # first point
    w1b = jnp.zeros((_LANE, latent_dim), w1.dtype).at[:D].set(w1[D:])   # rest-max

    b1 = jnp.reshape(b1, (1, latent_dim))
    b2 = jnp.reshape(b2, (1, latent_dim))

    tb = _pick_tb(B, tb)
    grid = (pl.cdiv(B, tb),)
    # Note: if B % tb != 0 the last block reads past B; those garbage rows only
    # feed dropped output rows (fine under Pallas block semantics).

    kernel = functools.partial(_encoder_head_kernel, d=D)
    return pl.pallas_call(
        kernel,
        out_shape=jax.ShapeDtypeStruct((B, latent_dim), jnp.float32),
        grid_spec=pltpu.PrefetchScalarGridSpec(
            num_scalar_prefetch=0,
            grid=grid,
            in_specs=[
                # Only large operand: tiled over batch, double-buffered.
                pl.BlockSpec((tb, ND), lambda i: (i, 0)),
                # Small weights / biases: full blocks, same tile every step.
                pl.BlockSpec((_LANE, latent_dim), lambda i: (0, 0)),
                pl.BlockSpec((_LANE, latent_dim), lambda i: (0, 0)),
                pl.BlockSpec((1, latent_dim), lambda i: (0, 0)),
                pl.BlockSpec((latent_dim, latent_dim), lambda i: (0, 0)),
                pl.BlockSpec((1, latent_dim), lambda i: (0, 0)),
            ],
            out_specs=pl.BlockSpec((tb, latent_dim), lambda i: (i, 0)),
        ),
        compiler_params=pltpu.CompilerParams(
            # Independent batch rows -> shard the grid across TCs on v7x.
            dimension_semantics=("parallel",),
            # Dense layout needs ~3 KB/row double-buffered: tb=4096 is ~12 MB,
            # comfortably under v5e(128 MiB)/v6e(128 MiB)/v7x(64 MiB) with the
            # explicit 32 MiB scoped limit.
            vmem_limit_bytes=32 * 1024 * 1024,
        ),
    )(pcl2d, w1a, w1b, b1, w2, b2)


def encoder_head_ref(encoded_pcl, w1, b1, w2, b2):
    first = encoded_pcl[:, 0]
    rest_max = jnp.max(encoded_pcl[:, 1:], axis=1)
    x = jnp.concatenate([first, rest_max], axis=-1)
    h = x @ w1 + jnp.reshape(b1, (1, -1))
    h = 0.5 * h * (1.0 + lax.erf(h / jnp.sqrt(2.0)))
    return h @ w2 + jnp.reshape(b2, (1, -1))


def encoder_head(encoded_pcl, w1, b1, w2, b2, *, tb=None, min_pallas_batch=1024):
    """Dispatcher: Pallas kernel at large B / supported layouts, fused XLA otherwise
    (the fixed pallas_call overhead dominates below ~1K rows)."""
    B, N, D = encoded_pcl.shape
    ND = N * D
    fast = (
        B >= min_pallas_batch
        and N >= 2
        and ND % _LANE == 0
        and D <= _LANE
        and _LANE % D == 0
    )
    if not fast:
        return encoder_head_ref(encoded_pcl, w1, b1, w2, b2)
    return encoder_head_pallas(encoded_pcl, w1, b1, w2, b2, tb=tb)


if __name__ == "__main__":
    # Module-consistent shapes: N=8 points, D=32 features per point ->
    # encoded_dim = 64, latent_dim = 32.  B=2048 gives 2 grid steps at tb=1024.
    B, N, D = 2048, 8, 32
    encoded_dim = 2 * D
    latent_dim = 32

    key = jax.random.PRNGKey(0)
    k_pcl, k_w1, k_b1, k_w2, k_b2 = jax.random.split(key, 5)

    encoded_pcl = jax.random.normal(k_pcl, (B, N, D), dtype=jnp.float32)

    # Deterministic parameter init (shapes from the nn.Linear layers), stored as
    # [in, out] so the kernel computes x @ W + b.
    w1 = jax.random.normal(k_w1, (encoded_dim, latent_dim), dtype=jnp.float32) * 0.05
    b1 = jax.random.normal(k_b1, (1, latent_dim), dtype=jnp.float32) * 0.05
    w2 = jax.random.normal(k_w2, (latent_dim, latent_dim), dtype=jnp.float32) * 0.05
    b2 = jax.random.normal(k_b2, (1, latent_dim), dtype=jnp.float32) * 0.05

    # Exercise the Pallas kernel directly (the dispatcher would also pick it at this B).
    out = encoder_head_pallas(encoded_pcl, w1, b1, w2, b2)
    out = jax.block_until_ready(out)

    ref = encoder_head_ref(encoded_pcl, w1, b1, w2, b2)
    assert out.shape == (B, latent_dim)
    # Split/zero-padded-K matmuls change the f32 summation order slightly vs the
    # fused reference.
    assert jnp.allclose(out, ref, atol=1e-4, rtol=1e-5)

    print("KERNEL_OK")
</pallas_src>

<mosaic_0001>
module attributes {stable_mosaic.version = 11 : i64} {
  func.func @_encoder_head_kernel(%arg0: i32, %arg1: memref<1024x256xf32, #tpu.memory_space<vmem>>, %arg2: memref<128x32xf32, #tpu.memory_space<vmem>>, %arg3: memref<128x32xf32, #tpu.memory_space<vmem>>, %arg4: memref<1x32xf32, #tpu.memory_space<vmem>>, %arg5: memref<32x32xf32, #tpu.memory_space<vmem>>, %arg6: memref<1x32xf32, #tpu.memory_space<vmem>>, %arg7: memref<1024x32xf32, #tpu.memory_space<vmem>>) attributes {dimension_semantics = [#tpu.dimension_semantics<parallel>], iteration_bounds = array<i64: 2>, scalar_prefetch = 0 : i64, scratch_operands = 0 : i64, tpu.core_type = #tpu.core_type<tc>, window_params = [{transform_indices = @transform_0, window_bounds = array<i64: 1024, 256>}, {pipeline_mode = #tpu.pipeline_mode<synchronous>, transform_indices = @transform_1, window_bounds = array<i64: 128, 32>}, {pipeline_mode = #tpu.pipeline_mode<synchronous>, transform_indices = @transform_2, window_bounds = array<i64: 128, 32>}, {pipeline_mode = #tpu.pipeline_mode<synchronous>, transform_indices = @transform_3, window_bounds = array<i64: 1, 32>}, {pipeline_mode = #tpu.pipeline_mode<synchronous>, transform_indices = @transform_4, window_bounds = array<i64: 32, 32>}, {pipeline_mode = #tpu.pipeline_mode<synchronous>, transform_indices = @transform_5, window_bounds = array<i64: 1, 32>}, {transform_indices = @transform_6, window_bounds = array<i64: 1024, 32>}]} {
    %c0 = arith.constant 0 : index
    %c0_0 = arith.constant 0 : index
    %0 = vector.load %arg1[%c0, %c0_0] : memref<1024x256xf32, #tpu.memory_space<vmem>>, vector<1024x256xf32>
    %1 = vector.extract_strided_slice %0 {offsets = [0, 0], sizes = [1024, 128], strides = [1, 1]} : vector<1024x256xf32> to vector<1024x128xf32>
    %2 = tpu.iota {dimensions = array<i32: 1>} : vector<1024x128xi32>
    %c32_i32 = arith.constant 32 : i32
    %3 = vector.broadcast %c32_i32 : i32 to vector<1024x128xi32>
    %4 = arith.cmpi slt, %2, %3 : vector<1024x128xi32>
    %cst = arith.constant 0xFF800000 : f32
    %5 = vector.broadcast %cst : f32 to vector<1024x128xf32>
    %6 = arith.select %4, %5, %1 : vector<1024x128xi1>, vector<1024x128xf32>
    %7 = vector.extract_strided_slice %0 {offsets = [0, 128], sizes = [1024, 128], strides = [1, 1]} : vector<1024x256xf32> to vector<1024x128xf32>
    %8 = arith.maximumf %6, %7 : vector<1024x128xf32>
    %c64_i32 = arith.constant 64 : i32
    %9 = tpu.dynamic_rotate %8 by %c64_i32 dim 1 : vector<1024x128xf32>, i32 -> vector<1024x128xf32>
    %10 = arith.maximumf %8, %9 : vector<1024x128xf32>
    %c32_i32_1 = arith.constant 32 : i32
    %11 = tpu.dynamic_rotate %10 by %c32_i32_1 dim 1 : vector<1024x128xf32>, i32 -> vector<1024x128xf32>
    %12 = arith.maximumf %10, %11 : vector<1024x128xf32>
    %c0_2 = arith.constant 0 : index
    %c0_3 = arith.constant 0 : index
    %13 = vector.load %arg2[%c0_2, %c0_3] : memref<128x32xf32, #tpu.memory_space<vmem>>, vector<128x32xf32>
    %cst_4 = arith.constant dense<0.000000e+00> : vector<1024x32xf32>
    %14 = tpu.matmul %1, %13, %cst_4 {dimension_numbers = #tpu.dot_dimension_numbers<[1], [0], [0], [1], [0, 0, 1, 1], [], []>} : vector<1024x128xf32>, vector<128x32xf32>, vector<1024x32xf32> -> vector<1024x32xf32>
    %c0_5 = arith.constant 0 : index
    %c0_6 = arith.constant 0 : index
    %15 = vector.load %arg3[%c0_5, %c0_6] : memref<128x32xf32, #tpu.memory_space<vmem>>, vector<128x32xf32>
    %cst_7 = arith.constant dense<0.000000e+00> : vector<1024x32xf32>
    %16 = tpu.matmul %12, %15, %cst_7 {dimension_numbers = #tpu.dot_dimension_numbers<[1], [0], [0], [1], [0, 0, 1, 1], [], []>} : vector<1024x128xf32>, vector<128x32xf32>, vector<1024x32xf32> -> vector<1024x32xf32>
    %17 = arith.addf %14, %16 : vector<1024x32xf32>
    %c0_8 = arith.constant 0 : index
    %c0_9 = arith.constant 0 : index
    %18 = vector.load %arg4[%c0_8, %c0_9] : memref<1x32xf32, #tpu.memory_space<vmem>>, vector<1x32xf32>
    %19 = vector.broadcast %18 : vector<1x32xf32> to vector<1024x32xf32>
    %20 = arith.addf %17, %19 : vector<1024x32xf32>
    %cst_10 = arith.constant 5.000000e-01 : f32
    %21 = vector.broadcast %cst_10 : f32 to vector<1024x32xf32>
    %22 = arith.mulf %21, %20 : vector<1024x32xf32>
    %cst_11 = arith.constant 0.707106769 : f32
    %23 = vector.broadcast %cst_11 : f32 to vector<1024x32xf32>
    %24 = arith.mulf %20, %23 : vector<1024x32xf32>
    %25 = math.erf %24 : vector<1024x32xf32>
    %cst_12 = arith.constant 1.000000e+00 : f32
    %26 = vector.broadcast %cst_12 : f32 to vector<1024x32xf32>
    %27 = arith.addf %26, %25 : vector<1024x32xf32>
    %28 = arith.mulf %22, %27 : vector<1024x32xf32>
    %c0_13 = arith.constant 0 : index
    %c0_14 = arith.constant 0 : index
    %29 = vector.load %arg5[%c0_13, %c0_14] : memref<32x32xf32, #tpu.memory_space<vmem>>, vector<32x32xf32>
    %cst_15 = arith.constant dense<0.000000e+00> : vector<1024x32xf32>
    %30 = tpu.matmul %28, %29, %cst_15 {dimension_numbers = #tpu.dot_dimension_numbers<[1], [0], [0], [1], [0, 0, 1, 1], [], []>} : vector<1024x32xf32>, vector<32x32xf32>, vector<1024x32xf32> -> vector<1024x32xf32>
    %c0_16 = arith.constant 0 : index
    %c0_17 = arith.constant 0 : index
    %31 = vector.load %arg6[%c0_16, %c0_17] : memref<1x32xf32, #tpu.memory_space<vmem>>, vector<1x32xf32>
    %32 = vector.broadcast %31 : vector<1x32xf32> to vector<1024x32xf32>
    %33 = arith.addf %30, %32 : vector<1024x32xf32>
    %c0_18 = arith.constant 0 : index
    %c0_19 = arith.constant 0 : index
    %34 = vector.load %arg7[%c0_18, %c0_19] : memref<1024x32xf32, #tpu.memory_space<vmem>>, vector<1024x32xf32>
    tpu.vector_store %arg7[%c0_18, %c0_19], %33 {strides = array<i32>} : memref<1024x32xf32, #tpu.memory_space<vmem>>, vector<1024x32xf32>,
    return
  }
  func.func @transform_0(%arg0: i32) -> (i32, i32) {
    %c0_i32 = arith.constant 0 : i32
    %c0_i32_0 = arith.constant 0 : i32
    return %arg0, %c0_i32 : i32, i32
  }
  func.func @transform_1(%arg0: i32) -> (i32, i32) {
    %c0_i32 = arith.constant 0 : i32
    %c0_i32_0 = arith.constant 0 : i32
    %c0_i32_1 = arith.constant 0 : i32
    return %c0_i32, %c0_i32_0 : i32, i32
  }
  func.func @transform_2(%arg0: i32) -> (i32, i32) {
    %c0_i32 = arith.constant 0 : i32
    %c0_i32_0 = arith.constant 0 : i32
    %c0_i32_1 = arith.constant 0 : i32
    return %c0_i32, %c0_i32_0 : i32, i32
  }
  func.func @transform_3(%arg0: i32) -> (i32, i32) {
    %c0_i32 = arith.constant 0 : i32
    %c0_i32_0 = arith.constant 0 : i32
    %c0_i32_1 = arith.constant 0 : i32
    return %c0_i32, %c0_i32_0 : i32, i32
  }
  func.func @transform_4(%arg0: i32) -> (i32, i32) {
    %c0_i32 = arith.constant 0 : i32
    %c0_i32_0 = arith.constant 0 : i32
    %c0_i32_1 = arith.constant 0 : i32
    return %c0_i32, %c0_i32_0 : i32, i32
  }
  func.func @transform_5(%arg0: i32) -> (i32, i32) {
    %c0_i32 = arith.constant 0 : i32
    %c0_i32_0 = arith.constant 0 : i32
    %c0_i32_1 = arith.constant 0 : i32
    return %c0_i32, %c0_i32_0 : i32, i32
  }
  func.func @transform_6(%arg0: i32) -> (i32, i32) {
    %c0_i32 = arith.constant 0 : i32
    %c0_i32_0 = arith.constant 0 : i32
    return %arg0, %c0_i32 : i32, i32
  }
}

</mosaic_0001>

<llo_original>
// kernel: encoder_head_pallas.1
$region0: #{encoder_head_pallas.1}
  #allocation0 [shape = 'u32[]', space=smem, size = 0x4, offset = 0x4, fixed_abs, tag = 'smem constant byte address 0x4 - core index']
  #allocation1 [shape = 'u32[144,128]{1,0:T(1,128)}', space=vmem, size = 0x12000, scoped, tag = 'internal scratch']
  %s0 = inlined_call_operand.vmem [shape: f32[2048,256], index: 0, kind: input, shape index: {}]
  %s1 = inlined_call_operand.vmem [shape: f32[128,32], index: 1, kind: input, shape index: {}]
  %s2 = inlined_call_operand.vmem [shape: f32[128,32], index: 2, kind: input, shape index: {}]
  %s3 = inlined_call_operand.vmem [shape: f32[1,32], index: 3, kind: input, shape index: {}]
  %s4 = inlined_call_operand.vmem [shape: f32[32,32], index: 4, kind: input, shape index: {}]
  %s5 = inlined_call_operand.vmem [shape: f32[1,32], index: 5, kind: input, shape index: {}]
  %s6 = inlined_call_operand.vmem [shape: f32[2048,32], index: 6, kind: output, shape index: {}]
  %s7 = sld [smem:[#allocation0]]
  $region57: #{encoder_head_pallas.1} parent=0
    _
  %s9 = ssub.s32 1, %s7
  %s10 = scalar_select 0, %s9, %s7
  loop: start=0, step=1, limit=4
  $region2: #{encoder_head_pallas.1} parent=0 // loop_pre_header
    _
  $region3: #{encoder_head_pallas.1} parent=0 // loop_header
    %s12 = sphi 0, %s16
    %p13 = scmp.ge.s32.totalorder %s12, 4
    %s22 = sphi 0, %s24
    %s25 = sphi 0, %s22
    %s26 = sphi 0, %s25
    %s42 = sphi 0, %s26
    %s46 = sphi 0, %s46
    %s48 = sphi 0, %s46
    %s49 = sphi 0, %s48
    %s63 = sphi 0, %s49
    %s67 = sphi 0, %s67
    %s69 = sphi 0, %s67
    %s70 = sphi 0, %s69
    %s84 = sphi 0, %s70
    %s88 = sphi 0, %s88
    %s90 = sphi 0, %s88
    %s91 = sphi 0, %s90
    %s105 = sphi 0, %s91
    %s109 = sphi 0, %s109
    %s111 = sphi 0, %s109
    %s112 = sphi 0, %s111
    %s126 = sphi 0, %s112
    %s130 = sphi 0, %s130
    %s132 = sphi 0, %s130
    %s133 = sphi 0, %s132
    %s147 = sphi 0, %s133
    %s153 = sphi 0, %s155
    %s156 = sphi 0, %s153
    %s157 = sphi 0, %s156
    %s173 = sphi 0, %s157
  $region4: #{encoder_head_pallas.1} parent=0 // loop_header_branch
    %15 = sbr.rel (%p13) target = $region8
  $region5: #{encoder_head_pallas.1} parent=0 // loop_body
    %s17 = ssub.s32 %s12, 1
    %s18 = ssub.s32 %s12, 2
    %s19 = sadd.s32 %s12, 1
    %s20 = ssub.s32 %s12, %s19
    %p21 = scmp.eq.s32.totalorder %s20, 0
    %s23 = sadd.s32 %s22, 1
    %s24 = scalar_select %p21, %s22, %s23
    %p27 = pneg %p21
    %p28 = scmp.eq.s32.totalorder %s12, 1
    %p29 = por %p27, %p28
    %p30 = scmp.ne.s32.totalorder %s22, %s25
    %p31 = scmp.eq.s32.totalorder %s12, 0
    %p32 = por %p30, %p31
    %p33 = scmp.ne.s32.totalorder %s22, %s25
    %p34 = scmp.eq.s32.totalorder %s17, 1
    %p35 = por %p33, %p34
    %p36 = scmp.ne.s32.totalorder %s25, %s26
    %p37 = scmp.eq.s32.totalorder %s17, 0
    %p38 = por %p36, %p37
    %p39 = scmp.ne.s32.totalorder %s25, %s26
    %p40 = scmp.eq.s32.totalorder %s18, 1
    %p41 = por %p39, %p40
    %p43 = scmp.ne.s32.totalorder %s26, %s42
    %p44 = scmp.eq.s32.totalorder %s18, 0
    %p45 = por %p43, %p44
    %s47 = sadd.s32 %s46, 1
    %p50 = scmp.eq.s32.totalorder %s12, 1
    %p51 = scmp.ne.s32.totalorder %s46, %s48
    %p52 = scmp.eq.s32.totalorder %s12, 0
    %p53 = por %p51, %p52
    %p54 = scmp.ne.s32.totalorder %s46, %s48
    %p55 = scmp.eq.s32.totalorder %s17, 1
    %p56 = por %p54, %p55
    %p57 = scmp.ne.s32.totalorder %s48, %s49
    %p58 = scmp.eq.s32.totalorder %s17, 0
    %p59 = por %p57, %p58
    %p60 = scmp.ne.s32.totalorder %s48, %s49
    %p61 = scmp.eq.s32.totalorder %s18, 1
    %p62 = por %p60, %p61
    %p64 = scmp.ne.s32.totalorder %s49, %s63
    %p65 = scmp.eq.s32.totalorder %s18, 0
    %p66 = por %p64, %p65
    %s68 = sadd.s32 %s67, 1
    %p71 = scmp.eq.s32.totalorder %s12, 1
    %p72 = scmp.ne.s32.totalorder %s67, %s69
    %p73 = scmp.eq.s32.totalorder %s12, 0
    %p74 = por %p72, %p73
    %p75 = scmp.ne.s32.totalorder %s67, %s69
    %p76 = scmp.eq.s32.totalorder %s17, 1
    %p77 = por %p75, %p76
    %p78 = scmp.ne.s32.totalorder %s69, %s70
    %p79 = scmp.eq.s32.totalorder %s17, 0
    %p80 = por %p78, %p79
    %p81 = scmp.ne.s32.totalorder %s69, %s70
    %p82 = scmp.eq.s32.totalorder %s18, 1
    %p83 = por %p81, %p82
    %p85 = scmp.ne.s32.totalorder %s70, %s84
    %p86 = scmp.eq.s32.totalorder %s18, 0
    %p87 = por %p85, %p86
    %s89 = sadd.s32 %s88, 1
    %p92 = scmp.eq.s32.totalorder %s12, 1
    %p93 = scmp.ne.s32.totalorder %s88, %s90
    %p94 = scmp.eq.s32.totalorder %s12, 0
    %p95 = por %p93, %p94
    %p96 = scmp.ne.s32.totalorder %s88, %s90
    %p97 = scmp.eq.s32.totalorder %s17, 1
    %p98 = por %p96, %p97
    %p99 = scmp.ne.s32.totalorder %s90, %s91
    %p100 = scmp.eq.s32.totalorder %s17, 0
    %p101 = por %p99, %p100
    %p102 = scmp.ne.s32.totalorder %s90, %s91
    %p103 = scmp.eq.s32.totalorder %s18, 1
    %p104 = por %p102, %p103
    %p106 = scmp.ne.s32.totalorder %s91, %s105
    %p107 = scmp.eq.s32.totalorder %s18, 0
    %p108 = por %p106, %p107
    %s110 = sadd.s32 %s109, 1
    %p113 = scmp.eq.s32.totalorder %s12, 1
    %p114 = scmp.ne.s32.totalorder %s109, %s111
    %p115 = scmp.eq.s32.totalorder %s12, 0
    %p116 = por %p114, %p115
    %p117 = scmp.ne.s32.totalorder %s109, %s111
    %p118 = scmp.eq.s32.totalorder %s17, 1
    %p119 = por %p117, %p118
    %p120 = scmp.ne.s32.totalorder %s111, %s112
    %p121 = scmp.eq.s32.totalorder %s17, 0
    %p122 = por %p120, %p121
    %p123 = scmp.ne.s32.totalorder %s111, %s112
    %p124 = scmp.eq.s32.totalorder %s18, 1
    %p125 = por %p123, %p124
    %p127 = scmp.ne.s32.totalorder %s112, %s126
    %p128 = scmp.eq.s32.totalorder %s18, 0
    %p129 = por %p127, %p128
    %s131 = sadd.s32 %s130, 1
    %p134 = scmp.eq.s32.totalorder %s12, 1
    %p135 = scmp.ne.s32.totalorder %s130, %s132
    %p136 = scmp.eq.s32.totalorder %s12, 0
    %p137 = por %p135, %p136
    %p138 = scmp.ne.s32.totalorder %s130, %s132
    %p139 = scmp.eq.s32.totalorder %s17, 1
    %p140 = por %p138, %p139
    %p141 = scmp.ne.s32.totalorder %s132, %s133
    %p142 = scmp.eq.s32.totalorder %s17, 0
    %p143 = por %p141, %p142
    %p144 = scmp.ne.s32.totalorder %s132, %s133
    %p145 = scmp.eq.s32.totalorder %s18, 1
    %p146 = por %p144, %p145
    %p148 = scmp.ne.s32.totalorder %s133, %s147
    %p149 = scmp.eq.s32.totalorder %s18, 0
    %p150 = por %p148, %p149
    %s151 = ssub.s32 %s12, %s19
    %p152 = scmp.eq.s32.totalorder %s151, 0
    %s154 = sadd.s32 %s153, 1
    %s155 = scalar_select %p152, %s153, %s154
    %p158 = pneg %p152
    %p159 = scmp.eq.s32.totalorder %s12, 1
    %p160 = por %p158, %p159
    %p161 = scmp.ne.s32.totalorder %s153, %s156
    %p162 = scmp.eq.s32.totalorder %s12, 0
    %p163 = por %p161, %p162
    %p164 = scmp.ne.s32.totalorder %s153, %s156
    %p165 = scmp.eq.s32.totalorder %s17, 1
    %p166 = por %p164, %p165
    %p167 = scmp.ne.s32.totalorder %s156, %s157
    %p168 = scmp.eq.s32.totalorder %s17, 0
    %p169 = por %p167, %p168
    %p170 = scmp.ne.s32.totalorder %s156, %s157
    %p171 = scmp.eq.s32.totalorder %s18, 1
    %p172 = por %p170, %p171
    %p174 = scmp.ne.s32.totalorder %s157, %s173
    %p175 = scmp.eq.s32.totalorder %s18, 0
    %p176 = por %p174, %p175
    %p177 = scmp.le.s32.totalorder 1, %s12
    %p178 = scmp.lt.s32.totalorder %s12, 3
    %p179 = pnand %p177, %p178
    %p180 = pneg %p179
    // Predicated region
    $region9: #{encoder_head_pallas.1} parent=5 // pred_check
      _
    $region10: #{encoder_head_pallas.1} parent=5 // pred_check_branch
      %182 = sbr.rel (%p179) target = $region12
    $region11: #{encoder_head_pallas.1} parent=5 // pred_region
      %s183 = ssub.s32 %s12, 1
      // Predicated region
      $region13: #{encoder_head_pallas.1} parent=11 // pred_check
        %p184 = pneg %p59
      $region14: #{encoder_head_pallas.1} parent=11 // pred_check_branch
        %186 = sbr.rel (%p184) target = $region16
      $region15: #{encoder_head_pallas.1} parent=11 // pred_region
        _
      $region16: #{encoder_head_pallas.1} parent=11 // pred_fallthru
        _
      // Predicated region
      $region17: #{encoder_head_pallas.1} parent=11 // pred_check
        %p187 = pneg %p80
      $region18: #{encoder_head_pallas.1} parent=11 // pred_check_branch
        %189 = sbr.rel (%p187) target = $region20
      $region19: #{encoder_head_pallas.1} parent=11 // pred_region
        _
      $region20: #{encoder_head_pallas.1} parent=11 // pred_fallthru
        _
      // Predicated region
      $region21: #{encoder_head_pallas.1} parent=11 // pred_check
        %p190 = pneg %p101
      $region22: #{encoder_head_pallas.1} parent=11 // pred_check_branch
        %192 = sbr.rel (%p190) target = $region24
      $region23: #{encoder_head_pallas.1} parent=11 // pred_region
        _
      $region24: #{encoder_head_pallas.1} parent=11 // pred_fallthru
        _
      // Predicated region
      $region25: #{encoder_head_pallas.1} parent=11 // pred_check
        %p193 = pneg %p122
      $region26: #{encoder_head_pallas.1} parent=11 // pred_check_branch
        %195 = sbr.rel (%p193) target = $region28
      $region27: #{encoder_head_pallas.1} parent=11 // pred_region
        _
      $region28: #{encoder_head_pallas.1} parent=11 // pred_fallthru
        _
      // Predicated region
      $region29: #{encoder_head_pallas.1} parent=11 // pred_check
        %p196 = pneg %p143
      $region30: #{encoder_head_pallas.1} parent=11 // pred_check_branch
        %198 = sbr.rel (%p196) target = $region32
      $region31: #{encoder_head_pallas.1} parent=11 // pred_region
        _
      $region32: #{encoder_head_pallas.1} parent=11 // pred_fallthru
        _
    $region12: #{encoder_head_pallas.1} parent=5 // pred_fallthru
      _
    %p199 = scmp.lt.s32.totalorder %s12, 2
    // Predicated region
    $region33: #{encoder_head_pallas.1} parent=5 // pred_check
      %p200 = pneg %p199
    $region34: #{encoder_head_pallas.1} parent=5 // pred_check_branch
      %202 = sbr.rel (%p200) target = $region36
    $region35: #{encoder_head_pallas.1} parent=5 // pred_region
      // Predicated region
      $region37: #{encoder_head_pallas.1} parent=35 // pred_check
        %p203 = pneg %p32
      $region38: #{encoder_head_pallas.1} parent=35 // pred_check_branch
        %205 = sbr.rel (%p203) target = $region40
      $region39: #{encoder_head_pallas.1} parent=35 // pred_region
        %s206 = smul.u32 128, %s12
        %p207 = scmp.lt.s32.totalorder %s206, 255
        %s208 = scalar_select %p207, %s206, 255
        %s209 = smul.addr %s208, 2
        %s210 = smul.addr %s209, 8
        %s211 = scalar_lea.vmem %s0, %s210
        %s212 = smul.u32 128, %s12
      $region40: #{encoder_head_pallas.1} parent=35 // pred_fallthru
        _
    $region36: #{encoder_head_pallas.1} parent=5 // pred_fallthru
      _
    %p213 = scmp.le.s32.totalorder 1, %s12
    %p214 = scmp.lt.s32.totalorder %s12, 3
    %p215 = pnand %p213, %p214
    %p216 = pneg %p215
    // Predicated region
    $region41: #{encoder_head_pallas.1} parent=5 // pred_check
      _
    $region42: #{encoder_head_pallas.1} parent=5 // pred_check_branch
      %218 = sbr.rel (%p215) target = $region44
    $region43: #{encoder_head_pallas.1} parent=5 // pred_region
      %s219 = ssub.s32 %s12, 1
      %s220 = smul.u32 128, %s17
      %p221 = scmp.lt.s32.totalorder %s220, 255
      %s222 = scalar_select %p221, %s220, 255
      %s223 = smul.addr %s222, 2
      %s224 = smul.addr %s223, 8
      %s225 = scalar_lea.vmem %s0, %s224
      %p226 = pneg %p38
      %p227 = pneg %p35
      %p228 = pneg %p59
      %p229 = pneg %p56
      %p230 = pneg %p80
      %p231 = pneg %p77
      %p232 = pneg %p101
      %p233 = pneg %p98
      %p234 = pneg %p122
      %p235 = pneg %p119
      %p236 = pneg %p143
      %p237 = pneg %p140
      %p238 = pneg %p169
      %p239 = pneg %p166
      %s240 = smul.u32 128, %s17
      %p241 = scmp.lt.s32.totalorder %s240, 255
      %s242 = scalar_select %p241, %s240, 255
      %s243 = smul.addr %s242, 8
      %s244 = scalar_lea.vmem %s6, %s243
      %s245 = smul.u32 128, %s17
      %p246 = scmp.lt.s32.totalorder %s245, 255
      %s247 = scalar_select %p246, %s245, 255
      %s248 = smul.addr %s247, 2
      %s249 = smul.addr %s248, 8
      %s250 = scalar_lea.vmem %s0, %s249
      %s251 = smul.u32 128, %s17
      %s252 = smul.u32 128, %s17
      %p253 = scmp.lt.s32.totalorder %s252, 255
      %s254 = scalar_select %p253, %s252, 255
      %s255 = smul.addr %s254, 8
      %s256 = scalar_lea.vmem %s6, %s255
      %s257 = smul.u32 128, %s17
      %v258 = vld [vmem:[%s250] sm:$0xff]
      %v259 = vld [vmem:[%s250 + $0x8] sm:$0xff]
      %v260 = vld [vmem:[%s250 + $0x10] sm:$0xff]
      %v261 = vld [vmem:[%s250 + $0x18] sm:$0xff]
      %v262 = vld [vmem:[%s250 + $0x20] sm:$0xff]
      %v263 = vld [vmem:[%s250 + $0x28] sm:$0xff]
      %v264 = vld [vmem:[%s250 + $0x30] sm:$0xff]
      %v265 = vld [vmem:[%s250 + $0x38] sm:$0xff]
      %v266 = vld [vmem:[%s250 + $0x40] sm:$0xff]
      %v267 = vld [vmem:[%s250 + $0x48] sm:$0xff]
      %v268 = vld [vmem:[%s250 + $0x50] sm:$0xff]
      %v269 = vld [vmem:[%s250 + $0x58] sm:$0xff]
      %v270 = vld [vmem:[%s250 + $0x60] sm:$0xff]
      %v271 = vld [vmem:[%s250 + $0x68] sm:$0xff]
      %v272 = vld [vmem:[%s250 + $0x70] sm:$0xff]
      %v273 = vld [vmem:[%s250 + $0x78] sm:$0xff]
      %v274 = vld [vmem:[%s250 + $0x80] sm:$0xff]
      %v275 = vld [vmem:[%s250 + $0x88] sm:$0xff]
      %v276 = vld [vmem:[%s250 + $0x90] sm:$0xff]
      %v277 = vld [vmem:[%s250 + $0x98] sm:$0xff]
      %v278 = vld [vmem:[%s250 + $0xa0] sm:$0xff]
      %v279 = vld [vmem:[%s250 + $0xa8] sm:$0xff]
      %v280 = vld [vmem:[%s250 + $0xb0] sm:$0xff]
      %v281 = vld [vmem:[%s250 + $0xb8] sm:$0xff]
      %v282 = vld [vmem:[%s250 + $0xc0] sm:$0xff]
      %v283 = vld [vmem:[%s250 + $0xc8] sm:$0xff]
      %v284 = vld [vmem:[%s250 + $0xd0] sm:$0xff]
      %v285 = vld [vmem:[%s250 + $0xd8] sm:$0xff]
      %v286 = vld [vmem:[%s250 + $0xe0] sm:$0xff]
      %v287 = vld [vmem:[%s250 + $0xe8] sm:$0xff]
      %v288 = vld [vmem:[%s250 + $0xf0] sm:$0xff]
      %v289 = vld [vmem:[%s250 + $0xf8] sm:$0xff]
      %v290 = vld [vmem:[%s250 + $0x100] sm:$0xff]
      %v291 = vld [vmem:[%s250 + $0x108] sm:$0xff]
      %v292 = vld [vmem:[%s250 + $0x110] sm:$0xff]
      %v293 = vld [vmem:[%s250 + $0x118] sm:$0xff]
      %v294 = vld [vmem:[%s250 + $0x120] sm:$0xff]
      %v295 = vld [vmem:[%s250 + $0x128] sm:$0xff]
      %v296 = vld [vmem:[%s250 + $0x130] sm:$0xff]
      %v297 = vld [vmem:[%s250 + $0x138] sm:$0xff]
      %v298 = vld [vmem:[%s250 + $0x140] sm:$0xff]
      %v299 = vld [vmem:[%s250 + $0x148] sm:$0xff]
      %v300 = vld [vmem:[%s250 + $0x150] sm:$0xff]
      %v301 = vld [vmem:[%s250 + $0x158] sm:$0xff]
      %v302 = vld [vmem:[%s250 + $0x160] sm:$0xff]
      %v303 = vld [vmem:[%s250 + $0x168] sm:$0xff]
      %v304 = vld [vmem:[%s250 + $0x170] sm:$0xff]
      %v305 = vld [vmem:[%s250 + $0x178] sm:$0xff]
      %v306 = vld [vmem:[%s250 + $0x180] sm:$0xff]
      %v307 = vld [vmem:[%s250 + $0x188] sm:$0xff]
      %v308 = vld [vmem:[%s250 + $0x190] sm:$0xff]
      %v309 = vld [vmem:[%s250 + $0x198] sm:$0xff]
      %v310 = vld [vmem:[%s250 + $0x1a0] sm:$0xff]
      %v311 = vld [vmem:[%s250 + $0x1a8] sm:$0xff]
      %v312 = vld [vmem:[%s250 + $0x1b0] sm:$0xff]
      %v313 = vld [vmem:[%s250 + $0x1b8] sm:$0xff]
      %v314 = vld [vmem:[%s250 + $0x1c0] sm:$0xff]
      %v315 = vld [vmem:[%s250 + $0x1c8] sm:$0xff]
      %v316 = vld [vmem:[%s250 + $0x1d0] sm:$0xff]
      %v317 = vld [vmem:[%s250 + $0x1d8] sm:$0xff]
      %v318 = vld [vmem:[%s250 + $0x1e0] sm:$0xff]
      %v319 = vld [vmem:[%s250 + $0x1e8] sm:$0xff]
      %v320 = vld [vmem:[%s250 + $0x1f0] sm:$0xff]
      %v321 = vld [vmem:[%s250 + $0x1f8] sm:$0xff]
      %v322 = vld [vmem:[%s250 + $0x200] sm:$0xff]
      %v323 = vld [vmem:[%s250 + $0x208] sm:$0xff]
      %v324 = vld [vmem:[%s250 + $0x210] sm:$0xff]
      %v325 = vld [vmem:[%s250 + $0x218] sm:$0xff]
      %v326 = vld [vmem:[%s250 + $0x220] sm:$0xff]
      %v327 = vld [vmem:[%s250 + $0x228] sm:$0xff]
      %v328 = vld [vmem:[%s250 + $0x230] sm:$0xff]
      %v329 = vld [vmem:[%s250 + $0x238] sm:$0xff]
      %v330 = vld [vmem:[%s250 + $0x240] sm:$0xff]
      %v331 = vld [vmem:[%s250 + $0x248] sm:$0xff]
      %v332 = vld [vmem:[%s250 + $0x250] sm:$0xff]
      %v333 = vld [vmem:[%s250 + $0x258] sm:$0xff]
      %v334 = vld [vmem:[%s250 + $0x260] sm:$0xff]
      %v335 = vld [vmem:[%s250 + $0x268] sm:$0xff]
      %v336 = vld [vmem:[%s250 + $0x270] sm:$0xff]
      %v337 = vld [vmem:[%s250 + $0x278] sm:$0xff]
      %v338 = vld [vmem:[%s250 + $0x280] sm:$0xff]
      %v339 = vld [vmem:[%s250 + $0x288] sm:$0xff]
      %v340 = vld [vmem:[%s250 + $0x290] sm:$0xff]
      %v341 = vld [vmem:[%s250 + $0x298] sm:$0xff]
      %v342 = vld [vmem:[%s250 + $0x2a0] sm:$0xff]
      %v343 = vld [vmem:[%s250 + $0x2a8] sm:$0xff]
      %v344 = vld [vmem:[%s250 + $0x2b0] sm:$0xff]
      %v345 = vld [vmem:[%s250 + $0x2b8] sm:$0xff]
      %v346 = vld [vmem:[%s250 + $0x2c0] sm:$0xff]
      %v347 = vld [vmem:[%s250 + $0x2c8] sm:$0xff]
      %v348 = vld [vmem:[%s250 + $0x2d0] sm:$0xff]
      %v349 = vld [vmem:[%s250 + $0x2d8] sm:$0xff]
      %v350 = vld [vmem:[%s250 + $0x2e0] sm:$0xff]
      %v351 = vld [vmem:[%s250 + $0x2e8] sm:$0xff]
      %v352 = vld [vmem:[%s250 + $0x2f0] sm:$0xff]
      %v353 = vld [vmem:[%s250 + $0x2f8] sm:$0xff]
      %v354 = vld [vmem:[%s250 + $0x300] sm:$0xff]
      %v355 = vld [vmem:[%s250 + $0x308] sm:$0xff]
      %v356 = vld [vmem:[%s250 + $0x310] sm:$0xff]
      %v357 = vld [vmem:[%s250 + $0x318] sm:$0xff]
      %v358 = vld [vmem:[%s250 + $0x320] sm:$0xff]
      %v359 = vld [vmem:[%s250 + $0x328] sm:$0xff]
      %v360 = vld [vmem:[%s250 + $0x330] sm:$0xff]
      %v361 = vld [vmem:[%s250 + $0x338] sm:$0xff]
      %v362 = vld [vmem:[%s250 + $0x340] sm:$0xff]
      %v363 = vld [vmem:[%s250 + $0x348] sm:$0xff]
      %v364 = vld [vmem:[%s250 + $0x350] sm:$0xff]
      %v365 = vld [vmem:[%s250 + $0x358] sm:$0xff]
      %v366 = vld [vmem:[%s250 + $0x360] sm:$0xff]
      %v367 = vld [vmem:[%s250 + $0x368] sm:$0xff]
      %v368 = vld [vmem:[%s250 + $0x370] sm:$0xff]
      %v369 = vld [vmem:[%s250 + $0x378] sm:$0xff]
      %v370 = vld [vmem:[%s250 + $0x380] sm:$0xff]
      %v371 = vld [vmem:[%s250 + $0x388] sm:$0xff]
      %v372 = vld [vmem:[%s250 + $0x390] sm:$0xff]
      %v373 = vld [vmem:[%s250 + $0x398] sm:$0xff]
      %v374 = vld [vmem:[%s250 + $0x3a0] sm:$0xff]
      %v375 = vld [vmem:[%s250 + $0x3a8] sm:$0xff]
      %v376 = vld [vmem:[%s250 + $0x3b0] sm:$0xff]
      %v377 = vld [vmem:[%s250 + $0x3b8] sm:$0xff]
      %v378 = vld [vmem:[%s250 + $0x3c0] sm:$0xff]
      %v379 = vld [vmem:[%s250 + $0x3c8] sm:$0xff]
      %v380 = vld [vmem:[%s250 + $0x3d0] sm:$0xff]
      %v381 = vld [vmem:[%s250 + $0x3d8] sm:$0xff]
      %v382 = vld [vmem:[%s250 + $0x3e0] sm:$0xff]
      %v383 = vld [vmem:[%s250 + $0x3e8] sm:$0xff]
      %v384 = vld [vmem:[%s250 + $0x3f0] sm:$0xff]
      %v385 = vld [vmem:[%s250 + $0x3f8] sm:$0xff]
      %v386 = vld [vmem:[%s250 + $0x400] sm:$0xff]
      %v387 = vld [vmem:[%s250 + $0x408] sm:$0xff]
      %v388 = vld [vmem:[%s250 + $0x410] sm:$0xff]
      %v389 = vld [vmem:[%s250 + $0x418] sm:$0xff]
      %v390 = vld [vmem:[%s250 + $0x420] sm:$0xff]
      %v391 = vld [vmem:[%s250 + $0x428] sm:$0xff]
      %v392 = vld [vmem:[%s250 + $0x430] sm:$0xff]
      %v393 = vld [vmem:[%s250 + $0x438] sm:$0xff]
      %v394 = vld [vmem:[%s250 + $0x440] sm:$0xff]
      %v395 = vld [vmem:[%s250 + $0x448] sm:$0xff]
      %v396 = vld [vmem:[%s250 + $0x450] sm:$0xff]
      %v397 = vld [vmem:[%s250 + $0x458] sm:$0xff]
      %v398 = vld [vmem:[%s250 + $0x460] sm:$0xff]
      %v399 = vld [vmem:[%s250 + $0x468] sm:$0xff]
      %v400 = vld [vmem:[%s250 + $0x470] sm:$0xff]
      %v401 = vld [vmem:[%s250 + $0x478] sm:$0xff]
      %v402 = vld [vmem:[%s250 + $0x480] sm:$0xff]
      %v403 = vld [vmem:[%s250 + $0x488] sm:$0xff]
      %v404 = vld [vmem:[%s250 + $0x490] sm:$0xff]
      %v405 = vld [vmem:[%s250 + $0x498] sm:$0xff]
      %v406 = vld [vmem:[%s250 + $0x4a0] sm:$0xff]
      %v407 = vld [vmem:[%s250 + $0x4a8] sm:$0xff]
      %v408 = vld [vmem:[%s250 + $0x4b0] sm:$0xff]
      %v409 = vld [vmem:[%s250 + $0x4b8] sm:$0xff]
      %v410 = vld [vmem:[%s250 + $0x4c0] sm:$0xff]
      %v411 = vld [vmem:[%s250 + $0x4c8] sm:$0xff]
      %v412 = vld [vmem:[%s250 + $0x4d0] sm:$0xff]
      %v413 = vld [vmem:[%s250 + $0x4d8] sm:$0xff]
      %v414 = vld [vmem:[%s250 + $0x4e0] sm:$0xff]
      %v415 = vld [vmem:[%s250 + $0x4e8] sm:$0xff]
      %v416 = vld [vmem:[%s250 + $0x4f0] sm:$0xff]
      %v417 = vld [vmem:[%s250 + $0x4f8] sm:$0xff]
      %v418 = vld [vmem:[%s250 + $0x500] sm:$0xff]
      %v419 = vld [vmem:[%s250 + $0x508] sm:$0xff]
      %v420 = vld [vmem:[%s250 + $0x510] sm:$0xff]
      %v421 = vld [vmem:[%s250 + $0x518] sm:$0xff]
      %v422 = vld [vmem:[%s250 + $0x520] sm:$0xff]
      %v423 = vld [vmem:[%s250 + $0x528] sm:$0xff]
      %v424 = vld [vmem:[%s250 + $0x530] sm:$0xff]
      %v425 = vld [vmem:[%s250 + $0x538] sm:$0xff]
      %v426 = vld [vmem:[%s250 + $0x540] sm:$0xff]
      %v427 = vld [vmem:[%s250 + $0x548] sm:$0xff]
      %v428 = vld [vmem:[%s250 + $0x550] sm:$0xff]
      %v429 = vld [vmem:[%s250 + $0x558] sm:$0xff]
      %v430 = vld [vmem:[%s250 + $0x560] sm:$0xff]
      %v431 = vld [vmem:[%s250 + $0x568] sm:$0xff]
      %v432 = vld [vmem:[%s250 + $0x570] sm:$0xff]
      %v433 = vld [vmem:[%s250 + $0x578] sm:$0xff]
      %v434 = vld [vmem:[%s250 + $0x580] sm:$0xff]
      %v435 = vld [vmem:[%s250 + $0x588] sm:$0xff]
      %v436 = vld [vmem:[%s250 + $0x590] sm:$0xff]
      %v437 = vld [vmem:[%s250 + $0x598] sm:$0xff]
      %v438 = vld [vmem:[%s250 + $0x5a0] sm:$0xff]
      %v439 = vld [vmem:[%s250 + $0x5a8] sm:$0xff]
      %v440 = vld [vmem:[%s250 + $0x5b0] sm:$0xff]
      %v441 = vld [vmem:[%s250 + $0x5b8] sm:$0xff]
      %v442 = vld [vmem:[%s250 + $0x5c0] sm:$0xff]
      %v443 = vld [vmem:[%s250 + $0x5c8] sm:$0xff]
      %v444 = vld [vmem:[%s250 + $0x5d0] sm:$0xff]
      %v445 = vld [vmem:[%s250 + $0x5d8] sm:$0xff]
      %v446 = vld [vmem:[%s250 + $0x5e0] sm:$0xff]
      %v447 = vld [vmem:[%s250 + $0x5e8] sm:$0xff]
      %v448 = vld [vmem:[%s250 + $0x5f0] sm:$0xff]
      %v449 = vld [vmem:[%s250 + $0x5f8] sm:$0xff]
      %v450 = vld [vmem:[%s250 + $0x600] sm:$0xff]
      %v451 = vld [vmem:[%s250 + $0x608] sm:$0xff]
      %v452 = vld [vmem:[%s250 + $0x610] sm:$0xff]
      %v453 = vld [vmem:[%s250 + $0x618] sm:$0xff]
      %v454 = vld [vmem:[%s250 + $0x620] sm:$0xff]
      %v455 = vld [vmem:[%s250 + $0x628] sm:$0xff]
      %v456 = vld [vmem:[%s250 + $0x630] sm:$0xff]
      %v457 = vld [vmem:[%s250 + $0x638] sm:$0xff]
      %v458 = vld [vmem:[%s250 + $0x640] sm:$0xff]
      %v459 = vld [vmem:[%s250 + $0x648] sm:$0xff]
      %v460 = vld [vmem:[%s250 + $0x650] sm:$0xff]
      %v461 = vld [vmem:[%s250 + $0x658] sm:$0xff]
      %v462 = vld [vmem:[%s250 + $0x660] sm:$0xff]
      %v463 = vld [vmem:[%s250 + $0x668] sm:$0xff]
      %v464 = vld [vmem:[%s250 + $0x670] sm:$0xff]
      %v465 = vld [vmem:[%s250 + $0x678] sm:$0xff]
      %v466 = vld [vmem:[%s250 + $0x680] sm:$0xff]
      %v467 = vld [vmem:[%s250 + $0x688] sm:$0xff]
      %v468 = vld [vmem:[%s250 + $0x690] sm:$0xff]
      %v469 = vld [vmem:[%s250 + $0x698] sm:$0xff]
      %v470 = vld [vmem:[%s250 + $0x6a0] sm:$0xff]
      %v471 = vld [vmem:[%s250 + $0x6a8] sm:$0xff]
      %v472 = vld [vmem:[%s250 + $0x6b0] sm:$0xff]
      %v473 = vld [vmem:[%s250 + $0x6b8] sm:$0xff]
      %v474 = vld [vmem:[%s250 + $0x6c0] sm:$0xff]
      %v475 = vld [vmem:[%s250 + $0x6c8] sm:$0xff]
      %v476 = vld [vmem:[%s250 + $0x6d0] sm:$0xff]
      %v477 = vld [vmem:[%s250 + $0x6d8] sm:$0xff]
      %v478 = vld [vmem:[%s250 + $0x6e0] sm:$0xff]
      %v479 = vld [vmem:[%s250 + $0x6e8] sm:$0xff]
      %v480 = vld [vmem:[%s250 + $0x6f0] sm:$0xff]
      %v481 = vld [vmem:[%s250 + $0x6f8] sm:$0xff]
      %v482 = vld [vmem:[%s250 + $0x700] sm:$0xff]
      %v483 = vld [vmem:[%s250 + $0x708] sm:$0xff]
      %v484 = vld [vmem:[%s250 + $0x710] sm:$0xff]
      %v485 = vld [vmem:[%s250 + $0x718] sm:$0xff]
      %v486 = vld [vmem:[%s250 + $0x720] sm:$0xff]
      %v487 = vld [vmem:[%s250 + $0x728] sm:$0xff]
      %v488 = vld [vmem:[%s250 + $0x730] sm:$0xff]
      %v489 = vld [vmem:[%s250 + $0x738] sm:$0xff]
      %v490 = vld [vmem:[%s250 + $0x740] sm:$0xff]
      %v491 = vld [vmem:[%s250 + $0x748] sm:$0xff]
      %v492 = vld [vmem:[%s250 + $0x750] sm:$0xff]
      %v493 = vld [vmem:[%s250 + $0x758] sm:$0xff]
      %v494 = vld [vmem:[%s250 + $0x760] sm:$0xff]
      %v495 = vld [vmem:[%s250 + $0x768] sm:$0xff]
      %v496 = vld [vmem:[%s250 + $0x770] sm:$0xff]
      %v497 = vld [vmem:[%s250 + $0x778] sm:$0xff]
      %v498 = vld [vmem:[%s250 + $0x780] sm:$0xff]
      %v499 = vld [vmem:[%s250 + $0x788] sm:$0xff]
      %v500 = vld [vmem:[%s250 + $0x790] sm:$0xff]
      %v501 = vld [vmem:[%s250 + $0x798] sm:$0xff]
      %v502 = vld [vmem:[%s250 + $0x7a0] sm:$0xff]
      %v503 = vld [vmem:[%s250 + $0x7a8] sm:$0xff]
      %v504 = vld [vmem:[%s250 + $0x7b0] sm:$0xff]
      %v505 = vld [vmem:[%s250 + $0x7b8] sm:$0xff]
      %v506 = vld [vmem:[%s250 + $0x7c0] sm:$0xff]
      %v507 = vld [vmem:[%s250 + $0x7c8] sm:$0xff]
      %v508 = vld [vmem:[%s250 + $0x7d0] sm:$0xff]
      %v509 = vld [vmem:[%s250 + $0x7d8] sm:$0xff]
      %v510 = vld [vmem:[%s250 + $0x7e0] sm:$0xff]
      %v511 = vld [vmem:[%s250 + $0x7e8] sm:$0xff]
      %v512 = vld [vmem:[%s250 + $0x7f0] sm:$0xff]
      %v513 = vld [vmem:[%s250 + $0x7f8] sm:$0xff]
      %v514 = vlaneseq
      %v515 = vand.u32 %v514, 127
      %vm516 = vcmp.lt.s32.totalorder %v515, 32
      %v517 = vsel %vm516, -inf, %v258
      %v518 = vsel %vm516, -inf, %v260
      %v519 = vsel %vm516, -inf, %v262
      %v520 = vsel %vm516, -inf, %v264
      %v521 = vsel %vm516, -inf, %v266
      %v522 = vsel %vm516, -inf, %v268
      %v523 = vsel %vm516, -inf, %v270
      %v524 = vsel %vm516, -inf, %v272
      %v525 = vsel %vm516, -inf, %v274
      %v526 = vsel %vm516, -inf, %v276
      %v527 = vsel %vm516, -inf, %v278
      %v528 = vsel %vm516, -inf, %v280
      %v529 = vsel %vm516, -inf, %v282
      %v530 = vsel %vm516, -inf, %v284
      %v531 = vsel %vm516, -inf, %v286
      %v532 = vsel %vm516, -inf, %v288
      %v533 = vsel %vm516, -inf, %v290
      %v534 = vsel %vm516, -inf, %v292
      %v535 = vsel %vm516, -inf, %v294
      %v536 = vsel %vm516, -inf, %v296
      %v537 = vsel %vm516, -inf, %v298
      %v538 = vsel %vm516, -inf, %v300
      %v539 = vsel %vm516, -inf, %v302
      %v540 = vsel %vm516, -inf, %v304
      %v541 = vsel %vm516, -inf, %v306
      %v542 = vsel %vm516, -inf, %v308
      %v543 = vsel %vm516, -inf, %v310
      %v544 = vsel %vm516, -inf, %v312
      %v545 = vsel %vm516, -inf, %v314
      %v546 = vsel %vm516, -inf, %v316
      %v547 = vsel %vm516, -inf, %v318
      %v548 = vsel %vm516, -inf, %v320
      %v549 = vsel %vm516, -inf, %v322
      %v550 = vsel %vm516, -inf, %v324
      %v551 = vsel %vm516, -inf, %v326
      %v552 = vsel %vm516, -inf, %v328
      %v553 = vsel %vm516, -inf, %v330
      %v554 = vsel %vm516, -inf, %v332
      %v555 = vsel %vm516, -inf, %v334
      %v556 = vsel %vm516, -inf, %v336
      %v557 = vsel %vm516, -inf, %v338
      %v558 = vsel %vm516, -inf, %v340
      %v559 = vsel %vm516, -inf, %v342
      %v560 = vsel %vm516, -inf, %v344
      %v561 = vsel %vm516, -inf, %v346
      %v562 = vsel %vm516, -inf, %v348
      %v563 = vsel %vm516, -inf, %v350
      %v564 = vsel %vm516, -inf, %v352
      %v565 = vsel %vm516, -inf, %v354
      %v566 = vsel %vm516, -inf, %v356
      %v567 = vsel %vm516, -inf, %v358
      %v568 = vsel %vm516, -inf, %v360
      %v569 = vsel %vm516, -inf, %v362
      %v570 = vsel %vm516, -inf, %v364
      %v571 = vsel %vm516, -inf, %v366
      %v572 = vsel %vm516, -inf, %v368
      %v573 = vsel %vm516, -inf, %v370
      %v574 = vsel %vm516, -inf, %v372
      %v575 = vsel %vm516, -inf, %v374
      %v576 = vsel %vm516, -inf, %v376
      %v577 = vsel %vm516, -inf, %v378
      %v578 = vsel %vm516, -inf, %v380
      %v579 = vsel %vm516, -inf, %v382
      %v580 = vsel %vm516, -inf, %v384
      %v581 = vsel %vm516, -inf, %v386
      %v582 = vsel %vm516, -inf, %v388
      %v583 = vsel %vm516, -inf, %v390
      %v584 = vsel %vm516, -inf, %v392
      %v585 = vsel %vm516, -inf, %v394
      %v586 = vsel %vm516, -inf, %v396
      %v587 = vsel %vm516, -inf, %v398
      %v588 = vsel %vm516, -inf, %v400
      %v589 = vsel %vm516, -inf, %v402
      %v590 = vsel %vm516, -inf, %v404
      %v591 = vsel %vm516, -inf, %v406
      %v592 = vsel %vm516, -inf, %v408
      %v593 = vsel %vm516, -inf, %v410
      %v594 = vsel %vm516, -inf, %v412
      %v595 = vsel %vm516, -inf, %v414
      %v596 = vsel %vm516, -inf, %v416
      %v597 = vsel %vm516, -inf, %v418
      %v598 = vsel %vm516, -inf, %v420
      %v599 = vsel %vm516, -inf, %v422
      %v600 = vsel %vm516, -inf, %v424
      %v601 = vsel %vm516, -inf, %v426
      %v602 = vsel %vm516, -inf, %v428
      %v603 = vsel %vm516, -inf, %v430
      %v604 = vsel %vm516, -inf, %v432
      %v605 = vsel %vm516, -inf, %v434
      %v606 = vsel %vm516, -inf, %v436
      %v607 = vsel %vm516, -inf, %v438
      %v608 = vsel %vm516, -inf, %v440
      %v609 = vsel %vm516, -inf, %v442
      %v610 = vsel %vm516, -inf, %v444
      %v611 = vsel %vm516, -inf, %v446
      %v612 = vsel %vm516, -inf, %v448
      %v613 = vsel %vm516, -inf, %v450
      %v614 = vsel %vm516, -inf, %v452
      %v615 = vsel %vm516, -inf, %v454
      %v616 = vsel %vm516, -inf, %v456
      %v617 = vsel %vm516, -inf, %v458
      %v618 = vsel %vm516, -inf, %v460
      %v619 = vsel %vm516, -inf, %v462
      %v620 = vsel %vm516, -inf, %v464
      %v621 = vsel %vm516, -inf, %v466
      %v622 = vsel %vm516, -inf, %v468
      %v623 = vsel %vm516, -inf, %v470
      %v624 = vsel %vm516, -inf, %v472
      %v625 = vsel %vm516, -inf, %v474
      %v626 = vsel %vm516, -inf, %v476
      %v627 = vsel %vm516, -inf, %v478
      %v628 = vsel %vm516, -inf, %v480
      %v629 = vsel %vm516, -inf, %v482
      %v630 = vsel %vm516, -inf, %v484
      %v631 = vsel %vm516, -inf, %v486
      %v632 = vsel %vm516, -inf, %v488
      %v633 = vsel %vm516, -inf, %v490
      %v634 = vsel %vm516, -inf, %v492
      %v635 = vsel %vm516, -inf, %v494
      %v636 = vsel %vm516, -inf, %v496
      %v637 = vsel %vm516, -inf, %v498
      %v638 = vsel %vm516, -inf, %v500
      %v639 = vsel %vm516, -inf, %v502
      %v640 = vsel %vm516, -inf, %v504
      %v641 = vsel %vm516, -inf, %v506
      %v642 = vsel %vm516, -inf, %v508
      %v643 = vsel %vm516, -inf, %v510
      %v644 = vsel %vm516, -inf, %v512
      %v645 = vmax.f32 %v517, %v259
      %v646 = vmax.f32 %v518, %v261
      %v647 = vmax.f32 %v519, %v263
      %v648 = vmax.f32 %v520, %v265
      %v649 = vmax.f32 %v521, %v267
      %v650 = vmax.f32 %v522, %v269
      %v651 = vmax.f32 %v523, %v271
      %v652 = vmax.f32 %v524, %v273
      %v653 = vmax.f32 %v525, %v275
      %v654 = vmax.f32 %v526, %v277
      %v655 = vmax.f32 %v527, %v279
      %v656 = vmax.f32 %v528, %v281
      %v657 = vmax.f32 %v529, %v283
      %v658 = vmax.f32 %v530, %v285
      %v659 = vmax.f32 %v531, %v287
      %v660 = vmax.f32 %v532, %v289
      %v661 = vmax.f32 %v533, %v291
      %v662 = vmax.f32 %v534, %v293
      %v663 = vmax.f32 %v535, %v295
      %v664 = vmax.f32 %v536, %v297
      %v665 = vmax.f32 %v537, %v299
      %v666 = vmax.f32 %v538, %v301
      %v667 = vmax.f32 %v539, %v303
      %v668 = vmax.f32 %v540, %v305
      %v669 = vmax.f32 %v541, %v307
      %v670 = vmax.f32 %v542, %v309
      %v671 = vmax.f32 %v543, %v311
      %v672 = vmax.f32 %v544, %v313
      %v673 = vmax.f32 %v545, %v315
      %v674 = vmax.f32 %v546, %v317
      %v675 = vmax.f32 %v547, %v319
      %v676 = vmax.f32 %v548, %v321
      %v677 = vmax.f32 %v549, %v323
      %v678 = vmax.f32 %v550, %v325
      %v679 = vmax.f32 %v551, %v327
      %v680 = vmax.f32 %v552, %v329
      %v681 = vmax.f32 %v553, %v331
      %v682 = vmax.f32 %v554, %v333
      %v683 = vmax.f32 %v555, %v335
      %v684 = vmax.f32 %v556, %v337
      %v685 = vmax.f32 %v557, %v339
      %v686 = vmax.f32 %v558, %v341
      %v687 = vmax.f32 %v559, %v343
      %v688 = vmax.f32 %v560, %v345
      %v689 = vmax.f32 %v561, %v347
      %v690 = vmax.f32 %v562, %v349
      %v691 = vmax.f32 %v563, %v351
      %v692 = vmax.f32 %v564, %v353
      %v693 = vmax.f32 %v565, %v355
      %v694 = vmax.f32 %v566, %v357
      %v695 = vmax.f32 %v567, %v359
      %v696 = vmax.f32 %v568, %v361
      %v697 = vmax.f32 %v569, %v363
      %v698 = vmax.f32 %v570, %v365
      %v699 = vmax.f32 %v571, %v367
      %v700 = vmax.f32 %v572, %v369
      %v701 = vmax.f32 %v573, %v371
      %v702 = vmax.f32 %v574, %v373
      %v703 = vmax.f32 %v575, %v375
      %v704 = vmax.f32 %v576, %v377
      %v705 = vmax.f32 %v577, %v379
      %v706 = vmax.f32 %v578, %v381
      %v707 = vmax.f32 %v579, %v383
      %v708 = vmax.f32 %v580, %v385
      %v709 = vmax.f32 %v581, %v387
      %v710 = vmax.f32 %v582, %v389
      %v711 = vmax.f32 %v583, %v391
      %v712 = vmax.f32 %v584, %v393
      %v713 = vmax.f32 %v585, %v395
      %v714 = vmax.f32 %v586, %v397
      %v715 = vmax.f32 %v587, %v399
      %v716 = vmax.f32 %v588, %v401
      %v717 = vmax.f32 %v589, %v403
      %v718 = vmax.f32 %v590, %v405
      %v719 = vmax.f32 %v591, %v407
      %v720 = vmax.f32 %v592, %v409
      %v721 = vmax.f32 %v593, %v411
      %v722 = vmax.f32 %v594, %v413
      %v723 = vmax.f32 %v595, %v415
      %v724 = vmax.f32 %v596, %v417
      %v725 = vmax.f32 %v597, %v419
      %v726 = vmax.f32 %v598, %v421
      %v727 = vmax.f32 %v599, %v423
      %v728 = vmax.f32 %v600, %v425
      %v729 = vmax.f32 %v601, %v427
      %v730 = vmax.f32 %v602, %v429
      %v731 = vmax.f32 %v603, %v431
      %v732 = vmax.f32 %v604, %v433
      %v733 = vmax.f32 %v605, %v435
      %v734 = vmax.f32 %v606, %v437
      %v735 = vmax.f32 %v607, %v439
      %v736 = vmax.f32 %v608, %v441
      %v737 = vmax.f32 %v609, %v443
      %v738 = vmax.f32 %v610, %v445
      %v739 = vmax.f32 %v611, %v447
      %v740 = vmax.f32 %v612, %v449
      %v741 = vmax.f32 %v613, %v451
      %v742 = vmax.f32 %v614, %v453
      %v743 = vmax.f32 %v615, %v455
      %v744 = vmax.f32 %v616, %v457
      %v745 = vmax.f32 %v617, %v459
      %v746 = vmax.f32 %v618, %v461
      %v747 = vmax.f32 %v619, %v463
      %v748 = vmax.f32 %v620, %v465
      %v749 = vmax.f32 %v621, %v467
      %v750 = vmax.f32 %v622, %v469
      %v751 = vmax.f32 %v623, %v471
      %v752 = vmax.f32 %v624, %v473
      %v753 = vmax.f32 %v625, %v475
      %v754 = vmax.f32 %v626, %v477
      %v755 = vmax.f32 %v627, %v479
      %v756 = vmax.f32 %v628, %v481
      %v757 = vmax.f32 %v629, %v483
      %v758 = vmax.f32 %v630, %v485
      %v759 = vmax.f32 %v631, %v487
      %v760 = vmax.f32 %v632, %v489
      %v761 = vmax.f32 %v633, %v491
      %v762 = vmax.f32 %v634, %v493
      %v763 = vmax.f32 %v635, %v495
      %v764 = vmax.f32 %v636, %v497
      %v765 = vmax.f32 %v637, %v499
      %v766 = vmax.f32 %v638, %v501
      %v767 = vmax.f32 %v639, %v503
      %v768 = vmax.f32 %v640, %v505
      %v769 = vmax.f32 %v641, %v507
      %v770 = vmax.f32 %v642, %v509
      %v771 = vmax.f32 %v643, %v511
      %v772 = vmax.f32 %v644, %v513
      %773 = vrot.lane.b32.xlu0 %v645, 64
      %v774 = vpop.permute.xlu0 %773
      %775 = vrot.lane.b32.xlu0 %v646, 64
      %v776 = vpop.permute.xlu0 %775
      %777 = vrot.lane.b32.xlu0 %v647, 64
      %v778 = vpop.permute.xlu0 %777
      %779 = vrot.lane.b32.xlu0 %v648, 64
      %v780 = vpop.permute.xlu0 %779
      %781 = vrot.lane.b32.xlu0 %v649, 64
      %v782 = vpop.permute.xlu0 %781
      %783 = vrot.lane.b32.xlu0 %v650, 64
      %v784 = vpop.permute.xlu0 %783
      %785 = vrot.lane.b32.xlu0 %v651, 64
      %v786 = vpop.permute.xlu0 %785
      %787 = vrot.lane.b32.xlu0 %v652, 64
      %v788 = vpop.permute.xlu0 %787
      %789 = vrot.lane.b32.xlu0 %v653, 64
      %v790 = vpop.permute.xlu0 %789
      %791 = vrot.lane.b32.xlu0 %v654, 64
      %v792 = vpop.permute.xlu0 %791
      %793 = vrot.lane.b32.xlu0 %v655, 64
      %v794 = vpop.permute.xlu0 %793
      %795 = vrot.lane.b32.xlu0 %v656, 64
      %v796 = vpop.permute.xlu0 %795
      %797 = vrot.lane.b32.xlu0 %v657, 64
      %v798 = vpop.permute.xlu0 %797
      %799 = vrot.lane.b32.xlu0 %v658, 64
      %v800 = vpop.permute.xlu0 %799
      %801 = vrot.lane.b32.xlu0 %v659, 64
      %v802 = vpop.permute.xlu0 %801
      %803 = vrot.lane.b32.xlu0 %v660, 64
      %v804 = vpop.permute.xlu0 %803
      %805 = vrot.lane.b32.xlu0 %v661, 64
      %v806 = vpop.permute.xlu0 %805
      %807 = vrot.lane.b32.xlu0 %v662, 64
      %v808 = vpop.permute.xlu0 %807
      %809 = vrot.lane.b32.xlu0 %v663, 64
      %v810 = vpop.permute.xlu0 %809
      %811 = vrot.lane.b32.xlu0 %v664, 64
      %v812 = vpop.permute.xlu0 %811
      %813 = vrot.lane.b32.xlu0 %v665, 64
      %v814 = vpop.permute.xlu0 %813
      %815 = vrot.lane.b32.xlu0 %v666, 64
      %v816 = vpop.permute.xlu0 %815
      %817 = vrot.lane.b32.xlu0 %v667, 64
      %v818 = vpop.permute.xlu0 %817
      %819 = vrot.lane.b32.xlu0 %v668, 64
      %v820 = vpop.permute.xlu0 %819
      %821 = vrot.lane.b32.xlu0 %v669, 64
      %v822 = vpop.permute.xlu0 %821
      %823 = vrot.lane.b32.xlu0 %v670, 64
      %v824 = vpop.permute.xlu0 %823
      %825 = vrot.lane.b32.xlu0 %v671, 64
      %v826 = vpop.permute.xlu0 %825
      %827 = vrot.lane.b32.xlu0 %v672, 64
      %v828 = vpop.permute.xlu0 %827
      %829 = vrot.lane.b32.xlu0 %v673, 64
      %v830 = vpop.permute.xlu0 %829
      %831 = vrot.lane.b32.xlu0 %v674, 64
      %v832 = vpop.permute.xlu0 %831
      %833 = vrot.lane.b32.xlu0 %v675, 64
      %v834 = vpop.permute.xlu0 %833
      %835 = vrot.lane.b32.xlu0 %v676, 64
      %v836 = vpop.permute.xlu0 %835
      %837 = vrot.lane.b32.xlu0 %v677, 64
      %v838 = vpop.permute.xlu0 %837
      %839 = vrot.lane.b32.xlu0 %v678, 64
      %v840 = vpop.permute.xlu0 %839
      %841 = vrot.lane.b32.xlu0 %v679, 64
      %v842 = vpop.permute.xlu0 %841
      %843 = vrot.lane.b32.xlu0 %v680, 64
      %v844 = vpop.permute.xlu0 %843
      %845 = vrot.lane.b32.xlu0 %v681, 64
      %v846 = vpop.permute.xlu0 %845
      %847 = vrot.lane.b32.xlu0 %v682, 64
      %v848 = vpop.permute.xlu0 %847
      %849 = vrot.lane.b32.xlu0 %v683, 64
      %v850 = vpop.permute.xlu0 %849
      %851 = vrot.lane.b32.xlu0 %v684, 64
      %v852 = vpop.permute.xlu0 %851
      %853 = vrot.lane.b32.xlu0 %v685, 64
      %v854 = vpop.permute.xlu0 %853
      %855 = vrot.lane.b32.xlu0 %v686, 64
      %v856 = vpop.permute.xlu0 %855
      %857 = vrot.lane.b32.xlu0 %v687, 64
      %v858 = vpop.permute.xlu0 %857
      %859 = vrot.lane.b32.xlu0 %v688, 64
      %v860 = vpop.permute.xlu0 %859
      %861 = vrot.lane.b32.xlu0 %v689, 64
      %v862 = vpop.permute.xlu0 %861
      %863 = vrot.lane.b32.xlu0 %v690, 64
      %v864 = vpop.permute.xlu0 %863
      %865 = vrot.lane.b32.xlu0 %v691, 64
      %v866 = vpop.permute.xlu0 %865
      %867 = vrot.lane.b32.xlu0 %v692, 64
      %v868 = vpop.permute.xlu0 %867
      %869 = vrot.lane.b32.xlu0 %v693, 64
      %v870 = vpop.permute.xlu0 %869
      %871 = vrot.lane.b32.xlu0 %v694, 64
      %v872 = vpop.permute.xlu0 %871
      %873 = vrot.lane.b32.xlu0 %v695, 64
      %v874 = vpop.permute.xlu0 %873
      %875 = vrot.lane.b32.xlu0 %v696, 64
      %v876 = vpop.permute.xlu0 %875
      %877 = vrot.lane.b32.xlu0 %v697, 64
      %v878 = vpop.permute.xlu0 %877
      %879 = vrot.lane.b32.xlu0 %v698, 64
      %v880 = vpop.permute.xlu0 %879
      %881 = vrot.lane.b32.xlu0 %v699, 64
      %v882 = vpop.permute.xlu0 %881
      %883 = vrot.lane.b32.xlu0 %v700, 64
      %v884 = vpop.permute.xlu0 %883
      %885 = vrot.lane.b32.xlu0 %v701, 64
      %v886 = vpop.permute.xlu0 %885
      %887 = vrot.lane.b32.xlu0 %v702, 64
      %v888 = vpop.permute.xlu0 %887
      %889 = vrot.lane.b32.xlu0 %v703, 64
      %v890 = vpop.permute.xlu0 %889
      %891 = vrot.lane.b32.xlu0 %v704, 64
      %v892 = vpop.permute.xlu0 %891
      %893 = vrot.lane.b32.xlu0 %v705, 64
      %v894 = vpop.permute.xlu0 %893
      %895 = vrot.lane.b32.xlu0 %v706, 64
      %v896 = vpop.permute.xlu0 %895
      %897 = vrot.lane.b32.xlu0 %v707, 64
      %v898 = vpop.permute.xlu0 %897
      %899 = vrot.lane.b32.xlu0 %v708, 64
      %v900 = vpop.permute.xlu0 %899
      %901 = vrot.lane.b32.xlu0 %v709, 64
      %v902 = vpop.permute.xlu0 %901
      %903 = vrot.lane.b32.xlu0 %v710, 64
      %v904 = vpop.permute.xlu0 %903
      %905 = vrot.lane.b32.xlu0 %v711, 64
      %v906 = vpop.permute.xlu0 %905
      %907 = vrot.lane.b32.xlu0 %v712, 64
      %v908 = vpop.permute.xlu0 %907
      %909 = vrot.lane.b32.xlu0 %v713, 64
      %v910 = vpop.permute.xlu0 %909
      %911 = vrot.lane.b32.xlu0 %v714, 64
      %v912 = vpop.permute.xlu0 %911
      %913 = vrot.lane.b32.xlu0 %v715, 64
      %v914 = vpop.permute.xlu0 %913
      %915 = vrot.lane.b32.xlu0 %v716, 64
      %v916 = vpop.permute.xlu0 %915
      %917 = vrot.lane.b32.xlu0 %v717, 64
      %v918 = vpop.permute.xlu0 %917
      %919 = vrot.lane.b32.xlu0 %v718, 64
      %v920 = vpop.permute.xlu0 %919
      %921 = vrot.lane.b32.xlu0 %v719, 64
      %v922 = vpop.permute.xlu0 %921
      %923 = vrot.lane.b32.xlu0 %v720, 64
      %v924 = vpop.permute.xlu0 %923
      %925 = vrot.lane.b32.xlu0 %v721, 64
      %v926 = vpop.permute.xlu0 %925
      %927 = vrot.lane.b32.xlu0 %v722, 64
      %v928 = vpop.permute.xlu0 %927
      %929 = vrot.lane.b32.xlu0 %v723, 64
      %v930 = vpop.permute.xlu0 %929
      %931 = vrot.lane.b32.xlu0 %v724, 64
      %v932 = vpop.permute.xlu0 %931
      %933 = vrot.lane.b32.xlu0 %v725, 64
      %v934 = vpop.permute.xlu0 %933
      %935 = vrot.lane.b32.xlu0 %v726, 64
      %v936 = vpop.permute.xlu0 %935
      %937 = vrot.lane.b32.xlu0 %v727, 64
      %v938 = vpop.permute.xlu0 %937
      %939 = vrot.lane.b32.xlu0 %v728, 64
      %v940 = vpop.permute.xlu0 %939
      %941 = vrot.lane.b32.xlu0 %v729, 64
      %v942 = vpop.permute.xlu0 %941
      %943 = vrot.lane.b32.xlu0 %v730, 64
      %v944 = vpop.permute.xlu0 %943
      %945 = vrot.lane.b32.xlu0 %v731, 64
      %v946 = vpop.permute.xlu0 %945
      %947 = vrot.lane.b32.xlu0 %v732, 64
      %v948 = vpop.permute.xlu0 %947
      %949 = vrot.lane.b32.xlu0 %v733, 64
      %v950 = vpop.permute.xlu0 %949
      %951 = vrot.lane.b32.xlu0 %v734, 64
      %v952 = vpop.permute.xlu0 %951
      %953 = vrot.lane.b32.xlu0 %v735, 64
      %v954 = vpop.permute.xlu0 %953
      %955 = vrot.lane.b32.xlu0 %v736, 64
      %v956 = vpop.permute.xlu0 %955
      %957 = vrot.lane.b32.xlu0 %v737, 64
      %v958 = vpop.permute.xlu0 %957
      %959 = vrot.lane.b32.xlu0 %v738, 64
      %v960 = vpop.permute.xlu0 %959
      %961 = vrot.lane.b32.xlu0 %v739, 64
      %v962 = vpop.permute.xlu0 %961
      %963 = vrot.lane.b32.xlu0 %v740, 64
      %v964 = vpop.permute.xlu0 %963
      %965 = vrot.lane.b32.xlu0 %v741, 64
      %v966 = vpop.permute.xlu0 %965
      %967 = vrot.lane.b32.xlu0 %v742, 64
      %v968 = vpop.permute.xlu0 %967
      %969 = vrot.lane.b32.xlu0 %v743, 64
      %v970 = vpop.permute.xlu0 %969
      %971 = vrot.lane.b32.xlu0 %v744, 64
      %v972 = vpop.permute.xlu0 %971
      %973 = vrot.lane.b32.xlu0 %v745, 64
      %v974 = vpop.permute.xlu0 %973
      %975 = vrot.lane.b32.xlu0 %v746, 64
      %v976 = vpop.permute.xlu0 %975
      %977 = vrot.lane.b32.xlu0 %v747, 64
      %v978 = vpop.permute.xlu0 %977
      %979 = vrot.lane.b32.xlu0 %v748, 64
      %v980 = vpop.permute.xlu0 %979
      %981 = vrot.lane.b32.xlu0 %v749, 64
      %v982 = vpop.permute.xlu0 %981
      %983 = vrot.lane.b32.xlu0 %v750, 64
      %v984 = vpop.permute.xlu0 %983
      %985 = vrot.lane.b32.xlu0 %v751, 64
      %v986 = vpop.permute.xlu0 %985
      %987 = vrot.lane.b32.xlu0 %v752, 64
      %v988 = vpop.permute.xlu0 %987
      %989 = vrot.lane.b32.xlu0 %v753, 64
      %v990 = vpop.permute.xlu0 %989
      %991 = vrot.lane.b32.xlu0 %v754, 64
      %v992 = vpop.permute.xlu0 %991
      %993 = vrot.lane.b32.xlu0 %v755, 64
      %v994 = vpop.permute.xlu0 %993
      %995 = vrot.lane.b32.xlu0 %v756, 64
      %v996 = vpop.permute.xlu0 %995
      %997 = vrot.lane.b32.xlu0 %v757, 64
      %v998 = vpop.permute.xlu0 %997
      %999 = vrot.lane.b32.xlu0 %v758, 64
      %v1000 = vpop.permute.xlu0 %999
      %1001 = vrot.lane.b32.xlu0 %v759, 64
      %v1002 = vpop.permute.xlu0 %1001
      %1003 = vrot.lane.b32.xlu0 %v760, 64
      %v1004 = vpop.permute.xlu0 %1003
      %1005 = vrot.lane.b32.xlu0 %v761, 64
      %v1006 = vpop.permute.xlu0 %1005
      %1007 = vrot.lane.b32.xlu0 %v762, 64
      %v1008 = vpop.permute.xlu0 %1007
      %1009 = vrot.lane.b32.xlu0 %v763, 64
      %v1010 = vpop.permute.xlu0 %1009
      %1011 = vrot.lane.b32.xlu0 %v764, 64
      %v1012 = vpop.permute.xlu0 %1011
      %1013 = vrot.lane.b32.xlu0 %v765, 64
      %v1014 = vpop.permute.xlu0 %1013
      %1015 = vrot.lane.b32.xlu0 %v766, 64
      %v1016 = vpop.permute.xlu0 %1015
      %1017 = vrot.lane.b32.xlu0 %v767, 64
      %v1018 = vpop.permute.xlu0 %1017
      %1019 = vrot.lane.b32.xlu0 %v768, 64
      %v1020 = vpop.permute.xlu0 %1019
      %1021 = vrot.lane.b32.xlu0 %v769, 64
      %v1022 = vpop.permute.xlu0 %1021
      %1023 = vrot.lane.b32.xlu0 %v770, 64
      %v1024 = vpop.permute.xlu0 %1023
      %1025 = vrot.lane.b32.xlu0 %v771, 64
      %v1026 = vpop.permute.xlu0 %1025
      %1027 = vrot.lane.b32.xlu0 %v772, 64
      %v1028 = vpop.permute.xlu0 %1027
      %v1029 = vmax.f32 %v645, %v774
      %v1030 = vmax.f32 %v646, %v776
      %v1031 = vmax.f32 %v647, %v778
      %v1032 = vmax.f32 %v648, %v780
      %v1033 = vmax.f32 %v649, %v782
      %v1034 = vmax.f32 %v650, %v784
      %v1035 = vmax.f32 %v651, %v786
      %v1036 = vmax.f32 %v652, %v788
      %v1037 = vmax.f32 %v653, %v790
      %v1038 = vmax.f32 %v654, %v792
      %v1039 = vmax.f32 %v655, %v794
      %v1040 = vmax.f32 %v656, %v796
      %v1041 = vmax.f32 %v657, %v798
      %v1042 = vmax.f32 %v658, %v800
      %v1043 = vmax.f32 %v659, %v802
      %v1044 = vmax.f32 %v660, %v804
      %v1045 = vmax.f32 %v661, %v806
      %v1046 = vmax.f32 %v662, %v808
      %v1047 = vmax.f32 %v663, %v810
      %v1048 = vmax.f32 %v664, %v812
      %v1049 = vmax.f32 %v665, %v814
      %v1050 = vmax.f32 %v666, %v816
      %v1051 = vmax.f32 %v667, %v818
      %v1052 = vmax.f32 %v668, %v820
      %v1053 = vmax.f32 %v669, %v822
      %v1054 = vmax.f32 %v670, %v824
      %v1055 = vmax.f32 %v671, %v826
      %v1056 = vmax.f32 %v672, %v828
      %v1057 = vmax.f32 %v673, %v830
      %v1058 = vmax.f32 %v674, %v832
      %v1059 = vmax.f32 %v675, %v834
      %v1060 = vmax.f32 %v676, %v836
      %v1061 = vmax.f32 %v677, %v838
      %v1062 = vmax.f32 %v678, %v840
      %v1063 = vmax.f32 %v679, %v842
      %v1064 = vmax.f32 %v680, %v844
      %v1065 = vmax.f32 %v681, %v846
      %v1066 = vmax.f32 %v682, %v848
      %v1067 = vmax.f32 %v683, %v850
      %v1068 = vmax.f32 %v684, %v852
      %v1069 = vmax.f32 %v685, %v854
      %v1070 = vmax.f32 %v686, %v856
      %v1071 = vmax.f32 %v687, %v858
      %v1072 = vmax.f32 %v688, %v860
      %v1073 = vmax.f32 %v689, %v862
      %v1074 = vmax.f32 %v690, %v864
      %v1075 = vmax.f32 %v691, %v866
      %v1076 = vmax.f32 %v692, %v868
      %v1077 = vmax.f32 %v693, %v870
      %v1078 = vmax.f32 %v694, %v872
      %v1079 = vmax.f32 %v695, %v874
      %v1080 = vmax.f32 %v696, %v876
      %v1081 = vmax.f32 %v697, %v878
      %v1082 = vmax.f32 %v698, %v880
      %v1083 = vmax.f32 %v699, %v882
      %v1084 = vmax.f32 %v700, %v884
      %v1085 = vmax.f32 %v701, %v886
      %v1086 = vmax.f32 %v702, %v888
      %v1087 = vmax.f32 %v703, %v890
      %v1088 = vmax.f32 %v704, %v892
      %v1089 = vmax.f32 %v705, %v894
      %v1090 = vmax.f32 %v706, %v896
      %v1091 = vmax.f32 %v707, %v898
      %v1092 = vmax.f32 %v708, %v900
      %v1093 = vmax.f32 %v709, %v902
      %v1094 = vmax.f32 %v710, %v904
      %v1095 = vmax.f32 %v711, %v906
      %v1096 = vmax.f32 %v712, %v908
      %v1097 = vmax.f32 %v713, %v910
      %v1098 = vmax.f32 %v714, %v912
      %v1099 = vmax.f32 %v715, %v914
      %v1100 = vmax.f32 %v716, %v916
      %v1101 = vmax.f32 %v717, %v918
      %v1102 = vmax.f32 %v718, %v920
      %v1103 = vmax.f32 %v719, %v922
      %v1104 = vmax.f32 %v720, %v924
      %v1105 = vmax.f32 %v721, %v926
      %v1106 = vmax.f32 %v722, %v928
      %v1107 = vmax.f32 %v723, %v930
      %v1108 = vmax.f32 %v724, %v932
      %v1109 = vmax.f32 %v725, %v934
      %v1110 = vmax.f32 %v726, %v936
      %v1111 = vmax.f32 %v727, %v938
      %v1112 = vmax.f32 %v728, %v940
      %v1113 = vmax.f32 %v729, %v942
      %v1114 = vmax.f32 %v730, %v944
      %v1115 = vmax.f32 %v731, %v946
      %v1116 = vmax.f32 %v732, %v948
      %v1117 = vmax.f32 %v733, %v950
      %v1118 = vmax.f32 %v734, %v952
      %v1119 = vmax.f32 %v735, %v954
      %v1120 = vmax.f32 %v736, %v956
      %v1121 = vmax.f32 %v737, %v958
      %v1122 = vmax.f32 %v738, %v960
      %v1123 = vmax.f32 %v739, %v962
      %v1124 = vmax.f32 %v740, %v964
      %v1125 = vmax.f32 %v741, %v966
      %v1126 = vmax.f32 %v742, %v968
      %v1127 = vmax.f32 %v743, %v970
      %v1128 = vmax.f32 %v744, %v972
      %v1129 = vmax.f32 %v745, %v974
      %v1130 = vmax.f32 %v746, %v976
      %v1131 = vmax.f32 %v747, %v978
      %v1132 = vmax.f32 %v748, %v980
      %v1133 = vmax.f32 %v749, %v982
      %v1134 = vmax.f32 %v750, %v984
      %v1135 = vmax.f32 %v751, %v986
      %v1136 = vmax.f32 %v752, %v988
      %v1137 = vmax.f32 %v753, %v990
      %v1138 = vmax.f32 %v754, %v992
      %v1139 = vmax.f32 %v755, %v994
      %v1140 = vmax.f32 %v756, %v996
      %v1141 = vmax.f32 %v757, %v998
      %v1142 = vmax.f32 %v758, %v1000
      %v1143 = vmax.f32 %v759, %v1002
      %v1144 = vmax.f32 %v760, %v1004
      %v1145 = vmax.f32 %v761, %v1006
      %v1146 = vmax.f32 %v762, %v1008
      %v1147 = vmax.f32 %v763, %v1010
      %v1148 = vmax.f32 %v764, %v1012
      %v1149 = vmax.f32 %v765, %v1014
      %v1150 = vmax.f32 %v766, %v1016
      %v1151 = vmax.f32 %v767, %v1018
      %v1152 = vmax.f32 %v768, %v1020
      %v1153 = vmax.f32 %v769, %v1022
      %v1154 = vmax.f32 %v770, %v1024
      %v1155 = vmax.f32 %v771, %v1026
      %v1156 = vmax.f32 %v772, %v1028
      %1157 = vrot.lane.b32.xlu0 %v1029, 32
      %v1158 = vpop.permute.xlu0 %1157
      %1159 = vrot.lane.b32.xlu0 %v1030, 32
      %v1160 = vpop.permute.xlu0 %1159
      %1161 = vrot.lane.b32.xlu0 %v1031, 32
      %v1162 = vpop.permute.xlu0 %1161
      %1163 = vrot.lane.b32.xlu0 %v1032, 32
      %v1164 = vpop.permute.xlu0 %1163
      %1165 = vrot.lane.b32.xlu0 %v1033, 32
      %v1166 = vpop.permute.xlu0 %1165
      %1167 = vrot.lane.b32.xlu0 %v1034, 32
      %v1168 = vpop.permute.xlu0 %1167
      %1169 = vrot.lane.b32.xlu0 %v1035, 32
      %v1170 = vpop.permute.xlu0 %1169
      %1171 = vrot.lane.b32.xlu0 %v1036, 32
      %v1172 = vpop.permute.xlu0 %1171
      %1173 = vrot.lane.b32.xlu0 %v1037, 32
      %v1174 = vpop.permute.xlu0 %1173
      %1175 = vrot.lane.b32.xlu0 %v1038, 32
      %v1176 = vpop.permute.xlu0 %1175
      %1177 = vrot.lane.b32.xlu0 %v1039, 32
      %v1178 = vpop.permute.xlu0 %1177
      %1179 = vrot.lane.b32.xlu0 %v1040, 32
      %v1180 = vpop.permute.xlu0 %1179
      %1181 = vrot.lane.b32.xlu0 %v1041, 32
      %v1182 = vpop.permute.xlu0 %1181
      %1183 = vrot.lane.b32.xlu0 %v1042, 32
      %v1184 = vpop.permute.xlu0 %1183
      %1185 = vrot.lane.b32.xlu0 %v1043, 32
      %v1186 = vpop.permute.xlu0 %1185
      %1187 = vrot.lane.b32.xlu0 %v1044, 32
      %v1188 = vpop.permute.xlu0 %1187
      %1189 = vrot.lane.b32.xlu0 %v1045, 32
      %v1190 = vpop.permute.xlu0 %1189
      %1191 = vrot.lane.b32.xlu0 %v1046, 32
      %v1192 = vpop.permute.xlu0 %1191
      %1193 = vrot.lane.b32.xlu0 %v1047, 32
      %v1194 = vpop.permute.xlu0 %1193
      %1195 = vrot.lane.b32.xlu0 %v1048, 32
      %v1196 = vpop.permute.xlu0 %1195
      %1197 = vrot.lane.b32.xlu0 %v1049, 32
      %v1198 = vpop.permute.xlu0 %1197
      %1199 = vrot.lane.b32.xlu0 %v1050, 32
      %v1200 = vpop.permute.xlu0 %1199
      %1201 = vrot.lane.b32.xlu0 %v1051, 32
      %v1202 = vpop.permute.xlu0 %1201
      %1203 = vrot.lane.b32.xlu0 %v1052, 32
      %v1204 = vpop.permute.xlu0 %1203
      %1205 = vrot.lane.b32.xlu0 %v1053, 32
      %v1206 = vpop.permute.xlu0 %1205
      %1207 = vrot.lane.b32.xlu0 %v1054, 32
      %v1208 = vpop.permute.xlu0 %1207
      %1209 = vrot.lane.b32.xlu0 %v1055, 32
      %v1210 = vpop.permute.xlu0 %1209
      %1211 = vrot.lane.b32.xlu0 %v1056, 32
      %v1212 = vpop.permute.xlu0 %1211
      %1213 = vrot.lane.b32.xlu0 %v1057, 32
      %v1214 = vpop.permute.xlu0 %1213
      %1215 = vrot.lane.b32.xlu0 %v1058, 32
      %v1216 = vpop.permute.xlu0 %1215
      %1217 = vrot.lane.b32.xlu0 %v1059, 32
      %v1218 = vpop.permute.xlu0 %1217
      %1219 = vrot.lane.b32.xlu0 %v1060, 32
      %v1220 = vpop.permute.xlu0 %1219
      %1221 = vrot.lane.b32.xlu0 %v1061, 32
      %v1222 = vpop.permute.xlu0 %1221
      %1223 = vrot.lane.b32.xlu0 %v1062, 32
      %v1224 = vpop.permute.xlu0 %1223
      %1225 = vrot.lane.b32.xlu0 %v1063, 32
      %v1226 = vpop.permute.xlu0 %1225
      %1227 = vrot.lane.b32.xlu0 %v1064, 32
      %v1228 = vpop.permute.xlu0 %1227
      %1229 = vrot.lane.b32.xlu0 %v1065, 32
      %v1230 = vpop.permute.xlu0 %1229
      %1231 = vrot.lane.b32.xlu0 %v1066, 32
      %v1232 = vpop.permute.xlu0 %1231
      %1233 = vrot.lane.b32.xlu0 %v1067, 32
      %v1234 = vpop.permute.xlu0 %1233
      %1235 = vrot.lane.b32.xlu0 %v1068, 32
      %v1236 = vpop.permute.xlu0 %1235
      %1237 = vrot.lane.b32.xlu0 %v1069, 32
      %v1238 = vpop.permute.xlu0 %1237
      %1239 = vrot.lane.b32.xlu0 %v1070, 32
      %v1240 = vpop.permute.xlu0 %1239
      %1241 = vrot.lane.b32.xlu0 %v1071, 32
      %v1242 = vpop.permute.xlu0 %1241
      %1243 = vrot.lane.b32.xlu0 %v1072, 32
      %v1244 = vpop.permute.xlu0 %1243
      %1245 = vrot.lane.b32.xlu0 %v1073, 32
      %v1246 = vpop.permute.xlu0 %1245
      %1247 = vrot.lane.b32.xlu0 %v1074, 32
      %v1248 = vpop.permute.xlu0 %1247
      %1249 = vrot.lane.b32.xlu0 %v1075, 32
      %v1250 = vpop.permute.xlu0 %1249
      %1251 = vrot.lane.b32.xlu0 %v1076, 32
      %v1252 = vpop.permute.xlu0 %1251
      %1253 = vrot.lane.b32.xlu0 %v1077, 32
      %v1254 = vpop.permute.xlu0 %1253
      %1255 = vrot.lane.b32.xlu0 %v1078, 32
      %v1256 = vpop.permute.xlu0 %1255
      %1257 = vrot.lane.b32.xlu0 %v1079, 32
      %v1258 = vpop.permute.xlu0 %1257
      %1259 = vrot.lane.b32.xlu0 %v1080, 32
      %v1260 = vpop.permute.xlu0 %1259
      %1261 = vrot.lane.b32.xlu0 %v1081, 32
      %v1262 = vpop.permute.xlu0 %1261
      %1263 = vrot.lane.b32.xlu0 %v1082, 32
      %v1264 = vpop.permute.xlu0 %1263
      %1265 = vrot.lane.b32.xlu0 %v1083, 32
      %v1266 = vpop.permute.xlu0 %1265
      %1267 = vrot.lane.b32.xlu0 %v1084, 32
      %v1268 = vpop.permute.xlu0 %1267
      %1269 = vrot.lane.b32.xlu0 %v1085, 32
      %v1270 = vpop.permute.xlu0 %1269
      %1271 = vrot.lane.b32.xlu0 %v1086, 32
      %v1272 = vpop.permute.xlu0 %1271
      %1273 = vrot.lane.b32.xlu0 %v1087, 32
      %v1274 = vpop.permute.xlu0 %1273
      %1275 = vrot.lane.b32.xlu0 %v1088, 32
      %v1276 = vpop.permute.xlu0 %1275
      %1277 = vrot.lane.b32.xlu0 %v1089, 32
      %v1278 = vpop.permute.xlu0 %1277
      %1279 = vrot.lane.b32.xlu0 %v1090, 32
      %v1280 = vpop.permute.xlu0 %1279
      %1281 = vrot.lane.b32.xlu0 %v1091, 32
      %v1282 = vpop.permute.xlu0 %1281
      %1283 = vrot.lane.b32.xlu0 %v1092, 32
      %v1284 = vpop.permute.xlu0 %1283
      %1285 = vrot.lane.b32.xlu0 %v1093, 32
      %v1286 = vpop.permute.xlu0 %1285
      %1287 = vrot.lane.b32.xlu0 %v1094, 32
      %v1288 = vpop.permute.xlu0 %1287
      %1289 = vrot.lane.b32.xlu0 %v1095, 32
      %v1290 = vpop.permute.xlu0 %1289
      %1291 = vrot.lane.b32.xlu0 %v1096, 32
      %v1292 = vpop.permute.xlu0 %1291
      %1293 = vrot.lane.b32.xlu0 %v1097, 32
      %v1294 = vpop.permute.xlu0 %1293
      %1295 = vrot.lane.b32.xlu0 %v1098, 32
      %v1296 = vpop.permute.xlu0 %1295
      %1297 = vrot.lane.b32.xlu0 %v1099, 32
      %v1298 = vpop.permute.xlu0 %1297
      %1299 = vrot.lane.b32.xlu0 %v1100, 32
      %v1300 = vpop.permute.xlu0 %1299
      %1301 = vrot.lane.b32.xlu0 %v1101, 32
      %v1302 = vpop.permute.xlu0 %1301
      %1303 = vrot.lane.b32.xlu0 %v1102, 32
      %v1304 = vpop.permute.xlu0 %1303
      %1305 = vrot.lane.b32.xlu0 %v1103, 32
      %v1306 = vpop.permute.xlu0 %1305
      %1307 = vrot.lane.b32.xlu0 %v1104, 32
      %v1308 = vpop.permute.xlu0 %1307
      %1309 = vrot.lane.b32.xlu0 %v1105, 32
      %v1310 = vpop.permute.xlu0 %1309
      %1311 = vrot.lane.b32.xlu0 %v1106, 32
      %v1312 = vpop.permute.xlu0 %1311
      %1313 = vrot.lane.b32.xlu0 %v1107, 32
      %v1314 = vpop.permute.xlu0 %1313
      %1315 = vrot.lane.b32.xlu0 %v1108, 32
      %v1316 = vpop.permute.xlu0 %1315
      %1317 = vrot.lane.b32.xlu0 %v1109, 32
      %v1318 = vpop.permute.xlu0 %1317
      %1319 = vrot.lane.b32.xlu0 %v1110, 32
      %v1320 = vpop.permute.xlu0 %1319
      %1321 = vrot.lane.b32.xlu0 %v1111, 32
      %v1322 = vpop.permute.xlu0 %1321
      %1323 = vrot.lane.b32.xlu0 %v1112, 32
      %v1324 = vpop.permute.xlu0 %1323
      %1325 = vrot.lane.b32.xlu0 %v1113, 32
      %v1326 = vpop.permute.xlu0 %1325
      %1327 = vrot.lane.b32.xlu0 %v1114, 32
      %v1328 = vpop.permute.xlu0 %1327
      %1329 = vrot.lane.b32.xlu0 %v1115, 32
      %v1330 = vpop.permute.xlu0 %1329
      %1331 = vrot.lane.b32.xlu0 %v1116, 32
      %v1332 = vpop.permute.xlu0 %1331
      %1333 = vrot.lane.b32.xlu0 %v1117, 32
      %v1334 = vpop.permute.xlu0 %1333
      %1335 = vrot.lane.b32.xlu0 %v1118, 32
      %v1336 = vpop.permute.xlu0 %1335
      %1337 = vrot.lane.b32.xlu0 %v1119, 32
      %v1338 = vpop.permute.xlu0 %1337
      %1339 = vrot.lane.b32.xlu0 %v1120, 32
      %v1340 = vpop.permute.xlu0 %1339
      %1341 = vrot.lane.b32.xlu0 %v1121, 32
      %v1342 = vpop.permute.xlu0 %1341
      %1343 = vrot.lane.b32.xlu0 %v1122, 32
      %v1344 = vpop.permute.xlu0 %1343
      %1345 = vrot.lane.b32.xlu0 %v1123, 32
      %v1346 = vpop.permute.xlu0 %1345
      %1347 = vrot.lane.b32.xlu0 %v1124, 32
      %v1348 = vpop.permute.xlu0 %1347
      %1349 = vrot.lane.b32.xlu0 %v1125, 32
      %v1350 = vpop.permute.xlu0 %1349
      %1351 = vrot.lane.b32.xlu0 %v1126, 32
      %v1352 = vpop.permute.xlu0 %1351
      %1353 = vrot.lane.b32.xlu0 %v1127, 32
      %v1354 = vpop.permute.xlu0 %1353
      %1355 = vrot.lane.b32.xlu0 %v1128, 32
      %v1356 = vpop.permute.xlu0 %1355
      %1357 = vrot.lane.b32.xlu0 %v1129, 32
      %v1358 = vpop.permute.xlu0 %1357
      %1359 = vrot.lane.b32.xlu0 %v1130, 32
      %v1360 = vpop.permute.xlu0 %1359
      %1361 = vrot.lane.b32.xlu0 %v1131, 32
      %v1362 = vpop.permute.xlu0 %1361
      %1363 = vrot.lane.b32.xlu0 %v1132, 32
      %v1364 = vpop.permute.xlu0 %1363
      %1365 = vrot.lane.b32.xlu0 %v1133, 32
      %v1366 = vpop.permute.xlu0 %1365
      %1367 = vrot.lane.b32.xlu0 %v1134, 32
      %v1368 = vpop.permute.xlu0 %1367
      %1369 = vrot.lane.b32.xlu0 %v1135, 32
      %v1370 = vpop.permute.xlu0 %1369
      %1371 = vrot.lane.b32.xlu0 %v1136, 32
      %v1372 = vpop.permute.xlu0 %1371
      %1373 = vrot.lane.b32.xlu0 %v1137, 32
      %v1374 = vpop.permute.xlu0 %1373
      %1375 = vrot.lane.b32.xlu0 %v1138, 32
      %v1376 = vpop.permute.xlu0 %1375
      %1377 = vrot.lane.b32.xlu0 %v1139, 32
      %v1378 = vpop.permute.xlu0 %1377
      %1379 = vrot.lane.b32.xlu0 %v1140, 32
      %v1380 = vpop.permute.xlu0 %1379
      %1381 = vrot.lane.b32.xlu0 %v1141, 32
      %v1382 = vpop.permute.xlu0 %1381
      %1383 = vrot.lane.b32.xlu0 %v1142, 32
      %v1384 = vpop.permute.xlu0 %1383
      %1385 = vrot.lane.b32.xlu0 %v1143, 32
      %v1386 = vpop.permute.xlu0 %1385
      %1387 = vrot.lane.b32.xlu0 %v1144, 32
      %v1388 = vpop.permute.xlu0 %1387
      %1389 = vrot.lane.b32.xlu0 %v1145, 32
      %v1390 = vpop.permute.xlu0 %1389
      %1391 = vrot.lane.b32.xlu0 %v1146, 32
      %v1392 = vpop.permute.xlu0 %1391
      %1393 = vrot.lane.b32.xlu0 %v1147, 32
      %v1394 = vpop.permute.xlu0 %1393
      %1395 = vrot.lane.b32.xlu0 %v1148, 32
      %v1396 = vpop.permute.xlu0 %1395
      %1397 = vrot.lane.b32.xlu0 %v1149, 32
      %v1398 = vpop.permute.xlu0 %1397
      %1399 = vrot.lane.b32.xlu0 %v1150, 32
      %v1400 = vpop.permute.xlu0 %1399
      %1401 = vrot.lane.b32.xlu0 %v1151, 32
      %v1402 = vpop.permute.xlu0 %1401
      %1403 = vrot.lane.b32.xlu0 %v1152, 32
      %v1404 = vpop.permute.xlu0 %1403
      %1405 = vrot.lane.b32.xlu0 %v1153, 32
      %v1406 = vpop.permute.xlu0 %1405
      %1407 = vrot.lane.b32.xlu0 %v1154, 32
      %v1408 = vpop.permute.xlu0 %1407
      %1409 = vrot.lane.b32.xlu0 %v1155, 32
      %v1410 = vpop.permute.xlu0 %1409
      %1411 = vrot.lane.b32.xlu0 %v1156, 32
      %v1412 = vpop.permute.xlu0 %1411
      %v1413 = vmax.f32 %v1029, %v1158
      %v1414 = vmax.f32 %v1030, %v1160
      %v1415 = vmax.f32 %v1031, %v1162
      %v1416 = vmax.f32 %v1032, %v1164
      %v1417 = vmax.f32 %v1033, %v1166
      %v1418 = vmax.f32 %v1034, %v1168
      %v1419 = vmax.f32 %v1035, %v1170
      %v1420 = vmax.f32 %v1036, %v1172
      %v1421 = vmax.f32 %v1037, %v1174
      %v1422 = vmax.f32 %v1038, %v1176
      %v1423 = vmax.f32 %v1039, %v1178
      %v1424 = vmax.f32 %v1040, %v1180
      %v1425 = vmax.f32 %v1041, %v1182
      %v1426 = vmax.f32 %v1042, %v1184
      %v1427 = vmax.f32 %v1043, %v1186
      %v1428 = vmax.f32 %v1044, %v1188
      %v1429 = vmax.f32 %v1045, %v1190
      %v1430 = vmax.f32 %v1046, %v1192
      %v1431 = vmax.f32 %v1047, %v1194
      %v1432 = vmax.f32 %v1048, %v1196
      %v1433 = vmax.f32 %v1049, %v1198
      %v1434 = vmax.f32 %v1050, %v1200
      %v1435 = vmax.f32 %v1051, %v1202
      %v1436 = vmax.f32 %v1052, %v1204
      %v1437 = vmax.f32 %v1053, %v1206
      %v1438 = vmax.f32 %v1054, %v1208
      %v1439 = vmax.f32 %v1055, %v1210
      %v1440 = vmax.f32 %v1056, %v1212
      %v1441 = vmax.f32 %v1057, %v1214
      %v1442 = vmax.f32 %v1058, %v1216
      %v1443 = vmax.f32 %v1059, %v1218
      %v1444 = vmax.f32 %v1060, %v1220
      %v1445 = vmax.f32 %v1061, %v1222
      %v1446 = vmax.f32 %v1062, %v1224
      %v1447 = vmax.f32 %v1063, %v1226
      %v1448 = vmax.f32 %v1064, %v1228
      %v1449 = vmax.f32 %v1065, %v1230
      %v1450 = vmax.f32 %v1066, %v1232
      %v1451 = vmax.f32 %v1067, %v1234
      %v1452 = vmax.f32 %v1068, %v1236
      %v1453 = vmax.f32 %v1069, %v1238
      %v1454 = vmax.f32 %v1070, %v1240
      %v1455 = vmax.f32 %v1071, %v1242
      %v1456 = vmax.f32 %v1072, %v1244
      %v1457 = vmax.f32 %v1073, %v1246
      %v1458 = vmax.f32 %v1074, %v1248
      %v1459 = vmax.f32 %v1075, %v1250
      %v1460 = vmax.f32 %v1076, %v1252
      %v1461 = vmax.f32 %v1077, %v1254
      %v1462 = vmax.f32 %v1078, %v1256
      %v1463 = vmax.f32 %v1079, %v1258
      %v1464 = vmax.f32 %v1080, %v1260
      %v1465 = vmax.f32 %v1081, %v1262
      %v1466 = vmax.f32 %v1082, %v1264
      %v1467 = vmax.f32 %v1083, %v1266
      %v1468 = vmax.f32 %v1084, %v1268
      %v1469 = vmax.f32 %v1085, %v1270
      %v1470 = vmax.f32 %v1086, %v1272
      %v1471 = vmax.f32 %v1087, %v1274
      %v1472 = vmax.f32 %v1088, %v1276
      %v1473 = vmax.f32 %v1089, %v1278
      %v1474 = vmax.f32 %v1090, %v1280
      %v1475 = vmax.f32 %v1091, %v1282
      %v1476 = vmax.f32 %v1092, %v1284
      %v1477 = vmax.f32 %v1093, %v1286
      %v1478 = vmax.f32 %v1094, %v1288
      %v1479 = vmax.f32 %v1095, %v1290
      %v1480 = vmax.f32 %v1096, %v1292
      %v1481 = vmax.f32 %v1097, %v1294
      %v1482 = vmax.f32 %v1098, %v1296
      %v1483 = vmax.f32 %v1099, %v1298
      %v1484 = vmax.f32 %v1100, %v1300
      %v1485 = vmax.f32 %v1101, %v1302
      %v1486 = vmax.f32 %v1102, %v1304
      %v1487 = vmax.f32 %v1103, %v1306
      %v1488 = vmax.f32 %v1104, %v1308
      %v1489 = vmax.f32 %v1105, %v1310
      %v1490 = vmax.f32 %v1106, %v1312
      %v1491 = vmax.f32 %v1107, %v1314
      %v1492 = vmax.f32 %v1108, %v1316
      %v1493 = vmax.f32 %v1109, %v1318
      %v1494 = vmax.f32 %v1110, %v1320
      %v1495 = vmax.f32 %v1111, %v1322
      %v1496 = vmax.f32 %v1112, %v1324
      %v1497 = vmax.f32 %v1113, %v1326
      %v1498 = vmax.f32 %v1114, %v1328
      %v1499 = vmax.f32 %v1115, %v1330
      %v1500 = vmax.f32 %v1116, %v1332
      %v1501 = vmax.f32 %v1117, %v1334
      %v1502 = vmax.f32 %v1118, %v1336
      %v1503 = vmax.f32 %v1119, %v1338
      %v1504 = vmax.f32 %v1120, %v1340
      %v1505 = vmax.f32 %v1121, %v1342
      %v1506 = vmax.f32 %v1122, %v1344
      %v1507 = vmax.f32 %v1123, %v1346
      %v1508 = vmax.f32 %v1124, %v1348
      %v1509 = vmax.f32 %v1125, %v1350
      %v1510 = vmax.f32 %v1126, %v1352
      %v1511 = vmax.f32 %v1127, %v1354
      %v1512 = vmax.f32 %v1128, %v1356
      %v1513 = vmax.f32 %v1129, %v1358
      %v1514 = vmax.f32 %v1130, %v1360
      %v1515 = vmax.f32 %v1131, %v1362
      %v1516 = vmax.f32 %v1132, %v1364
      %v1517 = vmax.f32 %v1133, %v1366
      %v1518 = vmax.f32 %v1134, %v1368
      %v1519 = vmax.f32 %v1135, %v1370
      %v1520 = vmax.f32 %v1136, %v1372
      %v1521 = vmax.f32 %v1137, %v1374
      %v1522 = vmax.f32 %v1138, %v1376
      %v1523 = vmax.f32 %v1139, %v1378
      %v1524 = vmax.f32 %v1140, %v1380
      %v1525 = vmax.f32 %v1141, %v1382
      %v1526 = vmax.f32 %v1142, %v1384
      %v1527 = vmax.f32 %v1143, %v1386
      %v1528 = vmax.f32 %v1144, %v1388
      %v1529 = vmax.f32 %v1145, %v1390
      %v1530 = vmax.f32 %v1146, %v1392
      %v1531 = vmax.f32 %v1147, %v1394
      %v1532 = vmax.f32 %v1148, %v1396
      %v1533 = vmax.f32 %v1149, %v1398
      %v1534 = vmax.f32 %v1150, %v1400
      %v1535 = vmax.f32 %v1151, %v1402
      %v1536 = vmax.f32 %v1152, %v1404
      %v1537 = vmax.f32 %v1153, %v1406
      %v1538 = vmax.f32 %v1154, %v1408
      %v1539 = vmax.f32 %v1155, %v1410
      %v1540 = vmax.f32 %v1156, %v1412
      %v1541 = vld [vmem:[%s1] sm:$0xff]
      %v1542 = vld [vmem:[%s1 + $0x8] sm:$0xff]
      %v1543 = vld [vmem:[%s1 + $0x10] sm:$0xff]
      %v1544 = vld [vmem:[%s1 + $0x18] sm:$0xff]
      %v1545 = vld [vmem:[%s1 + $0x20] sm:$0xff]
      %v1546 = vld [vmem:[%s1 + $0x28] sm:$0xff]
      %v1547 = vld [vmem:[%s1 + $0x30] sm:$0xff]
      %v1548 = vld [vmem:[%s1 + $0x38] sm:$0xff]
      %v1549 = vld [vmem:[%s1 + $0x40] sm:$0xff]
      %v1550 = vld [vmem:[%s1 + $0x48] sm:$0xff]
      %v1551 = vld [vmem:[%s1 + $0x50] sm:$0xff]
      %v1552 = vld [vmem:[%s1 + $0x58] sm:$0xff]
      %v1553 = vld [vmem:[%s1 + $0x60] sm:$0xff]
      %v1554 = vld [vmem:[%s1 + $0x68] sm:$0xff]
      %v1555 = vld [vmem:[%s1 + $0x70] sm:$0xff]
      %v1556 = vld [vmem:[%s1 + $0x78] sm:$0xff]
      %v1557 = vld [vmem:[%s2] sm:$0xff]
      %v1558 = vld [vmem:[%s2 + $0x8] sm:$0xff]
      %v1559 = vld [vmem:[%s2 + $0x10] sm:$0xff]
      %v1560 = vld [vmem:[%s2 + $0x18] sm:$0xff]
      %v1561 = vld [vmem:[%s2 + $0x20] sm:$0xff]
      %v1562 = vld [vmem:[%s2 + $0x28] sm:$0xff]
      %v1563 = vld [vmem:[%s2 + $0x30] sm:$0xff]
      %v1564 = vld [vmem:[%s2 + $0x38] sm:$0xff]
      %v1565 = vld [vmem:[%s2 + $0x40] sm:$0xff]
      %v1566 = vld [vmem:[%s2 + $0x48] sm:$0xff]
      %v1567 = vld [vmem:[%s2 + $0x50] sm:$0xff]
      %v1568 = vld [vmem:[%s2 + $0x58] sm:$0xff]
      %v1569 = vld [vmem:[%s2 + $0x60] sm:$0xff]
      %v1570 = vld [vmem:[%s2 + $0x68] sm:$0xff]
      %v1571 = vld [vmem:[%s2 + $0x70] sm:$0xff]
      %v1572 = vld [vmem:[%s2 + $0x78] sm:$0xff]
      %1573 = vmatprep.subr.mxu0 0.0
      %1574 = vmatpush1.msra.mxu0 %v1572
      %1575 = vmatprep.subr.mxu0 0.0
      %1576 = vmatpush1.msra.mxu0 %v1571
      %1577 = vmatprep.subr.mxu0 0.0
      %1578 = vmatpush1.msra.mxu0 %v1570
      %1579 = vmatprep.subr.mxu0 0.0
      %1580 = vmatpush1.msra.mxu0 %v1569
      %1581 = vmatprep.subr.mxu0 0.0
      %1582 = vmatpush1.msra.mxu0 %v1568
      %1583 = vmatprep.subr.mxu0 0.0
      %1584 = vmatpush1.msra.mxu0 %v1567
      %1585 = vmatprep.subr.mxu0 0.0
      %1586 = vmatpush1.msra.mxu0 %v1566
      %1587 = vmatprep.subr.mxu0 0.0
      %1588 = vmatpush1.msra.mxu0 %v1565
      %1589 = vmatprep.subr.mxu0 0.0
      %1590 = vmatpush1.msra.mxu0 %v1564
      %1591 = vmatprep.subr.mxu0 0.0
      %1592 = vmatpush1.msra.mxu0 %v1563
      %1593 = vmatprep.subr.mxu0 0.0
      %1594 = vmatpush1.msra.mxu0 %v1562
      %1595 = vmatprep.subr.mxu0 0.0
      %1596 = vmatpush1.msra.mxu0 %v1561
      %1597 = vmatprep.subr.mxu0 0.0
      %1598 = vmatpush1.msra.mxu0 %v1560
      %1599 = vmatprep.subr.mxu0 0.0
      %1600 = vmatpush1.msra.mxu0 %v1559
      %1601 = vmatprep.subr.mxu0 0.0
      %1602 = vmatpush1.msra.mxu0 %v1558
      %1603 = vmatprep.subr.mxu0 0.0
      %1604 = vmatpush1.msra.mxu0 %v1557
      %1605 = vmatprep.subr.mxu0 0.0
      %1606 = vmatpush2.msra.mxu0 0.0
      %1607 = vmatprep.subr.mxu0 0.0
      %1608 = vmatpush2.msra.mxu0 0.0
      %1609 = vmatprep.subr.mxu0 0.0
      %1610 = vmatpush2.msra.mxu0 0.0
      %1611 = vmatprep.subr.mxu0 0.0
      %1612 = vmatpush2.msra.mxu0 0.0
      %1613 = vmatprep.subr.mxu0 0.0
      %1614 = vmatpush2.msra.mxu0 0.0
      %1615 = vmatprep.subr.mxu0 0.0
      %1616 = vmatpush2.msra.mxu0 0.0
      %1617 = vmatprep.subr.mxu0 0.0
      %1618 = vmatpush2.msra.mxu0 0.0
      %1619 = vmatprep.subr.mxu0 0.0
      %1620 = vmatpush2.msra.mxu0 0.0
      %1621 = vmatprep.subr.mxu0 0.0
      %1622 = vmatpush2.msra.mxu0 0.0
      %1623 = vmatprep.subr.mxu0 0.0
      %1624 = vmatpush2.msra.mxu0 0.0
      %1625 = vmatprep.subr.mxu0 0.0
      %1626 = vmatpush2.msra.mxu0 0.0
      %1627 = vmatprep.subr.mxu0 0.0
      %1628 = vmatpush2.msra.mxu0 0.0
      %1629 = vmatprep.subr.mxu0 0.0
      %1630 = vmatpush2.msra.mxu0 0.0
      %1631 = vmatprep.subr.mxu0 0.0
      %1632 = vmatpush2.msra.mxu0 0.0
      %1633 = vmatprep.subr.mxu0 0.0
      %1634 = vmatpush2.msra.mxu0 0.0
      %1635 = vmatprep.subr.mxu0 0.0
      %1636 = vmatpush2.msra.mxu0 0.0
      %1637 = vmatprep.mubr.f32.mxu0 0.0
      %1638 = vmatmul.mubr.f32.gmra.mxu0 %v1413
      %v1639 = vpop.f32.mrf.mxu0
      %v1640 = vadd.f32 0.0, %v1639
      %v1641 = vpop.f32.mrf.mxu0
      %1642 = vmatprep.mubr.f32.mxu0 0.0
      %1643 = vmatmul.mubr.f32.gmra.mxu0 %v1414
      %v1644 = vpop.f32.mrf.mxu0
      %v1645 = vadd.f32 0.0, %v1644
      %v1646 = vpop.f32.mrf.mxu0
      %1647 = vmatprep.mubr.f32.mxu0 0.0
      %1648 = vmatmul.mubr.f32.gmra.mxu0 %v1415
      %v1649 = vpop.f32.mrf.mxu0
      %v1650 = vadd.f32 0.0, %v1649
      %v1651 = vpop.f32.mrf.mxu0
      %1652 = vmatprep.mubr.f32.mxu0 0.0
      %1653 = vmatmul.mubr.f32.gmra.mxu0 %v1416
      %v1654 = vpop.f32.mrf.mxu0
      %v1655 = vadd.f32 0.0, %v1654
      %v1656 = vpop.f32.mrf.mxu0
      %1657 = vmatprep.mubr.f32.mxu0 0.0
      %1658 = vmatmul.mubr.f32.gmra.mxu0 %v1417
      %v1659 = vpop.f32.mrf.mxu0
      %v1660 = vadd.f32 0.0, %v1659
      %v1661 = vpop.f32.mrf.mxu0
      %1662 = vmatprep.mubr.f32.mxu0 0.0
      %1663 = vmatmul.mubr.f32.gmra.mxu0 %v1418
      %v1664 = vpop.f32.mrf.mxu0
      %v1665 = vadd.f32 0.0, %v1664
      %v1666 = vpop.f32.mrf.mxu0
      %1667 = vmatprep.mubr.f32.mxu0 0.0
      %1668 = vmatmul.mubr.f32.gmra.mxu0 %v1419
      %v1669 = vpop.f32.mrf.mxu0
      %v1670 = vadd.f32 0.0, %v1669
      %v1671 = vpop.f32.mrf.mxu0
      %1672 = vmatprep.mubr.f32.mxu0 0.0
      %1673 = vmatmul.mubr.f32.gmra.mxu0 %v1420
      %v1674 = vpop.f32.mrf.mxu0
      %v1675 = vadd.f32 0.0, %v1674
      %v1676 = vpop.f32.mrf.mxu0
      %1677 = vmatprep.mubr.f32.mxu0 0.0
      %1678 = vmatmul.mubr.f32.gmra.mxu0 %v1421
      %v1679 = vpop.f32.mrf.mxu0
      %v1680 = vadd.f32 0.0, %v1679
      %v1681 = vpop.f32.mrf.mxu0
      %1682 = vmatprep.mubr.f32.mxu0 0.0
      %1683 = vmatmul.mubr.f32.gmra.mxu0 %v1422
      %v1684 = vpop.f32.mrf.mxu0
      %v1685 = vadd.f32 0.0, %v1684
      %v1686 = vpop.f32.mrf.mxu0
      %1687 = vmatprep.mubr.f32.mxu0 0.0
      %1688 = vmatmul.mubr.f32.gmra.mxu0 %v1423
      %v1689 = vpop.f32.mrf.mxu0
      %v1690 = vadd.f32 0.0, %v1689
      %v1691 = vpop.f32.mrf.mxu0
      %1692 = vmatprep.mubr.f32.mxu0 0.0
      %1693 = vmatmul.mubr.f32.gmra.mxu0 %v1424
      %v1694 = vpop.f32.mrf.mxu0
      %v1695 = vadd.f32 0.0, %v1694
      %v1696 = vpop.f32.mrf.mxu0
      %1697 = vmatprep.mubr.f32.mxu0 0.0
      %1698 = vmatmul.mubr.f32.gmra.mxu0 %v1425
      %v1699 = vpop.f32.mrf.mxu0
      %v1700 = vadd.f32 0.0, %v1699
      %v1701 = vpop.f32.mrf.mxu0
      %1702 = vmatprep.mubr.f32.mxu0 0.0
      %1703 = vmatmul.mubr.f32.gmra.mxu0 %v1426
      %v1704 = vpop.f32.mrf.mxu0
      %v1705 = vadd.f32 0.0, %v1704
      %v1706 = vpop.f32.mrf.mxu0
      %1707 = vmatprep.mubr.f32.mxu0 0.0
      %1708 = vmatmul.mubr.f32.gmra.mxu0 %v1427
      %v1709 = vpop.f32.mrf.mxu0
      %v1710 = vadd.f32 0.0, %v1709
      %v1711 = vpop.f32.mrf.mxu0
      %1712 = vmatprep.mubr.f32.mxu0 0.0
      %1713 = vmatmul.mubr.f32.gmra.mxu0 %v1428
      %v1714 = vpop.f32.mrf.mxu0
      %v1715 = vadd.f32 0.0, %v1714
      %v1716 = vpop.f32.mrf.mxu0
      %1717 = vmatprep.mubr.f32.mxu0 0.0
      %1718 = vmatmul.mubr.f32.gmra.mxu0 %v1429
      %v1719 = vpop.f32.mrf.mxu0
      %v1720 = vadd.f32 0.0, %v1719
      %v1721 = vpop.f32.mrf.mxu0
      %1722 = vmatprep.mubr.f32.mxu0 0.0
      %1723 = vmatmul.mubr.f32.gmra.mxu0 %v1430
      %v1724 = vpop.f32.mrf.mxu0
      %v1725 = vadd.f32 0.0, %v1724
      %v1726 = vpop.f32.mrf.mxu0
      %1727 = vmatprep.mubr.f32.mxu0 0.0
      %1728 = vmatmul.mubr.f32.gmra.mxu0 %v1431
      %v1729 = vpop.f32.mrf.mxu0
      %v1730 = vadd.f32 0.0, %v1729
      %v1731 = vpop.f32.mrf.mxu0
      %1732 = vmatprep.mubr.f32.mxu0 0.0
      %1733 = vmatmul.mubr.f32.gmra.mxu0 %v1432
      %v1734 = vpop.f32.mrf.mxu0
      %v1735 = vadd.f32 0.0, %v1734
      %v1736 = vpop.f32.mrf.mxu0
      %1737 = vmatprep.mubr.f32.mxu0 0.0
      %1738 = vmatmul.mubr.f32.gmra.mxu0 %v1433
      %v1739 = vpop.f32.mrf.mxu0
      %v1740 = vadd.f32 0.0, %v1739
      %v1741 = vpop.f32.mrf.mxu0
      %1742 = vmatprep.mubr.f32.mxu0 0.0
      %1743 = vmatmul.mubr.f32.gmra.mxu0 %v1434
      %v1744 = vpop.f32.mrf.mxu0
      %v1745 = vadd.f32 0.0, %v1744
      %v1746 = vpop.f32.mrf.mxu0
      %1747 = vmatprep.mubr.f32.mxu0 0.0
      %1748 = vmatmul.mubr.f32.gmra.mxu0 %v1435
      %v1749 = vpop.f32.mrf.mxu0
      %v1750 = vadd.f32 0.0, %v1749
      %v1751 = vpop.f32.mrf.mxu0
      %1752 = vmatprep.mubr.f32.mxu0 0.0
      %1753 = vmatmul.mubr.f32.gmra.mxu0 %v1436
      %v1754 = vpop.f32.mrf.mxu0
      %v1755 = vadd.f32 0.0, %v1754
      %v1756 = vpop.f32.mrf.mxu0
      %1757 = vmatprep.mubr.f32.mxu0 0.0
      %1758 = vmatmul.mubr.f32.gmra.mxu0 %v1437
      %v1759 = vpop.f32.mrf.mxu0
      %v1760 = vadd.f32 0.0, %v1759
      %v1761 = vpop.f32.mrf.mxu0
      %1762 = vmatprep.mubr.f32.mxu0 0.0
      %1763 = vmatmul.mubr.f32.gmra.mxu0 %v1438
      %v1764 = vpop.f32.mrf.mxu0
      %v1765 = vadd.f32 0.0, %v1764
      %v1766 = vpop.f32.mrf.mxu0
      %1767 = vmatprep.mubr.f32.mxu0 0.0
      %1768 = vmatmul.mubr.f32.gmra.mxu0 %v1439
      %v1769 = vpop.f32.mrf.mxu0
      %v1770 = vadd.f32 0.0, %v1769
      %v1771 = vpop.f32.mrf.mxu0
      %1772 = vmatprep.mubr.f32.mxu0 0.0
      %1773 = vmatmul.mubr.f32.gmra.mxu0 %v1440
      %v1774 = vpop.f32.mrf.mxu0
      %v1775 = vadd.f32 0.0, %v1774
      %v1776 = vpop.f32.mrf.mxu0
      %1777 = vmatprep.mubr.f32.mxu0 0.0
      %1778 = vmatmul.mubr.f32.gmra.mxu0 %v1441
      %v1779 = vpop.f32.mrf.mxu0
      %v1780 = vadd.f32 0.0, %v1779
      %v1781 = vpop.f32.mrf.mxu0
      %1782 = vmatprep.mubr.f32.mxu0 0.0
      %1783 = vmatmul.mubr.f32.gmra.mxu0 %v1442
      %v1784 = vpop.f32.mrf.mxu0
      %v1785 = vadd.f32 0.0, %v1784
      %v1786 = vpop.f32.mrf.mxu0
      %1787 = vmatprep.mubr.f32.mxu0 0.0
      %1788 = vmatmul.mubr.f32.gmra.mxu0 %v1443
      %v1789 = vpop.f32.mrf.mxu0
      %v1790 = vadd.f32 0.0, %v1789
      %v1791 = vpop.f32.mrf.mxu0
      %1792 = vmatprep.mubr.f32.mxu0 0.0
      %1793 = vmatmul.mubr.f32.gmra.mxu0 %v1444
      %v1794 = vpop.f32.mrf.mxu0
      %v1795 = vadd.f32 0.0, %v1794
      %v1796 = vpop.f32.mrf.mxu0
      %1797 = vmatprep.mubr.f32.mxu0 0.0
      %1798 = vmatmul.mubr.f32.gmra.mxu0 %v1445
      %v1799 = vpop.f32.mrf.mxu0
      %v1800 = vadd.f32 0.0, %v1799
      %v1801 = vpop.f32.mrf.mxu0
      %1802 = vmatprep.mubr.f32.mxu0 0.0
      %1803 = vmatmul.mubr.f32.gmra.mxu0 %v1446
      %v1804 = vpop.f32.mrf.mxu0
      %v1805 = vadd.f32 0.0, %v1804
      %v1806 = vpop.f32.mrf.mxu0
      %1807 = vmatprep.mubr.f32.mxu0 0.0
      %1808 = vmatmul.mubr.f32.gmra.mxu0 %v1447
      %v1809 = vpop.f32.mrf.mxu0
      %v1810 = vadd.f32 0.0, %v1809
      %v1811 = vpop.f32.mrf.mxu0
      %1812 = vmatprep.mubr.f32.mxu0 0.0
      %1813 = vmatmul.mubr.f32.gmra.mxu0 %v1448
      %v1814 = vpop.f32.mrf.mxu0
      %v1815 = vadd.f32 0.0, %v1814
      %v1816 = vpop.f32.mrf.mxu0
      %1817 = vmatprep.mubr.f32.mxu0 0.0
      %1818 = vmatmul.mubr.f32.gmra.mxu0 %v1449
      %v1819 = vpop.f32.mrf.mxu0
      %v1820 = vadd.f32 0.0, %v1819
      %v1821 = vpop.f32.mrf.mxu0
      %1822 = vmatprep.mubr.f32.mxu0 0.0
      %1823 = vmatmul.mubr.f32.gmra.mxu0 %v1450
      %v1824 = vpop.f32.mrf.mxu0
      %v1825 = vadd.f32 0.0, %v1824
      %v1826 = vpop.f32.mrf.mxu0
      %1827 = vmatprep.mubr.f32.mxu0 0.0
      %1828 = vmatmul.mubr.f32.gmra.mxu0 %v1451
      %v1829 = vpop.f32.mrf.mxu0
      %v1830 = vadd.f32 0.0, %v1829
      %v1831 = vpop.f32.mrf.mxu0
      %1832 = vmatprep.mubr.f32.mxu0 0.0
      %1833 = vmatmul.mubr.f32.gmra.mxu0 %v1452
      %v1834 = vpop.f32.mrf.mxu0
      %v1835 = vadd.f32 0.0, %v1834
      %v1836 = vpop.f32.mrf.mxu0
      %1837 = vmatprep.mubr.f32.mxu0 0.0
      %1838 = vmatmul.mubr.f32.gmra.mxu0 %v1453
      %v1839 = vpop.f32.mrf.mxu0
      %v1840 = vadd.f32 0.0, %v1839
      %v1841 = vpop.f32.mrf.mxu0
      %1842 = vmatprep.mubr.f32.mxu0 0.0
      %1843 = vmatmul.mubr.f32.gmra.mxu0 %v1454
      %v1844 = vpop.f32.mrf.mxu0
      %v1845 = vadd.f32 0.0, %v1844
      %v1846 = vpop.f32.mrf.mxu0
      %1847 = vmatprep.mubr.f32.mxu0 0.0
      %1848 = vmatmul.mubr.f32.gmra.mxu0 %v1455
      %v1849 = vpop.f32.mrf.mxu0
      %v1850 = vadd.f32 0.0, %v1849
      %v1851 = vpop.f32.mrf.mxu0
      %1852 = vmatprep.mubr.f32.mxu0 0.0
      %1853 = vmatmul.mubr.f32.gmra.mxu0 %v1456
      %v1854 = vpop.f32.mrf.mxu0
      %v1855 = vadd.f32 0.0, %v1854
      %v1856 = vpop.f32.mrf.mxu0
      %1857 = vmatprep.mubr.f32.mxu0 0.0
      %1858 = vmatmul.mubr.f32.gmra.mxu0 %v1457
      %v1859 = vpop.f32.mrf.mxu0
      %v1860 = vadd.f32 0.0, %v1859
      %v1861 = vpop.f32.mrf.mxu0
      %1862 = vmatprep.mubr.f32.mxu0 0.0
      %1863 = vmatmul.mubr.f32.gmra.mxu0 %v1458
      %v1864 = vpop.f32.mrf.mxu0
      %v1865 = vadd.f32 0.0, %v1864
      %v1866 = vpop.f32.mrf.mxu0
      %1867 = vmatprep.mubr.f32.mxu0 0.0
      %1868 = vmatmul.mubr.f32.gmra.mxu0 %v1459
      %v1869 = vpop.f32.mrf.mxu0
      %v1870 = vadd.f32 0.0, %v1869
      %v1871 = vpop.f32.mrf.mxu0
      %1872 = vmatprep.mubr.f32.mxu0 0.0
      %1873 = vmatmul.mubr.f32.gmra.mxu0 %v1460
      %v1874 = vpop.f32.mrf.mxu0
      %v1875 = vadd.f32 0.0, %v1874
      %v1876 = vpop.f32.mrf.mxu0
      %1877 = vmatprep.mubr.f32.mxu0 0.0
      %1878 = vmatmul.mubr.f32.gmra.mxu0 %v1461
      %v1879 = vpop.f32.mrf.mxu0
      %v1880 = vadd.f32 0.0, %v1879
      %v1881 = vpop.f32.mrf.mxu0
      %1882 = vmatprep.mubr.f32.mxu0 0.0
      %1883 = vmatmul.mubr.f32.gmra.mxu0 %v1462
      %v1884 = vpop.f32.mrf.mxu0
      %v1885 = vadd.f32 0.0, %v1884
      %v1886 = vpop.f32.mrf.mxu0
      %1887 = vmatprep.mubr.f32.mxu0 0.0
      %1888 = vmatmul.mubr.f32.gmra.mxu0 %v1463
      %v1889 = vpop.f32.mrf.mxu0
      %v1890 = vadd.f32 0.0, %v1889
      %v1891 = vpop.f32.mrf.mxu0
      %1892 = vmatprep.mubr.f32.mxu0 0.0
      %1893 = vmatmul.mubr.f32.gmra.mxu0 %v1464
      %v1894 = vpop.f32.mrf.mxu0
      %v1895 = vadd.f32 0.0, %v1894
      %v1896 = vpop.f32.mrf.mxu0
      %1897 = vmatprep.mubr.f32.mxu0 0.0
      %1898 = vmatmul.mubr.f32.gmra.mxu0 %v1465
      %v1899 = vpop.f32.mrf.mxu0
      %v1900 = vadd.f32 0.0, %v1899
      %v1901 = vpop.f32.mrf.mxu0
      %1902 = vmatprep.mubr.f32.mxu0 0.0
      %1903 = vmatmul.mubr.f32.gmra.mxu0 %v1466
      %v1904 = vpop.f32.mrf.mxu0
      %v1905 = vadd.f32 0.0, %v1904
      %v1906 = vpop.f32.mrf.mxu0
      %1907 = vmatprep.mubr.f32.mxu0 0.0
      %1908 = vmatmul.mubr.f32.gmra.mxu0 %v1467
      %v1909 = vpop.f32.mrf.mxu0
      %v1910 = vadd.f32 0.0, %v1909
      %v1911 = vpop.f32.mrf.mxu0
      %1912 = vmatprep.mubr.f32.mxu0 0.0
      %1913 = vmatmul.mubr.f32.gmra.mxu0 %v1468
      %v1914 = vpop.f32.mrf.mxu0
      %v1915 = vadd.f32 0.0, %v1914
      %v1916 = vpop.f32.mrf.mxu0
      %1917 = vmatprep.mubr.f32.mxu0 0.0
      %1918 = vmatmul.mubr.f32.gmra.mxu0 %v1469
      %v1919 = vpop.f32.mrf.mxu0
      %v1920 = vadd.f32 0.0, %v1919
      %v1921 = vpop.f32.mrf.mxu0
      %1922 = vmatprep.mubr.f32.mxu0 0.0
      %1923 = vmatmul.mubr.f32.gmra.mxu0 %v1470
      %v1924 = vpop.f32.mrf.mxu0
      %v1925 = vadd.f32 0.0, %v1924
      %v1926 = vpop.f32.mrf.mxu0
      %1927 = vmatprep.mubr.f32.mxu0 0.0
      %1928 = vmatmul.mubr.f32.gmra.mxu0 %v1471
      %v1929 = vpop.f32.mrf.mxu0
      %v1930 = vadd.f32 0.0, %v1929
      %v1931 = vpop.f32.mrf.mxu0
      %1932 = vmatprep.mubr.f32.mxu0 0.0
      %1933 = vmatmul.mubr.f32.gmra.mxu0 %v1472
      %v1934 = vpop.f32.mrf.mxu0
      %v1935 = vadd.f32 0.0, %v1934
      %v1936 = vpop.f32.mrf.mxu0
      %1937 = vmatprep.mubr.f32.mxu0 0.0
      %1938 = vmatmul.mubr.f32.gmra.mxu0 %v1473
      %v1939 = vpop.f32.mrf.mxu0
      %v1940 = vadd.f32 0.0, %v1939
      %v1941 = vpop.f32.mrf.mxu0
      %1942 = vmatprep.mubr.f32.mxu0 0.0
      %1943 = vmatmul.mubr.f32.gmra.mxu0 %v1474
      %v1944 = vpop.f32.mrf.mxu0
      %v1945 = vadd.f32 0.0, %v1944
      %v1946 = vpop.f32.mrf.mxu0
      %1947 = vmatprep.mubr.f32.mxu0 0.0
      %1948 = vmatmul.mubr.f32.gmra.mxu0 %v1475
      %v1949 = vpop.f32.mrf.mxu0
      %v1950 = vadd.f32 0.0, %v1949
      %v1951 = vpop.f32.mrf.mxu0
      %1952 = vmatprep.mubr.f32.mxu0 0.0
      %1953 = vmatmul.mubr.f32.gmra.mxu0 %v1476
      %v1954 = vpop.f32.mrf.mxu0
      %v1955 = vadd.f32 0.0, %v1954
      %v1956 = vpop.f32.mrf.mxu0
      %1957 = vmatprep.mubr.f32.mxu0 0.0
      %1958 = vmatmul.mubr.f32.gmra.mxu0 %v1477
      %v1959 = vpop.f32.mrf.mxu0
      %v1960 = vadd.f32 0.0, %v1959
      %v1961 = vpop.f32.mrf.mxu0
      %1962 = vmatprep.mubr.f32.mxu0 0.0
      %1963 = vmatmul.mubr.f32.gmra.mxu0 %v1478
      %v1964 = vpop.f32.mrf.mxu0
      %v1965 = vadd.f32 0.0, %v1964
      %v1966 = vpop.f32.mrf.mxu0
      %1967 = vmatprep.mubr.f32.mxu0 0.0
      %1968 = vmatmul.mubr.f32.gmra.mxu0 %v1479
      %v1969 = vpop.f32.mrf.mxu0
      %v1970 = vadd.f32 0.0, %v1969
      %v1971 = vpop.f32.mrf.mxu0
      %1972 = vmatprep.mubr.f32.mxu0 0.0
      %1973 = vmatmul.mubr.f32.gmra.mxu0 %v1480
      %v1974 = vpop.f32.mrf.mxu0
      %v1975 = vadd.f32 0.0, %v1974
      %v1976 = vpop.f32.mrf.mxu0
      %1977 = vmatprep.mubr.f32.mxu0 0.0
      %1978 = vmatmul.mubr.f32.gmra.mxu0 %v1481
      %v1979 = vpop.f32.mrf.mxu0
      %v1980 = vadd.f32 0.0, %v1979
      %v1981 = vpop.f32.mrf.mxu0
      %1982 = vmatprep.mubr.f32.mxu0 0.0
      %1983 = vmatmul.mubr.f32.gmra.mxu0 %v1482
      %v1984 = vpop.f32.mrf.mxu0
      %v1985 = vadd.f32 0.0, %v1984
      %v1986 = vpop.f32.mrf.mxu0
      %1987 = vmatprep.mubr.f32.mxu0 0.0
      %1988 = vmatmul.mubr.f32.gmra.mxu0 %v1483
      %v1989 = vpop.f32.mrf.mxu0
      %v1990 = vadd.f32 0.0, %v1989
      %v1991 = vpop.f32.mrf.mxu0
      %1992 = vmatprep.mubr.f32.mxu0 0.0
      %1993 = vmatmul.mubr.f32.gmra.mxu0 %v1484
      %v1994 = vpop.f32.mrf.mxu0
      %v1995 = vadd.f32 0.0, %v1994
      %v1996 = vpop.f32.mrf.mxu0
      %1997 = vmatprep.mubr.f32.mxu0 0.0
      %1998 = vmatmul.mubr.f32.gmra.mxu0 %v1485
      %v1999 = vpop.f32.mrf.mxu0
      %v2000 = vadd.f32 0.0, %v1999
      %v2001 = vpop.f32.mrf.mxu0
      %2002 = vmatprep.mubr.f32.mxu0 0.0
      %2003 = vmatmul.mubr.f32.gmra.mxu0 %v1486
      %v2004 = vpop.f32.mrf.mxu0
      %v2005 = vadd.f32 0.0, %v2004
      %v2006 = vpop.f32.mrf.mxu0
      %2007 = vmatprep.mubr.f32.mxu0 0.0
      %2008 = vmatmul.mubr.f32.gmra.mxu0 %v1487
      %v2009 = vpop.f32.mrf.mxu0
      %v2010 = vadd.f32 0.0, %v2009
      %v2011 = vpop.f32.mrf.mxu0
      %2012 = vmatprep.mubr.f32.mxu0 0.0
      %2013 = vmatmul.mubr.f32.gmra.mxu0 %v1488
      %v2014 = vpop.f32.mrf.mxu0
      %v2015 = vadd.f32 0.0, %v2014
      %v2016 = vpop.f32.mrf.mxu0
      %2017 = vmatprep.mubr.f32.mxu0 0.0
      %2018 = vmatmul.mubr.f32.gmra.mxu0 %v1489
      %v2019 = vpop.f32.mrf.mxu0
      %v2020 = vadd.f32 0.0, %v2019
      %v2021 = vpop.f32.mrf.mxu0
      %2022 = vmatprep.mubr.f32.mxu0 0.0
      %2023 = vmatmul.mubr.f32.gmra.mxu0 %v1490
      %v2024 = vpop.f32.mrf.mxu0
      %v2025 = vadd.f32 0.0, %v2024
      %v2026 = vpop.f32.mrf.mxu0
      %2027 = vmatprep.mubr.f32.mxu0 0.0
      %2028 = vmatmul.mubr.f32.gmra.mxu0 %v1491
      %v2029 = vpop.f32.mrf.mxu0
      %v2030 = vadd.f32 0.0, %v2029
      %v2031 = vpop.f32.mrf.mxu0
      %2032 = vmatprep.mubr.f32.mxu0 0.0
      %2033 = vmatmul.mubr.f32.gmra.mxu0 %v1492
      %v2034 = vpop.f32.mrf.mxu0
      %v2035 = vadd.f32 0.0, %v2034
      %v2036 = vpop.f32.mrf.mxu0
      %2037 = vmatprep.mubr.f32.mxu0 0.0
      %2038 = vmatmul.mubr.f32.gmra.mxu0 %v1493
      %v2039 = vpop.f32.mrf.mxu0
      %v2040 = vadd.f32 0.0, %v2039
      %v2041 = vpop.f32.mrf.mxu0
      %2042 = vmatprep.mubr.f32.mxu0 0.0
      %2043 = vmatmul.mubr.f32.gmra.mxu0 %v1494
      %v2044 = vpop.f32.mrf.mxu0
      %v2045 = vadd.f32 0.0, %v2044
      %v2046 = vpop.f32.mrf.mxu0
      %2047 = vmatprep.mubr.f32.mxu0 0.0
      %2048 = vmatmul.mubr.f32.gmra.mxu0 %v1495
      %v2049 = vpop.f32.mrf.mxu0
      %v2050 = vadd.f32 0.0, %v2049
      %v2051 = vpop.f32.mrf.mxu0
      %2052 = vmatprep.mubr.f32.mxu0 0.0
      %2053 = vmatmul.mubr.f32.gmra.mxu0 %v1496
      %v2054 = vpop.f32.mrf.mxu0
      %v2055 = vadd.f32 0.0, %v2054
      %v2056 = vpop.f32.mrf.mxu0
      %2057 = vmatprep.mubr.f32.mxu0 0.0
      %2058 = vmatmul.mubr.f32.gmra.mxu0 %v1497
      %v2059 = vpop.f32.mrf.mxu0
      %v2060 = vadd.f32 0.0, %v2059
      %v2061 = vpop.f32.mrf.mxu0
      %2062 = vmatprep.mubr.f32.mxu0 0.0
      %2063 = vmatmul.mubr.f32.gmra.mxu0 %v1498
      %v2064 = vpop.f32.mrf.mxu0
      %v2065 = vadd.f32 0.0, %v2064
      %v2066 = vpop.f32.mrf.mxu0
      %2067 = vmatprep.mubr.f32.mxu0 0.0
      %2068 = vmatmul.mubr.f32.gmra.mxu0 %v1499
      %v2069 = vpop.f32.mrf.mxu0
      %v2070 = vadd.f32 0.0, %v2069
      %v2071 = vpop.f32.mrf.mxu0
      %2072 = vmatprep.mubr.f32.mxu0 0.0
      %2073 = vmatmul.mubr.f32.gmra.mxu0 %v1500
      %v2074 = vpop.f32.mrf.mxu0
      %v2075 = vadd.f32 0.0, %v2074
      %v2076 = vpop.f32.mrf.mxu0
      %2077 = vmatprep.mubr.f32.mxu0 0.0
      %2078 = vmatmul.mubr.f32.gmra.mxu0 %v1501
      %v2079 = vpop.f32.mrf.mxu0
      %v2080 = vadd.f32 0.0, %v2079
      %v2081 = vpop.f32.mrf.mxu0
      %2082 = vmatprep.mubr.f32.mxu0 0.0
      %2083 = vmatmul.mubr.f32.gmra.mxu0 %v1502
      %v2084 = vpop.f32.mrf.mxu0
      %v2085 = vadd.f32 0.0, %v2084
      %v2086 = vpop.f32.mrf.mxu0
      %2087 = vmatprep.mubr.f32.mxu0 0.0
      %2088 = vmatmul.mubr.f32.gmra.mxu0 %v1503
      %v2089 = vpop.f32.mrf.mxu0
      %v2090 = vadd.f32 0.0, %v2089
      %v2091 = vpop.f32.mrf.mxu0
      %2092 = vmatprep.mubr.f32.mxu0 0.0
      %2093 = vmatmul.mubr.f32.gmra.mxu0 %v1504
      %v2094 = vpop.f32.mrf.mxu0
      %v2095 = vadd.f32 0.0, %v2094
      %v2096 = vpop.f32.mrf.mxu0
      %2097 = vmatprep.mubr.f32.mxu0 0.0
      %2098 = vmatmul.mubr.f32.gmra.mxu0 %v1505
      %v2099 = vpop.f32.mrf.mxu0
      %v2100 = vadd.f32 0.0, %v2099
      %v2101 = vpop.f32.mrf.mxu0
      %2102 = vmatprep.mubr.f32.mxu0 0.0
      %2103 = vmatmul.mubr.f32.gmra.mxu0 %v1506
      %v2104 = vpop.f32.mrf.mxu0
      %v2105 = vadd.f32 0.0, %v2104
      %v2106 = vpop.f32.mrf.mxu0
      %2107 = vmatprep.mubr.f32.mxu0 0.0
      %2108 = vmatmul.mubr.f32.gmra.mxu0 %v1507
      %v2109 = vpop.f32.mrf.mxu0
      %v2110 = vadd.f32 0.0, %v2109
      %v2111 = vpop.f32.mrf.mxu0
      %2112 = vmatprep.mubr.f32.mxu0 0.0
      %2113 = vmatmul.mubr.f32.gmra.mxu0 %v1508
      %v2114 = vpop.f32.mrf.mxu0
      %v2115 = vadd.f32 0.0, %v2114
      %v2116 = vpop.f32.mrf.mxu0
      %2117 = vmatprep.mubr.f32.mxu0 0.0
      %2118 = vmatmul.mubr.f32.gmra.mxu0 %v1509
      %v2119 = vpop.f32.mrf.mxu0
      %v2120 = vadd.f32 0.0, %v2119
      %v2121 = vpop.f32.mrf.mxu0
      %2122 = vmatprep.mubr.f32.mxu0 0.0
      %2123 = vmatmul.mubr.f32.gmra.mxu0 %v1510
      %v2124 = vpop.f32.mrf.mxu0
      %v2125 = vadd.f32 0.0, %v2124
      %v2126 = vpop.f32.mrf.mxu0
      %2127 = vmatprep.mubr.f32.mxu0 0.0
      %2128 = vmatmul.mubr.f32.gmra.mxu0 %v1511
      %v2129 = vpop.f32.mrf.mxu0
      %v2130 = vadd.f32 0.0, %v2129
      %v2131 = vpop.f32.mrf.mxu0
      %2132 = vmatprep.mubr.f32.mxu0 0.0
      %2133 = vmatmul.mubr.f32.gmra.mxu0 %v1512
      %v2134 = vpop.f32.mrf.mxu0
      %v2135 = vadd.f32 0.0, %v2134
      %v2136 = vpop.f32.mrf.mxu0
      %2137 = vmatprep.mubr.f32.mxu0 0.0
      %2138 = vmatmul.mubr.f32.gmra.mxu0 %v1513
      %v2139 = vpop.f32.mrf.mxu0
      %v2140 = vadd.f32 0.0, %v2139
      %v2141 = vpop.f32.mrf.mxu0
      %2142 = vmatprep.mubr.f32.mxu0 0.0
      %2143 = vmatmul.mubr.f32.gmra.mxu0 %v1514
      %v2144 = vpop.f32.mrf.mxu0
      %v2145 = vadd.f32 0.0, %v2144
      %v2146 = vpop.f32.mrf.mxu0
      %2147 = vmatprep.mubr.f32.mxu0 0.0
      %2148 = vmatmul.mubr.f32.gmra.mxu0 %v1515
      %v2149 = vpop.f32.mrf.mxu0
      %v2150 = vadd.f32 0.0, %v2149
      %v2151 = vpop.f32.mrf.mxu0
      %2152 = vmatprep.mubr.f32.mxu0 0.0
      %2153 = vmatmul.mubr.f32.gmra.mxu0 %v1516
      %v2154 = vpop.f32.mrf.mxu0
      %v2155 = vadd.f32 0.0, %v2154
      %v2156 = vpop.f32.mrf.mxu0
      %2157 = vmatprep.mubr.f32.mxu0 0.0
      %2158 = vmatmul.mubr.f32.gmra.mxu0 %v1517
      %v2159 = vpop.f32.mrf.mxu0
      %v2160 = vadd.f32 0.0, %v2159
      %v2161 = vpop.f32.mrf.mxu0
      %2162 = vmatprep.mubr.f32.mxu0 0.0
      %2163 = vmatmul.mubr.f32.gmra.mxu0 %v1518
      %v2164 = vpop.f32.mrf.mxu0
      %v2165 = vadd.f32 0.0, %v2164
      %v2166 = vpop.f32.mrf.mxu0
      %2167 = vmatprep.mubr.f32.mxu0 0.0
      %2168 = vmatmul.mubr.f32.gmra.mxu0 %v1519
      %v2169 = vpop.f32.mrf.mxu0
      %v2170 = vadd.f32 0.0, %v2169
      %v2171 = vpop.f32.mrf.mxu0
      %2172 = vmatprep.mubr.f32.mxu0 0.0
      %2173 = vmatmul.mubr.f32.gmra.mxu0 %v1520
      %v2174 = vpop.f32.mrf.mxu0
      %v2175 = vadd.f32 0.0, %v2174
      %v2176 = vpop.f32.mrf.mxu0
      %2177 = vmatprep.mubr.f32.mxu0 0.0
      %2178 = vmatmul.mubr.f32.gmra.mxu0 %v1521
      %v2179 = vpop.f32.mrf.mxu0
      %v2180 = vadd.f32 0.0, %v2179
      %v2181 = vpop.f32.mrf.mxu0
      %2182 = vmatprep.mubr.f32.mxu0 0.0
      %2183 = vmatmul.mubr.f32.gmra.mxu0 %v1522
      %v2184 = vpop.f32.mrf.mxu0
      %v2185 = vadd.f32 0.0, %v2184
      %v2186 = vpop.f32.mrf.mxu0
      %2187 = vmatprep.mubr.f32.mxu0 0.0
      %2188 = vmatmul.mubr.f32.gmra.mxu0 %v1523
      %v2189 = vpop.f32.mrf.mxu0
      %v2190 = vadd.f32 0.0, %v2189
      %v2191 = vpop.f32.mrf.mxu0
      %2192 = vmatprep.mubr.f32.mxu0 0.0
      %2193 = vmatmul.mubr.f32.gmra.mxu0 %v1524
      %v2194 = vpop.f32.mrf.mxu0
      %v2195 = vadd.f32 0.0, %v2194
      %v2196 = vpop.f32.mrf.mxu0
      %2197 = vmatprep.mubr.f32.mxu0 0.0
      %2198 = vmatmul.mubr.f32.gmra.mxu0 %v1525
      %v2199 = vpop.f32.mrf.mxu0
      %v2200 = vadd.f32 0.0, %v2199
      %v2201 = vpop.f32.mrf.mxu0
      %2202 = vmatprep.mubr.f32.mxu0 0.0
      %2203 = vmatmul.mubr.f32.gmra.mxu0 %v1526
      %v2204 = vpop.f32.mrf.mxu0
      %v2205 = vadd.f32 0.0, %v2204
      %v2206 = vpop.f32.mrf.mxu0
      %2207 = vmatprep.mubr.f32.mxu0 0.0
      %2208 = vmatmul.mubr.f32.gmra.mxu0 %v1527
      %v2209 = vpop.f32.mrf.mxu0
      %v2210 = vadd.f32 0.0, %v2209
      %v2211 = vpop.f32.mrf.mxu0
      %2212 = vmatprep.mubr.f32.mxu0 0.0
      %2213 = vmatmul.mubr.f32.gmra.mxu0 %v1528
      %v2214 = vpop.f32.mrf.mxu0
      %v2215 = vadd.f32 0.0, %v2214
      %v2216 = vpop.f32.mrf.mxu0
      %2217 = vmatprep.mubr.f32.mxu0 0.0
      %2218 = vmatmul.mubr.f32.gmra.mxu0 %v1529
      %v2219 = vpop.f32.mrf.mxu0
      %v2220 = vadd.f32 0.0, %v2219
      %v2221 = vpop.f32.mrf.mxu0
      %2222 = vmatprep.mubr.f32.mxu0 0.0
      %2223 = vmatmul.mubr.f32.gmra.mxu0 %v1530
      %v2224 = vpop.f32.mrf.mxu0
      %v2225 = vadd.f32 0.0, %v2224
      %v2226 = vpop.f32.mrf.mxu0
      %2227 = vmatprep.mubr.f32.mxu0 0.0
      %2228 = vmatmul.mubr.f32.gmra.mxu0 %v1531
      %v2229 = vpop.f32.mrf.mxu0
      %v2230 = vadd.f32 0.0, %v2229
      %v2231 = vpop.f32.mrf.mxu0
      %2232 = vmatprep.mubr.f32.mxu0 0.0
      %2233 = vmatmul.mubr.f32.gmra.mxu0 %v1532
      %v2234 = vpop.f32.mrf.mxu0
      %v2235 = vadd.f32 0.0, %v2234
      %v2236 = vpop.f32.mrf.mxu0
      %2237 = vmatprep.mubr.f32.mxu0 0.0
      %2238 = vmatmul.mubr.f32.gmra.mxu0 %v1533
      %v2239 = vpop.f32.mrf.mxu0
      %v2240 = vadd.f32 0.0, %v2239
      %v2241 = vpop.f32.mrf.mxu0
      %2242 = vmatprep.mubr.f32.mxu0 0.0
      %2243 = vmatmul.mubr.f32.gmra.mxu0 %v1534
      %v2244 = vpop.f32.mrf.mxu0
      %v2245 = vadd.f32 0.0, %v2244
      %v2246 = vpop.f32.mrf.mxu0
      %2247 = vmatprep.mubr.f32.mxu0 0.0
      %2248 = vmatmul.mubr.f32.gmra.mxu0 %v1535
      %v2249 = vpop.f32.mrf.mxu0
      %v2250 = vadd.f32 0.0, %v2249
      %v2251 = vpop.f32.mrf.mxu0
      %2252 = vmatprep.mubr.f32.mxu0 0.0
      %2253 = vmatmul.mubr.f32.gmra.mxu0 %v1536
      %v2254 = vpop.f32.mrf.mxu0
      %v2255 = vadd.f32 0.0, %v2254
      %v2256 = vpop.f32.mrf.mxu0
      %2257 = vmatprep.mubr.f32.mxu0 0.0
      %2258 = vmatmul.mubr.f32.gmra.mxu0 %v1537
      %v2259 = vpop.f32.mrf.mxu0
      %v2260 = vadd.f32 0.0, %v2259
      %v2261 = vpop.f32.mrf.mxu0
      %2262 = vmatprep.mubr.f32.mxu0 0.0
      %2263 = vmatmul.mubr.f32.gmra.mxu0 %v1538
      %v2264 = vpop.f32.mrf.mxu0
      %v2265 = vadd.f32 0.0, %v2264
      %v2266 = vpop.f32.mrf.mxu0
      %2267 = vmatprep.mubr.f32.mxu0 0.0
      %2268 = vmatmul.mubr.f32.gmra.mxu0 %v1539
      %v2269 = vpop.f32.mrf.mxu0
      %v2270 = vadd.f32 0.0, %v2269
      %v2271 = vpop.f32.mrf.mxu0
      %2272 = vmatprep.mubr.f32.mxu0 0.0
      %2273 = vmatmul.mubr.f32.gmra.mxu0 %v1540
      %v2274 = vpop.f32.mrf.mxu0
      %v2275 = vadd.f32 0.0, %v2274
      %v2276 = vpop.f32.mrf.mxu0
      %2277 = vdwg.mxu0
      %2278 = vmatprep.subr.mxu0 0.0
      %2279 = vmatpush1.msra.mxu0 %v1556
      %2280 = vmatprep.subr.mxu0 0.0
      %2281 = vmatpush1.msra.mxu0 %v1555
      %2282 = vmatprep.subr.mxu0 0.0
      %2283 = vmatpush1.msra.mxu0 %v1554
      %2284 = vmatprep.subr.mxu0 0.0
      %2285 = vmatpush1.msra.mxu0 %v1553
      %2286 = vmatprep.subr.mxu0 0.0
      %2287 = vmatpush1.msra.mxu0 %v1552
      %2288 = vmatprep.subr.mxu0 0.0
      %2289 = vmatpush1.msra.mxu0 %v1551
      %2290 = vmatprep.subr.mxu0 0.0
      %2291 = vmatpush1.msra.mxu0 %v1550
      %2292 = vmatprep.subr.mxu0 0.0
      %2293 = vmatpush1.msra.mxu0 %v1549
      %2294 = vmatprep.subr.mxu0 0.0
      %2295 = vmatpush1.msra.mxu0 %v1548
      %2296 = vmatprep.subr.mxu0 0.0
      %2297 = vmatpush1.msra.mxu0 %v1547
      %2298 = vmatprep.subr.mxu0 0.0
      %2299 = vmatpush1.msra.mxu0 %v1546
      %2300 = vmatprep.subr.mxu0 0.0
      %2301 = vmatpush1.msra.mxu0 %v1545
      %2302 = vmatprep.subr.mxu0 0.0
      %2303 = vmatpush1.msra.mxu0 %v1544
      %2304 = vmatprep.subr.mxu0 0.0
      %2305 = vmatpush1.msra.mxu0 %v1543
      %2306 = vmatprep.subr.mxu0 0.0
      %2307 = vmatpush1.msra.mxu0 %v1542
      %2308 = vmatprep.subr.mxu0 0.0
      %2309 = vmatpush1.msra.mxu0 %v1541
      %2310 = vmatprep.subr.mxu0 0.0
      %2311 = vmatpush2.msra.mxu0 0.0
      %2312 = vmatprep.subr.mxu0 0.0
      %2313 = vmatpush2.msra.mxu0 0.0
      %2314 = vmatprep.subr.mxu0 0.0
      %2315 = vmatpush2.msra.mxu0 0.0
      %2316 = vmatprep.subr.mxu0 0.0
      %2317 = vmatpush2.msra.mxu0 0.0
      %2318 = vmatprep.subr.mxu0 0.0
      %2319 = vmatpush2.msra.mxu0 0.0
      %2320 = vmatprep.subr.mxu0 0.0
      %2321 = vmatpush2.msra.mxu0 0.0
      %2322 = vmatprep.subr.mxu0 0.0
      %2323 = vmatpush2.msra.mxu0 0.0
      %2324 = vmatprep.subr.mxu0 0.0
      %2325 = vmatpush2.msra.mxu0 0.0
      %2326 = vmatprep.subr.mxu0 0.0
      %2327 = vmatpush2.msra.mxu0 0.0
      %2328 = vmatprep.subr.mxu0 0.0
      %2329 = vmatpush2.msra.mxu0 0.0
      %2330 = vmatprep.subr.mxu0 0.0
      %2331 = vmatpush2.msra.mxu0 0.0
      %2332 = vmatprep.subr.mxu0 0.0
      %2333 = vmatpush2.msra.mxu0 0.0
      %2334 = vmatprep.subr.mxu0 0.0
      %2335 = vmatpush2.msra.mxu0 0.0
      %2336 = vmatprep.subr.mxu0 0.0
      %2337 = vmatpush2.msra.mxu0 0.0
      %2338 = vmatprep.subr.mxu0 0.0
      %2339 = vmatpush2.msra.mxu0 0.0
      %2340 = vmatprep.subr.mxu0 0.0
      %2341 = vmatpush2.msra.mxu0 0.0
      %2342 = vmatprep.mubr.f32.mxu0 0.0
      %2343 = vmatmul.mubr.f32.gmra.mxu0 %v258
      %v2344 = vpop.f32.mrf.mxu0
      %v2345 = vadd.f32 %v1640, %v2344
      %v2346 = vpop.f32.mrf.mxu0
      %2347 = vmatprep.mubr.f32.mxu0 0.0
      %2348 = vmatmul.mubr.f32.gmra.mxu0 %v260
      %v2349 = vpop.f32.mrf.mxu0
      %v2350 = vadd.f32 %v1645, %v2349
      %v2351 = vpop.f32.mrf.mxu0
      %2352 = vmatprep.mubr.f32.mxu0 0.0
      %2353 = vmatmul.mubr.f32.gmra.mxu0 %v262
      %v2354 = vpop.f32.mrf.mxu0
      %v2355 = vadd.f32 %v1650, %v2354
      %v2356 = vpop.f32.mrf.mxu0
      %2357 = vmatprep.mubr.f32.mxu0 0.0
      %2358 = vmatmul.mubr.f32.gmra.mxu0 %v264
      %v2359 = vpop.f32.mrf.mxu0
      %v2360 = vadd.f32 %v1655, %v2359
      %v2361 = vpop.f32.mrf.mxu0
      %2362 = vmatprep.mubr.f32.mxu0 0.0
      %2363 = vmatmul.mubr.f32.gmra.mxu0 %v266
      %v2364 = vpop.f32.mrf.mxu0
      %v2365 = vadd.f32 %v1660, %v2364
      %v2366 = vpop.f32.mrf.mxu0
      %2367 = vmatprep.mubr.f32.mxu0 0.0
      %2368 = vmatmul.mubr.f32.gmra.mxu0 %v268
      %v2369 = vpop.f32.mrf.mxu0
      %v2370 = vadd.f32 %v1665, %v2369
      %v2371 = vpop.f32.mrf.mxu0
      %2372 = vmatprep.mubr.f32.mxu0 0.0
      %2373 = vmatmul.mubr.f32.gmra.mxu0 %v270
      %v2374 = vpop.f32.mrf.mxu0
      %v2375 = vadd.f32 %v1670, %v2374
      %v2376 = vpop.f32.mrf.mxu0
      %2377 = vmatprep.mubr.f32.mxu0 0.0
      %2378 = vmatmul.mubr.f32.gmra.mxu0 %v272
      %v2379 = vpop.f32.mrf.mxu0
      %v2380 = vadd.f32 %v1675, %v2379
      %v2381 = vpop.f32.mrf.mxu0
      %2382 = vmatprep.mubr.f32.mxu0 0.0
      %2383 = vmatmul.mubr.f32.gmra.mxu0 %v274
      %v2384 = vpop.f32.mrf.mxu0
      %v2385 = vadd.f32 %v1680, %v2384
      %v2386 = vpop.f32.mrf.mxu0
      %2387 = vmatprep.mubr.f32.mxu0 0.0
      %2388 = vmatmul.mubr.f32.gmra.mxu0 %v276
      %v2389 = vpop.f32.mrf.mxu0
      %v2390 = vadd.f32 %v1685, %v2389
      %v2391 = vpop.f32.mrf.mxu0
      %2392 = vmatprep.mubr.f32.mxu0 0.0
      %2393 = vmatmul.mubr.f32.gmra.mxu0 %v278
      %v2394 = vpop.f32.mrf.mxu0
      %v2395 = vadd.f32 %v1690, %v2394
      %v2396 = vpop.f32.mrf.mxu0
      %2397 = vmatprep.mubr.f32.mxu0 0.0
      %2398 = vmatmul.mubr.f32.gmra.mxu0 %v280
      %v2399 = vpop.f32.mrf.mxu0
      %v2400 = vadd.f32 %v1695, %v2399
      %v2401 = vpop.f32.mrf.mxu0
      %2402 = vmatprep.mubr.f32.mxu0 0.0
      %2403 = vmatmul.mubr.f32.gmra.mxu0 %v282
      %v2404 = vpop.f32.mrf.mxu0
      %v2405 = vadd.f32 %v1700, %v2404
      %v2406 = vpop.f32.mrf.mxu0
      %2407 = vmatprep.mubr.f32.mxu0 0.0
      %2408 = vmatmul.mubr.f32.gmra.mxu0 %v284
      %v2409 = vpop.f32.mrf.mxu0
      %v2410 = vadd.f32 %v1705, %v2409
      %v2411 = vpop.f32.mrf.mxu0
      %2412 = vmatprep.mubr.f32.mxu0 0.0
      %2413 = vmatmul.mubr.f32.gmra.mxu0 %v286
      %v2414 = vpop.f32.mrf.mxu0
      %v2415 = vadd.f32 %v1710, %v2414
      %v2416 = vpop.f32.mrf.mxu0
      %2417 = vmatprep.mubr.f32.mxu0 0.0
      %2418 = vmatmul.mubr.f32.gmra.mxu0 %v288
      %v2419 = vpop.f32.mrf.mxu0
      %v2420 = vadd.f32 %v1715, %v2419
      %v2421 = vpop.f32.mrf.mxu0
      %2422 = vmatprep.mubr.f32.mxu0 0.0
      %2423 = vmatmul.mubr.f32.gmra.mxu0 %v290
      %v2424 = vpop.f32.mrf.mxu0
      %v2425 = vadd.f32 %v1720, %v2424
      %v2426 = vpop.f32.mrf.mxu0
      %2427 = vmatprep.mubr.f32.mxu0 0.0
      %2428 = vmatmul.mubr.f32.gmra.mxu0 %v292
      %v2429 = vpop.f32.mrf.mxu0
      %v2430 = vadd.f32 %v1725, %v2429
      %v2431 = vpop.f32.mrf.mxu0
      %2432 = vmatprep.mubr.f32.mxu0 0.0
      %2433 = vmatmul.mubr.f32.gmra.mxu0 %v294
      %v2434 = vpop.f32.mrf.mxu0
      %v2435 = vadd.f32 %v1730, %v2434
      %v2436 = vpop.f32.mrf.mxu0
      %2437 = vmatprep.mubr.f32.mxu0 0.0
      %2438 = vmatmul.mubr.f32.gmra.mxu0 %v296
      %v2439 = vpop.f32.mrf.mxu0
      %v2440 = vadd.f32 %v1735, %v2439
      %v2441 = vpop.f32.mrf.mxu0
      %2442 = vmatprep.mubr.f32.mxu0 0.0
      %2443 = vmatmul.mubr.f32.gmra.mxu0 %v298
      %v2444 = vpop.f32.mrf.mxu0
      %v2445 = vadd.f32 %v1740, %v2444
      %v2446 = vpop.f32.mrf.mxu0
      %2447 = vmatprep.mubr.f32.mxu0 0.0
      %2448 = vmatmul.mubr.f32.gmra.mxu0 %v300
      %v2449 = vpop.f32.mrf.mxu0
      %v2450 = vadd.f32 %v1745, %v2449
      %v2451 = vpop.f32.mrf.mxu0
      %2452 = vmatprep.mubr.f32.mxu0 0.0
      %2453 = vmatmul.mubr.f32.gmra.mxu0 %v302
      %v2454 = vpop.f32.mrf.mxu0
      %v2455 = vadd.f32 %v1750, %v2454
      %v2456 = vpop.f32.mrf.mxu0
      %2457 = vmatprep.mubr.f32.mxu0 0.0
      %2458 = vmatmul.mubr.f32.gmra.mxu0 %v304
      %v2459 = vpop.f32.mrf.mxu0
      %v2460 = vadd.f32 %v1755, %v2459
      %v2461 = vpop.f32.mrf.mxu0
      %2462 = vmatprep.mubr.f32.mxu0 0.0
      %2463 = vmatmul.mubr.f32.gmra.mxu0 %v306
      %v2464 = vpop.f32.mrf.mxu0
      %v2465 = vadd.f32 %v1760, %v2464
      %v2466 = vpop.f32.mrf.mxu0
      %2467 = vmatprep.mubr.f32.mxu0 0.0
      %2468 = vmatmul.mubr.f32.gmra.mxu0 %v308
      %v2469 = vpop.f32.mrf.mxu0
      %v2470 = vadd.f32 %v1765, %v2469
      %v2471 = vpop.f32.mrf.mxu0
      %2472 = vmatprep.mubr.f32.mxu0 0.0
      %2473 = vmatmul.mubr.f32.gmra.mxu0 %v310
      %v2474 = vpop.f32.mrf.mxu0
      %v2475 = vadd.f32 %v1770, %v2474
      %v2476 = vpop.f32.mrf.mxu0
      %2477 = vmatprep.mubr.f32.mxu0 0.0
      %2478 = vmatmul.mubr.f32.gmra.mxu0 %v312
      %v2479 = vpop.f32.mrf.mxu0
      %v2480 = vadd.f32 %v1775, %v2479
      %v2481 = vpop.f32.mrf.mxu0
      %2482 = vmatprep.mubr.f32.mxu0 0.0
      %2483 = vmatmul.mubr.f32.gmra.mxu0 %v314
      %v2484 = vpop.f32.mrf.mxu0
      %v2485 = vadd.f32 %v1780, %v2484
      %v2486 = vpop.f32.mrf.mxu0
      %2487 = vmatprep.mubr.f32.mxu0 0.0
      %2488 = vmatmul.mubr.f32.gmra.mxu0 %v316
      %v2489 = vpop.f32.mrf.mxu0
      %v2490 = vadd.f32 %v1785, %v2489
      %v2491 = vpop.f32.mrf.mxu0
      %2492 = vmatprep.mubr.f32.mxu0 0.0
      %2493 = vmatmul.mubr.f32.gmra.mxu0 %v318
      %v2494 = vpop.f32.mrf.mxu0
      %v2495 = vadd.f32 %v1790, %v2494
      %v2496 = vpop.f32.mrf.mxu0
      %2497 = vmatprep.mubr.f32.mxu0 0.0
      %2498 = vmatmul.mubr.f32.gmra.mxu0 %v320
      %v2499 = vpop.f32.mrf.mxu0
      %v2500 = vadd.f32 %v1795, %v2499
      %v2501 = vpop.f32.mrf.mxu0
      %2502 = vmatprep.mubr.f32.mxu0 0.0
      %2503 = vmatmul.mubr.f32.gmra.mxu0 %v322
      %v2504 = vpop.f32.mrf.mxu0
      %v2505 = vadd.f32 %v1800, %v2504
      %v2506 = vpop.f32.mrf.mxu0
      %2507 = vmatprep.mubr.f32.mxu0 0.0
      %2508 = vmatmul.mubr.f32.gmra.mxu0 %v324
      %v2509 = vpop.f32.mrf.mxu0
      %v2510 = vadd.f32 %v1805, %v2509
      %v2511 = vpop.f32.mrf.mxu0
      %2512 = vmatprep.mubr.f32.mxu0 0.0
      %2513 = vmatmul.mubr.f32.gmra.mxu0 %v326
      %v2514 = vpop.f32.mrf.mxu0
      %v2515 = vadd.f32 %v1810, %v2514
      %v2516 = vpop.f32.mrf.mxu0
      %2517 = vmatprep.mubr.f32.mxu0 0.0
      %2518 = vmatmul.mubr.f32.gmra.mxu0 %v328
      %v2519 = vpop.f32.mrf.mxu0
      %v2520 = vadd.f32 %v1815, %v2519
      %v2521 = vpop.f32.mrf.mxu0
      %2522 = vmatprep.mubr.f32.mxu0 0.0
      %2523 = vmatmul.mubr.f32.gmra.mxu0 %v330
      %v2524 = vpop.f32.mrf.mxu0
      %v2525 = vadd.f32 %v1820, %v2524
      %v2526 = vpop.f32.mrf.mxu0
      %2527 = vmatprep.mubr.f32.mxu0 0.0
      %2528 = vmatmul.mubr.f32.gmra.mxu0 %v332
      %v2529 = vpop.f32.mrf.mxu0
      %v2530 = vadd.f32 %v1825, %v2529
      %v2531 = vpop.f32.mrf.mxu0
      %2532 = vmatprep.mubr.f32.mxu0 0.0
      %2533 = vmatmul.mubr.f32.gmra.mxu0 %v334
      %v2534 = vpop.f32.mrf.mxu0
      %v2535 = vadd.f32 %v1830, %v2534
      %v2536 = vpop.f32.mrf.mxu0
      %2537 = vmatprep.mubr.f32.mxu0 0.0
      %2538 = vmatmul.mubr.f32.gmra.mxu0 %v336
      %v2539 = vpop.f32.mrf.mxu0
      %v2540 = vadd.f32 %v1835, %v2539
      %v2541 = vpop.f32.mrf.mxu0
      %2542 = vmatprep.mubr.f32.mxu0 0.0
      %2543 = vmatmul.mubr.f32.gmra.mxu0 %v338
      %v2544 = vpop.f32.mrf.mxu0
      %v2545 = vadd.f32 %v1840, %v2544
      %v2546 = vpop.f32.mrf.mxu0
      %2547 = vmatprep.mubr.f32.mxu0 0.0
      %2548 = vmatmul.mubr.f32.gmra.mxu0 %v340
      %v2549 = vpop.f32.mrf.mxu0
      %v2550 = vadd.f32 %v1845, %v2549
      %v2551 = vpop.f32.mrf.mxu0
      %2552 = vmatprep.mubr.f32.mxu0 0.0
      %2553 = vmatmul.mubr.f32.gmra.mxu0 %v342
      %v2554 = vpop.f32.mrf.mxu0
      %v2555 = vadd.f32 %v1850, %v2554
      %v2556 = vpop.f32.mrf.mxu0
      %2557 = vmatprep.mubr.f32.mxu0 0.0
      %2558 = vmatmul.mubr.f32.gmra.mxu0 %v344
      %v2559 = vpop.f32.mrf.mxu0
      %v2560 = vadd.f32 %v1855, %v2559
      %v2561 = vpop.f32.mrf.mxu0
      %2562 = vmatprep.mubr.f32.mxu0 0.0
      %2563 = vmatmul.mubr.f32.gmra.mxu0 %v346
      %v2564 = vpop.f32.mrf.mxu0
      %v2565 = vadd.f32 %v1860, %v2564
      %v2566 = vpop.f32.mrf.mxu0
      %2567 = vmatprep.mubr.f32.mxu0 0.0
      %2568 = vmatmul.mubr.f32.gmra.mxu0 %v348
      %v2569 = vpop.f32.mrf.mxu0
      %v2570 = vadd.f32 %v1865, %v2569
      %v2571 = vpop.f32.mrf.mxu0
      %2572 = vmatprep.mubr.f32.mxu0 0.0
      %2573 = vmatmul.mubr.f32.gmra.mxu0 %v350
      %v2574 = vpop.f32.mrf.mxu0
      %v2575 = vadd.f32 %v1870, %v2574
      %v2576 = vpop.f32.mrf.mxu0
      %2577 = vmatprep.mubr.f32.mxu0 0.0
      %2578 = vmatmul.mubr.f32.gmra.mxu0 %v352
      %v2579 = vpop.f32.mrf.mxu0
      %v2580 = vadd.f32 %v1875, %v2579
      %v2581 = vpop.f32.mrf.mxu0
      %2582 = vmatprep.mubr.f32.mxu0 0.0
      %2583 = vmatmul.mubr.f32.gmra.mxu0 %v354
      %v2584 = vpop.f32.mrf.mxu0
      %v2585 = vadd.f32 %v1880, %v2584
      %v2586 = vpop.f32.mrf.mxu0
      %2587 = vmatprep.mubr.f32.mxu0 0.0
      %2588 = vmatmul.mubr.f32.gmra.mxu0 %v356
      %v2589 = vpop.f32.mrf.mxu0
      %v2590 = vadd.f32 %v1885, %v2589
      %v2591 = vpop.f32.mrf.mxu0
      %2592 = vmatprep.mubr.f32.mxu0 0.0
      %2593 = vmatmul.mubr.f32.gmra.mxu0 %v358
      %v2594 = vpop.f32.mrf.mxu0
      %v2595 = vadd.f32 %v1890, %v2594
      %v2596 = vpop.f32.mrf.mxu0
      %2597 = vmatprep.mubr.f32.mxu0 0.0
      %2598 = vmatmul.mubr.f32.gmra.mxu0 %v360
      %v2599 = vpop.f32.mrf.mxu0
      %v2600 = vadd.f32 %v1895, %v2599
      %v2601 = vpop.f32.mrf.mxu0
      %2602 = vmatprep.mubr.f32.mxu0 0.0
      %2603 = vmatmul.mubr.f32.gmra.mxu0 %v362
      %v2604 = vpop.f32.mrf.mxu0
      %v2605 = vadd.f32 %v1900, %v2604
      %v2606 = vpop.f32.mrf.mxu0
      %2607 = vmatprep.mubr.f32.mxu0 0.0
      %2608 = vmatmul.mubr.f32.gmra.mxu0 %v364
      %v2609 = vpop.f32.mrf.mxu0
      %v2610 = vadd.f32 %v1905, %v2609
      %v2611 = vpop.f32.mrf.mxu0
      %2612 = vmatprep.mubr.f32.mxu0 0.0
      %2613 = vmatmul.mubr.f32.gmra.mxu0 %v366
      %v2614 = vpop.f32.mrf.mxu0
      %v2615 = vadd.f32 %v1910, %v2614
      %v2616 = vpop.f32.mrf.mxu0
      %2617 = vmatprep.mubr.f32.mxu0 0.0
      %2618 = vmatmul.mubr.f32.gmra.mxu0 %v368
      %v2619 = vpop.f32.mrf.mxu0
      %v2620 = vadd.f32 %v1915, %v2619
      %v2621 = vpop.f32.mrf.mxu0
      %2622 = vmatprep.mubr.f32.mxu0 0.0
      %2623 = vmatmul.mubr.f32.gmra.mxu0 %v370
      %v2624 = vpop.f32.mrf.mxu0
      %v2625 = vadd.f32 %v1920, %v2624
      %v2626 = vpop.f32.mrf.mxu0
      %2627 = vmatprep.mubr.f32.mxu0 0.0
      %2628 = vmatmul.mubr.f32.gmra.mxu0 %v372
      %v2629 = vpop.f32.mrf.mxu0
      %v2630 = vadd.f32 %v1925, %v2629
      %v2631 = vpop.f32.mrf.mxu0
      %2632 = vmatprep.mubr.f32.mxu0 0.0
      %2633 = vmatmul.mubr.f32.gmra.mxu0 %v374
      %v2634 = vpop.f32.mrf.mxu0
      %v2635 = vadd.f32 %v1930, %v2634
      %v2636 = vpop.f32.mrf.mxu0
      %2637 = vmatprep.mubr.f32.mxu0 0.0
      %2638 = vmatmul.mubr.f32.gmra.mxu0 %v376
      %v2639 = vpop.f32.mrf.mxu0
      %v2640 = vadd.f32 %v1935, %v2639
      %v2641 = vpop.f32.mrf.mxu0
      %2642 = vmatprep.mubr.f32.mxu0 0.0
      %2643 = vmatmul.mubr.f32.gmra.mxu0 %v378
      %v2644 = vpop.f32.mrf.mxu0
      %v2645 = vadd.f32 %v1940, %v2644
      %v2646 = vpop.f32.mrf.mxu0
      %2647 = vmatprep.mubr.f32.mxu0 0.0
      %2648 = vmatmul.mubr.f32.gmra.mxu0 %v380
      %v2649 = vpop.f32.mrf.mxu0
      %v2650 = vadd.f32 %v1945, %v2649
      %v2651 = vpop.f32.mrf.mxu0
      %2652 = vmatprep.mubr.f32.mxu0 0.0
      %2653 = vmatmul.mubr.f32.gmra.mxu0 %v382
      %v2654 = vpop.f32.mrf.mxu0
      %v2655 = vadd.f32 %v1950, %v2654
      %v2656 = vpop.f32.mrf.mxu0
      %2657 = vmatprep.mubr.f32.mxu0 0.0
      %2658 = vmatmul.mubr.f32.gmra.mxu0 %v384
      %v2659 = vpop.f32.mrf.mxu0
      %v2660 = vadd.f32 %v1955, %v2659
      %v2661 = vpop.f32.mrf.mxu0
      %2662 = vmatprep.mubr.f32.mxu0 0.0
      %2663 = vmatmul.mubr.f32.gmra.mxu0 %v386
      %v2664 = vpop.f32.mrf.mxu0
      %v2665 = vadd.f32 %v1960, %v2664
      %v2666 = vpop.f32.mrf.mxu0
      %2667 = vmatprep.mubr.f32.mxu0 0.0
      %2668 = vmatmul.mubr.f32.gmra.mxu0 %v388
      %v2669 = vpop.f32.mrf.mxu0
      %v2670 = vadd.f32 %v1965, %v2669
      %v2671 = vpop.f32.mrf.mxu0
      %2672 = vmatprep.mubr.f32.mxu0 0.0
      %2673 = vmatmul.mubr.f32.gmra.mxu0 %v390
      %v2674 = vpop.f32.mrf.mxu0
      %v2675 = vadd.f32 %v1970, %v2674
      %v2676 = vpop.f32.mrf.mxu0
      %2677 = vmatprep.mubr.f32.mxu0 0.0
      %2678 = vmatmul.mubr.f32.gmra.mxu0 %v392
      %v2679 = vpop.f32.mrf.mxu0
      %v2680 = vadd.f32 %v1975, %v2679
      %v2681 = vpop.f32.mrf.mxu0
      %2682 = vmatprep.mubr.f32.mxu0 0.0
      %2683 = vmatmul.mubr.f32.gmra.mxu0 %v394
      %v2684 = vpop.f32.mrf.mxu0
      %v2685 = vadd.f32 %v1980, %v2684
      %v2686 = vpop.f32.mrf.mxu0
      %2687 = vmatprep.mubr.f32.mxu0 0.0
      %2688 = vmatmul.mubr.f32.gmra.mxu0 %v396
      %v2689 = vpop.f32.mrf.mxu0
      %v2690 = vadd.f32 %v1985, %v2689
      %v2691 = vpop.f32.mrf.mxu0
      %2692 = vmatprep.mubr.f32.mxu0 0.0
      %2693 = vmatmul.mubr.f32.gmra.mxu0 %v398
      %v2694 = vpop.f32.mrf.mxu0
      %v2695 = vadd.f32 %v1990, %v2694
      %v2696 = vpop.f32.mrf.mxu0
      %2697 = vmatprep.mubr.f32.mxu0 0.0
      %2698 = vmatmul.mubr.f32.gmra.mxu0 %v400
      %v2699 = vpop.f32.mrf.mxu0
      %v2700 = vadd.f32 %v1995, %v2699
      %v2701 = vpop.f32.mrf.mxu0
      %2702 = vmatprep.mubr.f32.mxu0 0.0
      %2703 = vmatmul.mubr.f32.gmra.mxu0 %v402
      %v2704 = vpop.f32.mrf.mxu0
      %v2705 = vadd.f32 %v2000, %v2704
      %v2706 = vpop.f32.mrf.mxu0
      %2707 = vmatprep.mubr.f32.mxu0 0.0
      %2708 = vmatmul.mubr.f32.gmra.mxu0 %v404
      %v2709 = vpop.f32.mrf.mxu0
      %v2710 = vadd.f32 %v2005, %v2709
      %v2711 = vpop.f32.mrf.mxu0
      %2712 = vmatprep.mubr.f32.mxu0 0.0
      %2713 = vmatmul.mubr.f32.gmra.mxu0 %v406
      %v2714 = vpop.f32.mrf.mxu0
      %v2715 = vadd.f32 %v2010, %v2714
      %v2716 = vpop.f32.mrf.mxu0
      %2717 = vmatprep.mubr.f32.mxu0 0.0
      %2718 = vmatmul.mubr.f32.gmra.mxu0 %v408
      %v2719 = vpop.f32.mrf.mxu0
      %v2720 = vadd.f32 %v2015, %v2719
      %v2721 = vpop.f32.mrf.mxu0
      %2722 = vmatprep.mubr.f32.mxu0 0.0
      %2723 = vmatmul.mubr.f32.gmra.mxu0 %v410
      %v2724 = vpop.f32.mrf.mxu0
      %v2725 = vadd.f32 %v2020, %v2724
      %v2726 = vpop.f32.mrf.mxu0
      %2727 = vmatprep.mubr.f32.mxu0 0.0
      %2728 = vmatmul.mubr.f32.gmra.mxu0 %v412
      %v2729 = vpop.f32.mrf.mxu0
      %v2730 = vadd.f32 %v2025, %v2729
      %v2731 = vpop.f32.mrf.mxu0
      %2732 = vmatprep.mubr.f32.mxu0 0.0
      %2733 = vmatmul.mubr.f32.gmra.mxu0 %v414
      %v2734 = vpop.f32.mrf.mxu0
      %v2735 = vadd.f32 %v2030, %v2734
      %v2736 = vpop.f32.mrf.mxu0
      %2737 = vmatprep.mubr.f32.mxu0 0.0
      %2738 = vmatmul.mubr.f32.gmra.mxu0 %v416
      %v2739 = vpop.f32.mrf.mxu0
      %v2740 = vadd.f32 %v2035, %v2739
      %v2741 = vpop.f32.mrf.mxu0
      %2742 = vmatprep.mubr.f32.mxu0 0.0
      %2743 = vmatmul.mubr.f32.gmra.mxu0 %v418
      %v2744 = vpop.f32.mrf.mxu0
      %v2745 = vadd.f32 %v2040, %v2744
      %v2746 = vpop.f32.mrf.mxu0
      %2747 = vmatprep.mubr.f32.mxu0 0.0
      %2748 = vmatmul.mubr.f32.gmra.mxu0 %v420
      %v2749 = vpop.f32.mrf.mxu0
      %v2750 = vadd.f32 %v2045, %v2749
      %v2751 = vpop.f32.mrf.mxu0
      %2752 = vmatprep.mubr.f32.mxu0 0.0
      %2753 = vmatmul.mubr.f32.gmra.mxu0 %v422
      %v2754 = vpop.f32.mrf.mxu0
      %v2755 = vadd.f32 %v2050, %v2754
      %v2756 = vpop.f32.mrf.mxu0
      %2757 = vmatprep.mubr.f32.mxu0 0.0
      %2758 = vmatmul.mubr.f32.gmra.mxu0 %v424
      %v2759 = vpop.f32.mrf.mxu0
      %v2760 = vadd.f32 %v2055, %v2759
      %v2761 = vpop.f32.mrf.mxu0
      %2762 = vmatprep.mubr.f32.mxu0 0.0
      %2763 = vmatmul.mubr.f32.gmra.mxu0 %v426
      %v2764 = vpop.f32.mrf.mxu0
      %v2765 = vadd.f32 %v2060, %v2764
      %v2766 = vpop.f32.mrf.mxu0
      %2767 = vmatprep.mubr.f32.mxu0 0.0
      %2768 = vmatmul.mubr.f32.gmra.mxu0 %v428
      %v2769 = vpop.f32.mrf.mxu0
      %v2770 = vadd.f32 %v2065, %v2769
      %v2771 = vpop.f32.mrf.mxu0
      %2772 = vmatprep.mubr.f32.mxu0 0.0
      %2773 = vmatmul.mubr.f32.gmra.mxu0 %v430
      %v2774 = vpop.f32.mrf.mxu0
      %v2775 = vadd.f32 %v2070, %v2774
      %v2776 = vpop.f32.mrf.mxu0
      %2777 = vmatprep.mubr.f32.mxu0 0.0
      %2778 = vmatmul.mubr.f32.gmra.mxu0 %v432
      %v2779 = vpop.f32.mrf.mxu0
      %v2780 = vadd.f32 %v2075, %v2779
      %v2781 = vpop.f32.mrf.mxu0
      %2782 = vmatprep.mubr.f32.mxu0 0.0
      %2783 = vmatmul.mubr.f32.gmra.mxu0 %v434
      %v2784 = vpop.f32.mrf.mxu0
      %v2785 = vadd.f32 %v2080, %v2784
      %v2786 = vpop.f32.mrf.mxu0
      %2787 = vmatprep.mubr.f32.mxu0 0.0
      %2788 = vmatmul.mubr.f32.gmra.mxu0 %v436
      %v2789 = vpop.f32.mrf.mxu0
      %v2790 = vadd.f32 %v2085, %v2789
      %v2791 = vpop.f32.mrf.mxu0
      %2792 = vmatprep.mubr.f32.mxu0 0.0
      %2793 = vmatmul.mubr.f32.gmra.mxu0 %v438
      %v2794 = vpop.f32.mrf.mxu0
      %v2795 = vadd.f32 %v2090, %v2794
      %v2796 = vpop.f32.mrf.mxu0
      %2797 = vmatprep.mubr.f32.mxu0 0.0
      %2798 = vmatmul.mubr.f32.gmra.mxu0 %v440
      %v2799 = vpop.f32.mrf.mxu0
      %v2800 = vadd.f32 %v2095, %v2799
      %v2801 = vpop.f32.mrf.mxu0
      %2802 = vmatprep.mubr.f32.mxu0 0.0
      %2803 = vmatmul.mubr.f32.gmra.mxu0 %v442
      %v2804 = vpop.f32.mrf.mxu0
      %v2805 = vadd.f32 %v2100, %v2804
      %v2806 = vpop.f32.mrf.mxu0
      %2807 = vmatprep.mubr.f32.mxu0 0.0
      %2808 = vmatmul.mubr.f32.gmra.mxu0 %v444
      %v2809 = vpop.f32.mrf.mxu0
      %v2810 = vadd.f32 %v2105, %v2809
      %v2811 = vpop.f32.mrf.mxu0
      %2812 = vmatprep.mubr.f32.mxu0 0.0
      %2813 = vmatmul.mubr.f32.gmra.mxu0 %v446
      %v2814 = vpop.f32.mrf.mxu0
      %v2815 = vadd.f32 %v2110, %v2814
      %v2816 = vpop.f32.mrf.mxu0
      %2817 = vmatprep.mubr.f32.mxu0 0.0
      %2818 = vmatmul.mubr.f32.gmra.mxu0 %v448
      %v2819 = vpop.f32.mrf.mxu0
      %v2820 = vadd.f32 %v2115, %v2819
      %v2821 = vpop.f32.mrf.mxu0
      %2822 = vmatprep.mubr.f32.mxu0 0.0
      %2823 = vmatmul.mubr.f32.gmra.mxu0 %v450
      %v2824 = vpop.f32.mrf.mxu0
      %v2825 = vadd.f32 %v2120, %v2824
      %v2826 = vpop.f32.mrf.mxu0
      %2827 = vmatprep.mubr.f32.mxu0 0.0
      %2828 = vmatmul.mubr.f32.gmra.mxu0 %v452
      %v2829 = vpop.f32.mrf.mxu0
      %v2830 = vadd.f32 %v2125, %v2829
      %v2831 = vpop.f32.mrf.mxu0
      %2832 = vmatprep.mubr.f32.mxu0 0.0
      %2833 = vmatmul.mubr.f32.gmra.mxu0 %v454
      %v2834 = vpop.f32.mrf.mxu0
      %v2835 = vadd.f32 %v2130, %v2834
      %v2836 = vpop.f32.mrf.mxu0
      %2837 = vmatprep.mubr.f32.mxu0 0.0
      %2838 = vmatmul.mubr.f32.gmra.mxu0 %v456
      %v2839 = vpop.f32.mrf.mxu0
      %v2840 = vadd.f32 %v2135, %v2839
      %v2841 = vpop.f32.mrf.mxu0
      %2842 = vmatprep.mubr.f32.mxu0 0.0
      %2843 = vmatmul.mubr.f32.gmra.mxu0 %v458
      %v2844 = vpop.f32.mrf.mxu0
      %v2845 = vadd.f32 %v2140, %v2844
      %v2846 = vpop.f32.mrf.mxu0
      %2847 = vmatprep.mubr.f32.mxu0 0.0
      %2848 = vmatmul.mubr.f32.gmra.mxu0 %v460
      %v2849 = vpop.f32.mrf.mxu0
      %v2850 = vadd.f32 %v2145, %v2849
      %v2851 = vpop.f32.mrf.mxu0
      %2852 = vmatprep.mubr.f32.mxu0 0.0
      %2853 = vmatmul.mubr.f32.gmra.mxu0 %v462
      %v2854 = vpop.f32.mrf.mxu0
      %v2855 = vadd.f32 %v2150, %v2854
      %v2856 = vpop.f32.mrf.mxu0
      %2857 = vmatprep.mubr.f32.mxu0 0.0
      %2858 = vmatmul.mubr.f32.gmra.mxu0 %v464
      %v2859 = vpop.f32.mrf.mxu0
      %v2860 = vadd.f32 %v2155, %v2859
      %v2861 = vpop.f32.mrf.mxu0
      %2862 = vmatprep.mubr.f32.mxu0 0.0
      %2863 = vmatmul.mubr.f32.gmra.mxu0 %v466
      %v2864 = vpop.f32.mrf.mxu0
      %v2865 = vadd.f32 %v2160, %v2864
      %v2866 = vpop.f32.mrf.mxu0
      %2867 = vmatprep.mubr.f32.mxu0 0.0
      %2868 = vmatmul.mubr.f32.gmra.mxu0 %v468
      %v2869 = vpop.f32.mrf.mxu0
      %v2870 = vadd.f32 %v2165, %v2869
      %v2871 = vpop.f32.mrf.mxu0
      %2872 = vmatprep.mubr.f32.mxu0 0.0
      %2873 = vmatmul.mubr.f32.gmra.mxu0 %v470
      %v2874 = vpop.f32.mrf.mxu0
      %v2875 = vadd.f32 %v2170, %v2874
      %v2876 = vpop.f32.mrf.mxu0
      %2877 = vmatprep.mubr.f32.mxu0 0.0
      %2878 = vmatmul.mubr.f32.gmra.mxu0 %v472
      %v2879 = vpop.f32.mrf.mxu0
      %v2880 = vadd.f32 %v2175, %v2879
      %v2881 = vpop.f32.mrf.mxu0
      %2882 = vmatprep.mubr.f32.mxu0 0.0
      %2883 = vmatmul.mubr.f32.gmra.mxu0 %v474
      %v2884 = vpop.f32.mrf.mxu0
      %v2885 = vadd.f32 %v2180, %v2884
      %v2886 = vpop.f32.mrf.mxu0
      %2887 = vmatprep.mubr.f32.mxu0 0.0
      %2888 = vmatmul.mubr.f32.gmra.mxu0 %v476
      %v2889 = vpop.f32.mrf.mxu0
      %v2890 = vadd.f32 %v2185, %v2889
      %v2891 = vpop.f32.mrf.mxu0
      %2892 = vmatprep.mubr.f32.mxu0 0.0
      %2893 = vmatmul.mubr.f32.gmra.mxu0 %v478
      %v2894 = vpop.f32.mrf.mxu0
      %v2895 = vadd.f32 %v2190, %v2894
      %v2896 = vpop.f32.mrf.mxu0
      %2897 = vmatprep.mubr.f32.mxu0 0.0
      %2898 = vmatmul.mubr.f32.gmra.mxu0 %v480
      %v2899 = vpop.f32.mrf.mxu0
      %v2900 = vadd.f32 %v2195, %v2899
      %v2901 = vpop.f32.mrf.mxu0
      %2902 = vmatprep.mubr.f32.mxu0 0.0
      %2903 = vmatmul.mubr.f32.gmra.mxu0 %v482
      %v2904 = vpop.f32.mrf.mxu0
      %v2905 = vadd.f32 %v2200, %v2904
      %v2906 = vpop.f32.mrf.mxu0
      %2907 = vmatprep.mubr.f32.mxu0 0.0
      %2908 = vmatmul.mubr.f32.gmra.mxu0 %v484
      %v2909 = vpop.f32.mrf.mxu0
      %v2910 = vadd.f32 %v2205, %v2909
      %v2911 = vpop.f32.mrf.mxu0
      %2912 = vmatprep.mubr.f32.mxu0 0.0
      %2913 = vmatmul.mubr.f32.gmra.mxu0 %v486
      %v2914 = vpop.f32.mrf.mxu0
      %v2915 = vadd.f32 %v2210, %v2914
      %v2916 = vpop.f32.mrf.mxu0
      %2917 = vmatprep.mubr.f32.mxu0 0.0
      %2918 = vmatmul.mubr.f32.gmra.mxu0 %v488
      %v2919 = vpop.f32.mrf.mxu0
      %v2920 = vadd.f32 %v2215, %v2919
      %v2921 = vpop.f32.mrf.mxu0
      %2922 = vmatprep.mubr.f32.mxu0 0.0
      %2923 = vmatmul.mubr.f32.gmra.mxu0 %v490
      %v2924 = vpop.f32.mrf.mxu0
      %v2925 = vadd.f32 %v2220, %v2924
      %v2926 = vpop.f32.mrf.mxu0
      %2927 = vmatprep.mubr.f32.mxu0 0.0
      %2928 = vmatmul.mubr.f32.gmra.mxu0 %v492
      %v2929 = vpop.f32.mrf.mxu0
      %v2930 = vadd.f32 %v2225, %v2929
      %v2931 = vpop.f32.mrf.mxu0
      %2932 = vmatprep.mubr.f32.mxu0 0.0
      %2933 = vmatmul.mubr.f32.gmra.mxu0 %v494
      %v2934 = vpop.f32.mrf.mxu0
      %v2935 = vadd.f32 %v2230, %v2934
      %v2936 = vpop.f32.mrf.mxu0
      %2937 = vmatprep.mubr.f32.mxu0 0.0
      %2938 = vmatmul.mubr.f32.gmra.mxu0 %v496
      %v2939 = vpop.f32.mrf.mxu0
      %v2940 = vadd.f32 %v2235, %v2939
      %v2941 = vpop.f32.mrf.mxu0
      %2942 = vmatprep.mubr.f32.mxu0 0.0
      %2943 = vmatmul.mubr.f32.gmra.mxu0 %v498
      %v2944 = vpop.f32.mrf.mxu0
      %v2945 = vadd.f32 %v2240, %v2944
      %v2946 = vpop.f32.mrf.mxu0
      %2947 = vmatprep.mubr.f32.mxu0 0.0
      %2948 = vmatmul.mubr.f32.gmra.mxu0 %v500
      %v2949 = vpop.f32.mrf.mxu0
      %v2950 = vadd.f32 %v2245, %v2949
      %v2951 = vpop.f32.mrf.mxu0
      %2952 = vmatprep.mubr.f32.mxu0 0.0
      %2953 = vmatmul.mubr.f32.gmra.mxu0 %v502
      %v2954 = vpop.f32.mrf.mxu0
      %v2955 = vadd.f32 %v2250, %v2954
      %v2956 = vpop.f32.mrf.mxu0
      %2957 = vmatprep.mubr.f32.mxu0 0.0
      %2958 = vmatmul.mubr.f32.gmra.mxu0 %v504
      %v2959 = vpop.f32.mrf.mxu0
      %v2960 = vadd.f32 %v2255, %v2959
      %v2961 = vpop.f32.mrf.mxu0
      %2962 = vmatprep.mubr.f32.mxu0 0.0
      %2963 = vmatmul.mubr.f32.gmra.mxu0 %v506
      %v2964 = vpop.f32.mrf.mxu0
      %v2965 = vadd.f32 %v2260, %v2964
      %v2966 = vpop.f32.mrf.mxu0
      %2967 = vmatprep.mubr.f32.mxu0 0.0
      %2968 = vmatmul.mubr.f32.gmra.mxu0 %v508
      %v2969 = vpop.f32.mrf.mxu0
      %v2970 = vadd.f32 %v2265, %v2969
      %v2971 = vpop.f32.mrf.mxu0
      %2972 = vmatprep.mubr.f32.mxu0 0.0
      %2973 = vmatmul.mubr.f32.gmra.mxu0 %v510
      %v2974 = vpop.f32.mrf.mxu0
      %v2975 = vadd.f32 %v2270, %v2974
      %v2976 = vpop.f32.mrf.mxu0
      %2977 = vmatprep.mubr.f32.mxu0 0.0
      %2978 = vmatmul.mubr.f32.gmra.mxu0 %v512
      %v2979 = vpop.f32.mrf.mxu0
      %v2980 = vadd.f32 %v2275, %v2979
      %v2981 = vpop.f32.mrf.mxu0
      %2982 = vdwg.mxu0
      %v2983 = vld [vmem:[%s3] sm:$0x1]
      %v2985 = vlaneseq
      %v2986 = vshrl.u32 %v2985, 7
      %v2987 = vsub.s32 0, %v2986
      %v2988 = vrot.slane %v2983, %v2987
      %v2990 = vadd.f32 %v2345, %v2988
      %v2991 = vadd.f32 %v2350, %v2988
      %v2992 = vadd.f32 %v2355, %v2988
      %v2993 = vadd.f32 %v2360, %v2988
      %v2994 = vadd.f32 %v2365, %v2988
      %v2995 = vadd.f32 %v2370, %v2988
      %v2996 = vadd.f32 %v2375, %v2988
      %v2997 = vadd.f32 %v2380, %v2988
      %v2998 = vadd.f32 %v2385, %v2988
      %v2999 = vadd.f32 %v2390, %v2988
      %v3000 = vadd.f32 %v2395, %v2988
      %v3001 = vadd.f32 %v2400, %v2988
      %v3002 = vadd.f32 %v2405, %v2988
      %v3003 = vadd.f32 %v2410, %v2988
      %v3004 = vadd.f32 %v2415, %v2988
      %v3005 = vadd.f32 %v2420, %v2988
      %v3006 = vadd.f32 %v2425, %v2988
      %v3007 = vadd.f32 %v2430, %v2988
      %v3008 = vadd.f32 %v2435, %v2988
      %v3009 = vadd.f32 %v2440, %v2988
      %v3010 = vadd.f32 %v2445, %v2988
      %v3011 = vadd.f32 %v2450, %v2988
      %v3012 = vadd.f32 %v2455, %v2988
      %v3013 = vadd.f32 %v2460, %v2988
      %v3014 = vadd.f32 %v2465, %v2988
      %v3015 = vadd.f32 %v2470, %v2988
      %v3016 = vadd.f32 %v2475, %v2988
      %v3017 = vadd.f32 %v2480, %v2988
      %v3018 = vadd.f32 %v2485, %v2988
      %v3019 = vadd.f32 %v2490, %v2988
      %v3020 = vadd.f32 %v2495, %v2988
      %v3021 = vadd.f32 %v2500, %v2988
      %v3022 = vadd.f32 %v2505, %v2988
      %v3023 = vadd.f32 %v2510, %v2988
      %v3024 = vadd.f32 %v2515, %v2988
      %v3025 = vadd.f32 %v2520, %v2988
      %v3026 = vadd.f32 %v2525, %v2988
      %v3027 = vadd.f32 %v2530, %v2988
      %v3028 = vadd.f32 %v2535, %v2988
      %v3029 = vadd.f32 %v2540, %v2988
      %v3030 = vadd.f32 %v2545, %v2988
      %v3031 = vadd.f32 %v2550, %v2988
      %v3032 = vadd.f32 %v2555, %v2988
      %v3033 = vadd.f32 %v2560, %v2988
      %v3034 = vadd.f32 %v2565, %v2988
      %v3035 = vadd.f32 %v2570, %v2988
      %v3036 = vadd.f32 %v2575, %v2988
      %v3037 = vadd.f32 %v2580, %v2988
      %v3038 = vadd.f32 %v2585, %v2988
      %v3039 = vadd.f32 %v2590, %v2988
      %v3040 = vadd.f32 %v2595, %v2988
      %v3041 = vadd.f32 %v2600, %v2988
      %v3042 = vadd.f32 %v2605, %v2988
      %v3043 = vadd.f32 %v2610, %v2988
      %v3044 = vadd.f32 %v2615, %v2988
      %v3045 = vadd.f32 %v2620, %v2988
      %v3046 = vadd.f32 %v2625, %v2988
      %v3047 = vadd.f32 %v2630, %v2988
      %v3048 = vadd.f32 %v2635, %v2988
      %v3049 = vadd.f32 %v2640, %v2988
      %v3050 = vadd.f32 %v2645, %v2988
      %v3051 = vadd.f32 %v2650, %v2988
      %v3052 = vadd.f32 %v2655, %v2988
      %v3053 = vadd.f32 %v2660, %v2988
      %v3054 = vadd.f32 %v2665, %v2988
      %v3055 = vadd.f32 %v2670, %v2988
      %v3056 = vadd.f32 %v2675, %v2988
      %v3057 = vadd.f32 %v2680, %v2988
      %v3058 = vadd.f32 %v2685, %v2988
      %v3059 = vadd.f32 %v2690, %v2988
      %v3060 = vadd.f32 %v2695, %v2988
      %v3061 = vadd.f32 %v2700, %v2988
      %v3062 = vadd.f32 %v2705, %v2988
      %v3063 = vadd.f32 %v2710, %v2988
      %v3064 = vadd.f32 %v2715, %v2988
      %v3065 = vadd.f32 %v2720, %v2988
      %v3066 = vadd.f32 %v2725, %v2988
      %v3067 = vadd.f32 %v2730, %v2988
      %v3068 = vadd.f32 %v2735, %v2988
      %v3069 = vadd.f32 %v2740, %v2988
      %v3070 = vadd.f32 %v2745, %v2988
      %v3071 = vadd.f32 %v2750, %v2988
      %v3072 = vadd.f32 %v2755, %v2988
      %v3073 = vadd.f32 %v2760, %v2988
      %v3074 = vadd.f32 %v2765, %v2988
      %v3075 = vadd.f32 %v2770, %v2988
      %v3076 = vadd.f32 %v2775, %v2988
      %v3077 = vadd.f32 %v2780, %v2988
      %v3078 = vadd.f32 %v2785, %v2988
      %v3079 = vadd.f32 %v2790, %v2988
      %v3080 = vadd.f32 %v2795, %v2988
      %v3081 = vadd.f32 %v2800, %v2988
      %v3082 = vadd.f32 %v2805, %v2988
      %v3083 = vadd.f32 %v2810, %v2988
      %v3084 = vadd.f32 %v2815, %v2988
      %v3085 = vadd.f32 %v2820, %v2988
      %v3086 = vadd.f32 %v2825, %v2988
      %v3087 = vadd.f32 %v2830, %v2988
      %v3088 = vadd.f32 %v2835, %v2988
      %v3089 = vadd.f32 %v2840, %v2988
      %v3090 = vadd.f32 %v2845, %v2988
      %v3091 = vadd.f32 %v2850, %v2988
      %v3092 = vadd.f32 %v2855, %v2988
      %v3093 = vadd.f32 %v2860, %v2988
      %v3094 = vadd.f32 %v2865, %v2988
      %v3095 = vadd.f32 %v2870, %v2988
      %v3096 = vadd.f32 %v2875, %v2988
      %v3097 = vadd.f32 %v2880, %v2988
      %v3098 = vadd.f32 %v2885, %v2988
      %v3099 = vadd.f32 %v2890, %v2988
      %v3100 = vadd.f32 %v2895, %v2988
      %v3101 = vadd.f32 %v2900, %v2988
      %v3102 = vadd.f32 %v2905, %v2988
      %v3103 = vadd.f32 %v2910, %v2988
      %v3104 = vadd.f32 %v2915, %v2988
      %v3105 = vadd.f32 %v2920, %v2988
      %v3106 = vadd.f32 %v2925, %v2988
      %v3107 = vadd.f32 %v2930, %v2988
      %v3108 = vadd.f32 %v2935, %v2988
      %v3109 = vadd.f32 %v2940, %v2988
      %v3110 = vadd.f32 %v2945, %v2988
      %v3111 = vadd.f32 %v2950, %v2988
      %v3112 = vadd.f32 %v2955, %v2988
      %v3113 = vadd.f32 %v2960, %v2988
      %v3114 = vadd.f32 %v2965, %v2988
      %v3115 = vadd.f32 %v2970, %v2988
      %v3116 = vadd.f32 %v2975, %v2988
      %v3117 = vadd.f32 %v2980, %v2988
      %v3118 = vmul.f32 %v2990, 0.5
      %v3119 = vmul.f32 %v2991, 0.5
      %v3120 = vmul.f32 %v2992, 0.5
      %v3121 = vmul.f32 %v2993, 0.5
      %v3122 = vmul.f32 %v2994, 0.5
      %v3123 = vmul.f32 %v2995, 0.5
      %v3124 = vmul.f32 %v2996, 0.5
      %v3125 = vmul.f32 %v2997, 0.5
      %v3126 = vmul.f32 %v2998, 0.5
      %v3127 = vmul.f32 %v2999, 0.5
      %v3128 = vmul.f32 %v3000, 0.5
      %v3129 = vmul.f32 %v3001, 0.5
      %v3130 = vmul.f32 %v3002, 0.5
      %v3131 = vmul.f32 %v3003, 0.5
      %v3132 = vmul.f32 %v3004, 0.5
      %v3133 = vmul.f32 %v3005, 0.5
      %v3134 = vmul.f32 %v3006, 0.5
      %v3135 = vmul.f32 %v3007, 0.5
      %v3136 = vmul.f32 %v3008, 0.5
      %v3137 = vmul.f32 %v3009, 0.5
      %v3138 = vmul.f32 %v3010, 0.5
      %v3139 = vmul.f32 %v3011, 0.5
      %v3140 = vmul.f32 %v3012, 0.5
      %v3141 = vmul.f32 %v3013, 0.5
      %v3142 = vmul.f32 %v3014, 0.5
      %v3143 = vmul.f32 %v3015, 0.5
      %v3144 = vmul.f32 %v3016, 0.5
      %v3145 = vmul.f32 %v3017, 0.5
      %v3146 = vmul.f32 %v3018, 0.5
      %v3147 = vmul.f32 %v3019, 0.5
      %v3148 = vmul.f32 %v3020, 0.5
      %v3149 = vmul.f32 %v3021, 0.5
      %v3150 = vmul.f32 %v3022, 0.5
      %v3151 = vmul.f32 %v3023, 0.5
      %v3152 = vmul.f32 %v3024, 0.5
      %v3153 = vmul.f32 %v3025, 0.5
      %v3154 = vmul.f32 %v3026, 0.5
      %v3155 = vmul.f32 %v3027, 0.5
      %v3156 = vmul.f32 %v3028, 0.5
      %v3157 = vmul.f32 %v3029, 0.5
      %v3158 = vmul.f32 %v3030, 0.5
      %v3159 = vmul.f32 %v3031, 0.5
      %v3160 = vmul.f32 %v3032, 0.5
      %v3161 = vmul.f32 %v3033, 0.5
      %v3162 = vmul.f32 %v3034, 0.5
      %v3163 = vmul.f32 %v3035, 0.5
      %v3164 = vmul.f32 %v3036, 0.5
      %v3165 = vmul.f32 %v3037, 0.5
      %v3166 = vmul.f32 %v3038, 0.5
      %v3167 = vmul.f32 %v3039, 0.5
      %v3168 = vmul.f32 %v3040, 0.5
      %v3169 = vmul.f32 %v3041, 0.5
      %v3170 = vmul.f32 %v3042, 0.5
      %v3171 = vmul.f32 %v3043, 0.5
      %v3172 = vmul.f32 %v3044, 0.5
      %v3173 = vmul.f32 %v3045, 0.5
      %v3174 = vmul.f32 %v3046, 0.5
      %v3175 = vmul.f32 %v3047, 0.5
      %v3176 = vmul.f32 %v3048, 0.5
      %v3177 = vmul.f32 %v3049, 0.5
      %v3178 = vmul.f32 %v3050, 0.5
      %v3179 = vmul.f32 %v3051, 0.5
      %v3180 = vmul.f32 %v3052, 0.5
      %v3181 = vmul.f32 %v3053, 0.5
      %v3182 = vmul.f32 %v3054, 0.5
      %v3183 = vmul.f32 %v3055, 0.5
      %v3184 = vmul.f32 %v3056, 0.5
      %v3185 = vmul.f32 %v3057, 0.5
      %v3186 = vmul.f32 %v3058, 0.5
      %v3187 = vmul.f32 %v3059, 0.5
      %v3188 = vmul.f32 %v3060, 0.5
      %v3189 = vmul.f32 %v3061, 0.5
      %v3190 = vmul.f32 %v3062, 0.5
      %v3191 = vmul.f32 %v3063, 0.5
      %v3192 = vmul.f32 %v3064, 0.5
      %v3193 = vmul.f32 %v3065, 0.5
      %v3194 = vmul.f32 %v3066, 0.5
      %v3195 = vmul.f32 %v3067, 0.5
      %v3196 = vmul.f32 %v3068, 0.5
      %v3197 = vmul.f32 %v3069, 0.5
      %v3198 = vmul.f32 %v3070, 0.5
      %v3199 = vmul.f32 %v3071, 0.5
      %v3200 = vmul.f32 %v3072, 0.5
      %v3201 = vmul.f32 %v3073, 0.5
      %v3202 = vmul.f32 %v3074, 0.5
      %v3203 = vmul.f32 %v3075, 0.5
      %v3204 = vmul.f32 %v3076, 0.5
      %v3205 = vmul.f32 %v3077, 0.5
      %v3206 = vmul.f32 %v3078, 0.5
      %v3207 = vmul.f32 %v3079, 0.5
      %v3208 = vmul.f32 %v3080, 0.5
      %v3209 = vmul.f32 %v3081, 0.5
      %v3210 = vmul.f32 %v3082, 0.5
      %v3211 = vmul.f32 %v3083, 0.5
      %v3212 = vmul.f32 %v3084, 0.5
      %v3213 = vmul.f32 %v3085, 0.5
      %v3214 = vmul.f32 %v3086, 0.5
      %v3215 = vmul.f32 %v3087, 0.5
      %v3216 = vmul.f32 %v3088, 0.5
      %v3217 = vmul.f32 %v3089, 0.5
      %v3218 = vmul.f32 %v3090, 0.5
      %v3219 = vmul.f32 %v3091, 0.5
      %v3220 = vmul.f32 %v3092, 0.5
      %v3221 = vmul.f32 %v3093, 0.5
      %v3222 = vmul.f32 %v3094, 0.5
      %v3223 = vmul.f32 %v3095, 0.5
      %v3224 = vmul.f32 %v3096, 0.5
      %v3225 = vmul.f32 %v3097, 0.5
      %v3226 = vmul.f32 %v3098, 0.5
      %v3227 = vmul.f32 %v3099, 0.5
      %v3228 = vmul.f32 %v3100, 0.5
      %v3229 = vmul.f32 %v3101, 0.5
      %v3230 = vmul.f32 %v3102, 0.5
      %v3231 = vmul.f32 %v3103, 0.5
      %v3232 = vmul.f32 %v3104, 0.5
      %v3233 = vmul.f32 %v3105, 0.5
      %v3234 = vmul.f32 %v3106, 0.5
      %v3235 = vmul.f32 %v3107, 0.5
      %v3236 = vmul.f32 %v3108, 0.5
      %v3237 = vmul.f32 %v3109, 0.5
      %v3238 = vmul.f32 %v3110, 0.5
      %v3239 = vmul.f32 %v3111, 0.5
      %v3240 = vmul.f32 %v3112, 0.5
      %v3241 = vmul.f32 %v3113, 0.5
      %v3242 = vmul.f32 %v3114, 0.5
      %v3243 = vmul.f32 %v3115, 0.5
      %v3244 = vmul.f32 %v3116, 0.5
      %v3245 = vmul.f32 %v3117, 0.5
      %v3246 = vmul.f32 %v2990, 0.70710677
      %v3247 = vmul.f32 %v2991, 0.70710677
      %v3248 = vmul.f32 %v2992, 0.70710677
      %v3249 = vmul.f32 %v2993, 0.70710677
      %v3250 = vmul.f32 %v2994, 0.70710677
      %v3251 = vmul.f32 %v2995, 0.70710677
      %v3252 = vmul.f32 %v2996, 0.70710677
      %v3253 = vmul.f32 %v2997, 0.70710677
      %v3254 = vmul.f32 %v2998, 0.70710677
      %v3255 = vmul.f32 %v2999, 0.70710677
      %v3256 = vmul.f32 %v3000, 0.70710677
      %v3257 = vmul.f32 %v3001, 0.70710677
      %v3258 = vmul.f32 %v3002, 0.70710677
      %v3259 = vmul.f32 %v3003, 0.70710677
      %v3260 = vmul.f32 %v3004, 0.70710677
      %v3261 = vmul.f32 %v3005, 0.70710677
      %v3262 = vmul.f32 %v3006, 0.70710677
      %v3263 = vmul.f32 %v3007, 0.70710677
      %v3264 = vmul.f32 %v3008, 0.70710677
      %v3265 = vmul.f32 %v3009, 0.70710677
      %v3266 = vmul.f32 %v3010, 0.70710677
      %v3267 = vmul.f32 %v3011, 0.70710677
      %v3268 = vmul.f32 %v3012, 0.70710677
      %v3269 = vmul.f32 %v3013, 0.70710677
      %v3270 = vmul.f32 %v3014, 0.70710677
      %v3271 = vmul.f32 %v3015, 0.70710677
      %v3272 = vmul.f32 %v3016, 0.70710677
      %v3273 = vmul.f32 %v3017, 0.70710677
      %v3274 = vmul.f32 %v3018, 0.70710677
      %v3275 = vmul.f32 %v3019, 0.70710677
      %v3276 = vmul.f32 %v3020, 0.70710677
      %v3277 = vmul.f32 %v3021, 0.70710677
      %v3278 = vmul.f32 %v3022, 0.70710677
      %v3279 = vmul.f32 %v3023, 0.70710677
      %v3280 = vmul.f32 %v3024, 0.70710677
      %v3281 = vmul.f32 %v3025, 0.70710677
      %v3282 = vmul.f32 %v3026, 0.70710677
      %v3283 = vmul.f32 %v3027, 0.70710677
      %v3284 = vmul.f32 %v3028, 0.70710677
      %v3285 = vmul.f32 %v3029, 0.70710677
      %v3286 = vmul.f32 %v3030, 0.70710677
      %v3287 = vmul.f32 %v3031, 0.70710677
      %v3288 = vmul.f32 %v3032, 0.70710677
      %v3289 = vmul.f32 %v3033, 0.70710677
      %v3290 = vmul.f32 %v3034, 0.70710677
      %v3291 = vmul.f32 %v3035, 0.70710677
      %v3292 = vmul.f32 %v3036, 0.70710677
      %v3293 = vmul.f32 %v3037, 0.70710677
      %v3294 = vmul.f32 %v3038, 0.70710677
      %v3295 = vmul.f32 %v3039, 0.70710677
      %v3296 = vmul.f32 %v3040, 0.70710677
      %v3297 = vmul.f32 %v3041, 0.70710677
      %v3298 = vmul.f32 %v3042, 0.70710677
      %v3299 = vmul.f32 %v3043, 0.70710677
      %v3300 = vmul.f32 %v3044, 0.70710677
      %v3301 = vmul.f32 %v3045, 0.70710677
      %v3302 = vmul.f32 %v3046, 0.70710677
      %v3303 = vmul.f32 %v3047, 0.70710677
      %v3304 = vmul.f32 %v3048, 0.70710677
      %v3305 = vmul.f32 %v3049, 0.70710677
      %v3306 = vmul.f32 %v3050, 0.70710677
      %v3307 = vmul.f32 %v3051, 0.70710677
      %v3308 = vmul.f32 %v3052, 0.70710677
      %v3309 = vmul.f32 %v3053, 0.70710677
      %v3310 = vmul.f32 %v3054, 0.70710677
      %v3311 = vmul.f32 %v3055, 0.70710677
      %v3312 = vmul.f32 %v3056, 0.70710677
      %v3313 = vmul.f32 %v3057, 0.70710677
      %v3314 = vmul.f32 %v3058, 0.70710677
      %v3315 = vmul.f32 %v3059, 0.70710677
      %v3316 = vmul.f32 %v3060, 0.70710677
      %v3317 = vmul.f32 %v3061, 0.70710677
      %v3318 = vmul.f32 %v3062, 0.70710677
      %v3319 = vmul.f32 %v3063, 0.70710677
      %v3320 = vmul.f32 %v3064, 0.70710677
      %v3321 = vmul.f32 %v3065, 0.70710677
      %v3322 = vmul.f32 %v3066, 0.70710677
      %v3323 = vmul.f32 %v3067, 0.70710677
      %v3324 = vmul.f32 %v3068, 0.70710677
      %v3325 = vmul.f32 %v3069, 0.70710677
      %v3326 = vmul.f32 %v3070, 0.70710677
      %v3327 = vmul.f32 %v3071, 0.70710677
      %v3328 = vmul.f32 %v3072, 0.70710677
      %v3329 = vmul.f32 %v3073, 0.70710677
      %v3330 = vmul.f32 %v3074, 0.70710677
      %v3331 = vmul.f32 %v3075, 0.70710677
      %v3332 = vmul.f32 %v3076, 0.70710677
      %v3333 = vmul.f32 %v3077, 0.70710677
      %v3334 = vmul.f32 %v3078, 0.70710677
      %v3335 = vmul.f32 %v3079, 0.70710677
      %v3336 = vmul.f32 %v3080, 0.70710677
      %v3337 = vmul.f32 %v3081, 0.70710677
      %v3338 = vmul.f32 %v3082, 0.70710677
      %v3339 = vmul.f32 %v3083, 0.70710677
      %v3340 = vmul.f32 %v3084, 0.70710677
      %v3341 = vmul.f32 %v3085, 0.70710677
      %v3342 = vmul.f32 %v3086, 0.70710677
      %v3343 = vmul.f32 %v3087, 0.70710677
      %v3344 = vmul.f32 %v3088, 0.70710677
      %v3345 = vmul.f32 %v3089, 0.70710677
      %v3346 = vmul.f32 %v3090, 0.70710677
      %v3347 = vmul.f32 %v3091, 0.70710677
      %v3348 = vmul.f32 %v3092, 0.70710677
      %v3349 = vmul.f32 %v3093, 0.70710677
      %v3350 = vmul.f32 %v3094, 0.70710677
      %v3351 = vmul.f32 %v3095, 0.70710677
      %v3352 = vmul.f32 %v3096, 0.70710677
      %v3353 = vmul.f32 %v3097, 0.70710677
      %v3354 = vmul.f32 %v3098, 0.70710677
      %v3355 = vmul.f32 %v3099, 0.70710677
      %v3356 = vmul.f32 %v3100, 0.70710677
      %v3357 = vmul.f32 %v3101, 0.70710677
      %v3358 = vmul.f32 %v3102, 0.70710677
      %v3359 = vmul.f32 %v3103, 0.70710677
      %v3360 = vmul.f32 %v3104, 0.70710677
      %v3361 = vmul.f32 %v3105, 0.70710677
      %v3362 = vmul.f32 %v3106, 0.70710677
      %v3363 = vmul.f32 %v3107, 0.70710677
      %v3364 = vmul.f32 %v3108, 0.70710677
      %v3365 = vmul.f32 %v3109, 0.70710677
      %v3366 = vmul.f32 %v3110, 0.70710677
      %v3367 = vmul.f32 %v3111, 0.70710677
      %v3368 = vmul.f32 %v3112, 0.70710677
      %v3369 = vmul.f32 %v3113, 0.70710677
      %v3370 = vmul.f32 %v3114, 0.70710677
      %v3371 = vmul.f32 %v3115, 0.70710677
      %v3372 = vmul.f32 %v3116, 0.70710677
      %v3373 = vmul.f32 %v3117, 0.70710677
      %v3374 = verf.f32.pop %v3246
      %v3375 = verf.f32.pop %v3247
      %v3376 = verf.f32.pop %v3248
      %v3377 = verf.f32.pop %v3249
      %v3378 = verf.f32.pop %v3250
      %v3379 = verf.f32.pop %v3251
      %v3380 = verf.f32.pop %v3252
      %v3381 = verf.f32.pop %v3253
      %v3382 = verf.f32.pop %v3254
      %v3383 = verf.f32.pop %v3255
      %v3384 = verf.f32.pop %v3256
      %v3385 = verf.f32.pop %v3257
      %v3386 = verf.f32.pop %v3258
      %v3387 = verf.f32.pop %v3259
      %v3388 = verf.f32.pop %v3260
      %v3389 = verf.f32.pop %v3261
      %v3390 = verf.f32.pop %v3262
      %v3391 = verf.f32.pop %v3263
      %v3392 = verf.f32.pop %v3264
      %v3393 = verf.f32.pop %v3265
      %v3394 = verf.f32.pop %v3266
      %v3395 = verf.f32.pop %v3267
      %v3396 = verf.f32.pop %v3268
      %v3397 = verf.f32.pop %v3269
      %v3398 = verf.f32.pop %v3270
      %v3399 = verf.f32.pop %v3271
      %v3400 = verf.f32.pop %v3272
      %v3401 = verf.f32.pop %v3273
      %v3402 = verf.f32.pop %v3274
      %v3403 = verf.f32.pop %v3275
      %v3404 = verf.f32.pop %v3276
      %v3405 = verf.f32.pop %v3277
      %v3406 = verf.f32.pop %v3278
      %v3407 = verf.f32.pop %v3279
      %v3408 = verf.f32.pop %v3280
      %v3409 = verf.f32.pop %v3281
      %v3410 = verf.f32.pop %v3282
      %v3411 = verf.f32.pop %v3283
      %v3412 = verf.f32.pop %v3284
      %v3413 = verf.f32.pop %v3285
      %v3414 = verf.f32.pop %v3286
      %v3415 = verf.f32.pop %v3287
      %v3416 = verf.f32.pop %v3288
      %v3417 = verf.f32.pop %v3289
      %v3418 = verf.f32.pop %v3290
      %v3419 = verf.f32.pop %v3291
      %v3420 = verf.f32.pop %v3292
      %v3421 = verf.f32.pop %v3293
      %v3422 = verf.f32.pop %v3294
      %v3423 = verf.f32.pop %v3295
      %v3424 = verf.f32.pop %v3296
      %v3425 = verf.f32.pop %v3297
      %v3426 = verf.f32.pop %v3298
      %v3427 = verf.f32.pop %v3299
      %v3428 = verf.f32.pop %v3300
      %v3429 = verf.f32.pop %v3301
      %v3430 = verf.f32.pop %v3302
      %v3431 = verf.f32.pop %v3303
      %v3432 = verf.f32.pop %v3304
      %v3433 = verf.f32.pop %v3305
      %v3434 = verf.f32.pop %v3306
      %v3435 = verf.f32.pop %v3307
      %v3436 = verf.f32.pop %v3308
      %v3437 = verf.f32.pop %v3309
      %v3438 = verf.f32.pop %v3310
      %v3439 = verf.f32.pop %v3311
      %v3440 = verf.f32.pop %v3312
      %v3441 = verf.f32.pop %v3313
      %v3442 = verf.f32.pop %v3314
      %v3443 = verf.f32.pop %v3315
      %v3444 = verf.f32.pop %v3316
      %v3445 = verf.f32.pop %v3317
      %v3446 = verf.f32.pop %v3318
      %v3447 = verf.f32.pop %v3319
      %v3448 = verf.f32.pop %v3320
      %v3449 = verf.f32.pop %v3321
      %v3450 = verf.f32.pop %v3322
      %v3451 = verf.f32.pop %v3323
      %v3452 = verf.f32.pop %v3324
      %v3453 = verf.f32.pop %v3325
      %v3454 = verf.f32.pop %v3326
      %v3455 = verf.f32.pop %v3327
      %v3456 = verf.f32.pop %v3328
      %v3457 = verf.f32.pop %v3329
      %v3458 = verf.f32.pop %v3330
      %v3459 = verf.f32.pop %v3331
      %v3460 = verf.f32.pop %v3332
      %v3461 = verf.f32.pop %v3333
      %v3462 = verf.f32.pop %v3334
      %v3463 = verf.f32.pop %v3335
      %v3464 = verf.f32.pop %v3336
      %v3465 = verf.f32.pop %v3337
      %v3466 = verf.f32.pop %v3338
      %v3467 = verf.f32.pop %v3339
      %v3468 = verf.f32.pop %v3340
      %v3469 = verf.f32.pop %v3341
      %v3470 = verf.f32.pop %v3342
      %v3471 = verf.f32.pop %v3343
      %v3472 = verf.f32.pop %v3344
      %v3473 = verf.f32.pop %v3345
      %v3474 = verf.f32.pop %v3346
      %v3475 = verf.f32.pop %v3347
      %v3476 = verf.f32.pop %v3348
      %v3477 = verf.f32.pop %v3349
      %v3478 = verf.f32.pop %v3350
      %v3479 = verf.f32.pop %v3351
      %v3480 = verf.f32.pop %v3352
      %v3481 = verf.f32.pop %v3353
      %v3482 = verf.f32.pop %v3354
      %v3483 = verf.f32.pop %v3355
      %v3484 = verf.f32.pop %v3356
      %v3485 = verf.f32.pop %v3357
      %v3486 = verf.f32.pop %v3358
      %v3487 = verf.f32.pop %v3359
      %v3488 = verf.f32.pop %v3360
      %v3489 = verf.f32.pop %v3361
      %v3490 = verf.f32.pop %v3362
      %v3491 = verf.f32.pop %v3363
      %v3492 = verf.f32.pop %v3364
      %v3493 = verf.f32.pop %v3365
      %v3494 = verf.f32.pop %v3366
      %v3495 = verf.f32.pop %v3367
      %v3496 = verf.f32.pop %v3368
      %v3497 = verf.f32.pop %v3369
      %v3498 = verf.f32.pop %v3370
      %v3499 = verf.f32.pop %v3371
      %v3500 = verf.f32.pop %v3372
      %v3501 = verf.f32.pop %v3373
      %v3502 = vadd.f32 %v3374, 1.0
      %v3503 = vadd.f32 %v3375, 1.0
      %v3504 = vadd.f32 %v3376, 1.0
      %v3505 = vadd.f32 %v3377, 1.0
      %v3506 = vadd.f32 %v3378, 1.0
      %v3507 = vadd.f32 %v3379, 1.0
      %v3508 = vadd.f32 %v3380, 1.0
      %v3509 = vadd.f32 %v3381, 1.0
      %v3510 = vadd.f32 %v3382, 1.0
      %v3511 = vadd.f32 %v3383, 1.0
      %v3512 = vadd.f32 %v3384, 1.0
      %v3513 = vadd.f32 %v3385, 1.0
      %v3514 = vadd.f32 %v3386, 1.0
      %v3515 = vadd.f32 %v3387, 1.0
      %v3516 = vadd.f32 %v3388, 1.0
      %v3517 = vadd.f32 %v3389, 1.0
      %v3518 = vadd.f32 %v3390, 1.0
      %v3519 = vadd.f32 %v3391, 1.0
      %v3520 = vadd.f32 %v3392, 1.0
      %v3521 = vadd.f32 %v3393, 1.0
      %v3522 = vadd.f32 %v3394, 1.0
      %v3523 = vadd.f32 %v3395, 1.0
      %v3524 = vadd.f32 %v3396, 1.0
      %v3525 = vadd.f32 %v3397, 1.0
      %v3526 = vadd.f32 %v3398, 1.0
      %v3527 = vadd.f32 %v3399, 1.0
      %v3528 = vadd.f32 %v3400, 1.0
      %v3529 = vadd.f32 %v3401, 1.0
      %v3530 = vadd.f32 %v3402, 1.0
      %v3531 = vadd.f32 %v3403, 1.0
      %v3532 = vadd.f32 %v3404, 1.0
      %v3533 = vadd.f32 %v3405, 1.0
      %v3534 = vadd.f32 %v3406, 1.0
      %v3535 = vadd.f32 %v3407, 1.0
      %v3536 = vadd.f32 %v3408, 1.0
      %v3537 = vadd.f32 %v3409, 1.0
      %v3538 = vadd.f32 %v3410, 1.0
      %v3539 = vadd.f32 %v3411, 1.0
      %v3540 = vadd.f32 %v3412, 1.0
      %v3541 = vadd.f32 %v3413, 1.0
      %v3542 = vadd.f32 %v3414, 1.0
      %v3543 = vadd.f32 %v3415, 1.0
      %v3544 = vadd.f32 %v3416, 1.0
      %v3545 = vadd.f32 %v3417, 1.0
      %v3546 = vadd.f32 %v3418, 1.0
      %v3547 = vadd.f32 %v3419, 1.0
      %v3548 = vadd.f32 %v3420, 1.0
      %v3549 = vadd.f32 %v3421, 1.0
      %v3550 = vadd.f32 %v3422, 1.0
      %v3551 = vadd.f32 %v3423, 1.0
      %v3552 = vadd.f32 %v3424, 1.0
      %v3553 = vadd.f32 %v3425, 1.0
      %v3554 = vadd.f32 %v3426, 1.0
      %v3555 = vadd.f32 %v3427, 1.0
      %v3556 = vadd.f32 %v3428, 1.0
      %v3557 = vadd.f32 %v3429, 1.0
      %v3558 = vadd.f32 %v3430, 1.0
      %v3559 = vadd.f32 %v3431, 1.0
      %v3560 = vadd.f32 %v3432, 1.0
      %v3561 = vadd.f32 %v3433, 1.0
      %v3562 = vadd.f32 %v3434, 1.0
      %v3563 = vadd.f32 %v3435, 1.0
      %v3564 = vadd.f32 %v3436, 1.0
      %v3565 = vadd.f32 %v3437, 1.0
      %v3566 = vadd.f32 %v3438, 1.0
      %v3567 = vadd.f32 %v3439, 1.0
      %v3568 = vadd.f32 %v3440, 1.0
      %v3569 = vadd.f32 %v3441, 1.0
      %v3570 = vadd.f32 %v3442, 1.0
      %v3571 = vadd.f32 %v3443, 1.0
      %v3572 = vadd.f32 %v3444, 1.0
      %v3573 = vadd.f32 %v3445, 1.0
      %v3574 = vadd.f32 %v3446, 1.0
      %v3575 = vadd.f32 %v3447, 1.0
      %v3576 = vadd.f32 %v3448, 1.0
      %v3577 = vadd.f32 %v3449, 1.0
      %v3578 = vadd.f32 %v3450, 1.0
      %v3579 = vadd.f32 %v3451, 1.0
      %v3580 = vadd.f32 %v3452, 1.0
      %v3581 = vadd.f32 %v3453, 1.0
      %v3582 = vadd.f32 %v3454, 1.0
      %v3583 = vadd.f32 %v3455, 1.0
      %v3584 = vadd.f32 %v3456, 1.0
      %v3585 = vadd.f32 %v3457, 1.0
      %v3586 = vadd.f32 %v3458, 1.0
      %v3587 = vadd.f32 %v3459, 1.0
      %v3588 = vadd.f32 %v3460, 1.0
      %v3589 = vadd.f32 %v3461, 1.0
      %v3590 = vadd.f32 %v3462, 1.0
      %v3591 = vadd.f32 %v3463, 1.0
      %v3592 = vadd.f32 %v3464, 1.0
      %v3593 = vadd.f32 %v3465, 1.0
      %v3594 = vadd.f32 %v3466, 1.0
      %v3595 = vadd.f32 %v3467, 1.0
      %v3596 = vadd.f32 %v3468, 1.0
      %v3597 = vadd.f32 %v3469, 1.0
      %v3598 = vadd.f32 %v3470, 1.0
      %v3599 = vadd.f32 %v3471, 1.0
      %v3600 = vadd.f32 %v3472, 1.0
      %v3601 = vadd.f32 %v3473, 1.0
      %v3602 = vadd.f32 %v3474, 1.0
      %v3603 = vadd.f32 %v3475, 1.0
      %v3604 = vadd.f32 %v3476, 1.0
      %v3605 = vadd.f32 %v3477, 1.0
      %v3606 = vadd.f32 %v3478, 1.0
      %v3607 = vadd.f32 %v3479, 1.0
      %v3608 = vadd.f32 %v3480, 1.0
      %v3609 = vadd.f32 %v3481, 1.0
      %v3610 = vadd.f32 %v3482, 1.0
      %v3611 = vadd.f32 %v3483, 1.0
      %v3612 = vadd.f32 %v3484, 1.0
      %v3613 = vadd.f32 %v3485, 1.0
      %v3614 = vadd.f32 %v3486, 1.0
      %v3615 = vadd.f32 %v3487, 1.0
      %v3616 = vadd.f32 %v3488, 1.0
      %v3617 = vadd.f32 %v3489, 1.0
      %v3618 = vadd.f32 %v3490, 1.0
      %v3619 = vadd.f32 %v3491, 1.0
      %v3620 = vadd.f32 %v3492, 1.0
      %v3621 = vadd.f32 %v3493, 1.0
      %v3622 = vadd.f32 %v3494, 1.0
      %v3623 = vadd.f32 %v3495, 1.0
      %v3624 = vadd.f32 %v3496, 1.0
      %v3625 = vadd.f32 %v3497, 1.0
      %v3626 = vadd.f32 %v3498, 1.0
      %v3627 = vadd.f32 %v3499, 1.0
      %v3628 = vadd.f32 %v3500, 1.0
      %v3629 = vadd.f32 %v3501, 1.0
      %v3630 = vmul.f32 %v3118, %v3502
      %v3631 = vmul.f32 %v3119, %v3503
      %v3632 = vmul.f32 %v3120, %v3504
      %v3633 = vmul.f32 %v3121, %v3505
      %v3634 = vmul.f32 %v3122, %v3506
      %v3635 = vmul.f32 %v3123, %v3507
      %v3636 = vmul.f32 %v3124, %v3508
      %v3637 = vmul.f32 %v3125, %v3509
      %v3638 = vmul.f32 %v3126, %v3510
      %v3639 = vmul.f32 %v3127, %v3511
      %v3640 = vmul.f32 %v3128, %v3512
      %v3641 = vmul.f32 %v3129, %v3513
      %v3642 = vmul.f32 %v3130, %v3514
      %v3643 = vmul.f32 %v3131, %v3515
      %v3644 = vmul.f32 %v3132, %v3516
      %v3645 = vmul.f32 %v3133, %v3517
      %v3646 = vmul.f32 %v3134, %v3518
      %v3647 = vmul.f32 %v3135, %v3519
      %v3648 = vmul.f32 %v3136, %v3520
      %v3649 = vmul.f32 %v3137, %v3521
      %v3650 = vmul.f32 %v3138, %v3522
      %v3651 = vmul.f32 %v3139, %v3523
      %v3652 = vmul.f32 %v3140, %v3524
      %v3653 = vmul.f32 %v3141, %v3525
      %v3654 = vmul.f32 %v3142, %v3526
      %v3655 = vmul.f32 %v3143, %v3527
      %v3656 = vmul.f32 %v3144, %v3528
      %v3657 = vmul.f32 %v3145, %v3529
      %v3658 = vmul.f32 %v3146, %v3530
      %v3659 = vmul.f32 %v3147, %v3531
      %v3660 = vmul.f32 %v3148, %v3532
      %v3661 = vmul.f32 %v3149, %v3533
      %v3662 = vmul.f32 %v3150, %v3534
      %v3663 = vmul.f32 %v3151, %v3535
      %v3664 = vmul.f32 %v3152, %v3536
      %v3665 = vmul.f32 %v3153, %v3537
      %v3666 = vmul.f32 %v3154, %v3538
      %v3667 = vmul.f32 %v3155, %v3539
      %v3668 = vmul.f32 %v3156, %v3540
      %v3669 = vmul.f32 %v3157, %v3541
      %v3670 = vmul.f32 %v3158, %v3542
      %v3671 = vmul.f32 %v3159, %v3543
      %v3672 = vmul.f32 %v3160, %v3544
      %v3673 = vmul.f32 %v3161, %v3545
      %v3674 = vmul.f32 %v3162, %v3546
      %v3675 = vmul.f32 %v3163, %v3547
      %v3676 = vmul.f32 %v3164, %v3548
      %v3677 = vmul.f32 %v3165, %v3549
      %v3678 = vmul.f32 %v3166, %v3550
      %v3679 = vmul.f32 %v3167, %v3551
      %v3680 = vmul.f32 %v3168, %v3552
      %v3681 = vmul.f32 %v3169, %v3553
      %v3682 = vmul.f32 %v3170, %v3554
      %v3683 = vmul.f32 %v3171, %v3555
      %v3684 = vmul.f32 %v3172, %v3556
      %v3685 = vmul.f32 %v3173, %v3557
      %v3686 = vmul.f32 %v3174, %v3558
      %v3687 = vmul.f32 %v3175, %v3559
      %v3688 = vmul.f32 %v3176, %v3560
      %v3689 = vmul.f32 %v3177, %v3561
      %v3690 = vmul.f32 %v3178, %v3562
      %v3691 = vmul.f32 %v3179, %v3563
      %v3692 = vmul.f32 %v3180, %v3564
      %v3693 = vmul.f32 %v3181, %v3565
      %v3694 = vmul.f32 %v3182, %v3566
      %v3695 = vmul.f32 %v3183, %v3567
      %v3696 = vmul.f32 %v3184, %v3568
      %v3697 = vmul.f32 %v3185, %v3569
      %v3698 = vmul.f32 %v3186, %v3570
      %v3699 = vmul.f32 %v3187, %v3571
      %v3700 = vmul.f32 %v3188, %v3572
      %v3701 = vmul.f32 %v3189, %v3573
      %v3702 = vmul.f32 %v3190, %v3574
      %v3703 = vmul.f32 %v3191, %v3575
      %v3704 = vmul.f32 %v3192, %v3576
      %v3705 = vmul.f32 %v3193, %v3577
      %v3706 = vmul.f32 %v3194, %v3578
      %v3707 = vmul.f32 %v3195, %v3579
      %v3708 = vmul.f32 %v3196, %v3580
      %v3709 = vmul.f32 %v3197, %v3581
      %v3710 = vmul.f32 %v3198, %v3582
      %v3711 = vmul.f32 %v3199, %v3583
      %v3712 = vmul.f32 %v3200, %v3584
      %v3713 = vmul.f32 %v3201, %v3585
      %v3714 = vmul.f32 %v3202, %v3586
      %v3715 = vmul.f32 %v3203, %v3587
      %v3716 = vmul.f32 %v3204, %v3588
      %v3717 = vmul.f32 %v3205, %v3589
      %v3718 = vmul.f32 %v3206, %v3590
      %v3719 = vmul.f32 %v3207, %v3591
      %v3720 = vmul.f32 %v3208, %v3592
      %v3721 = vmul.f32 %v3209, %v3593
      %v3722 = vmul.f32 %v3210, %v3594
      %v3723 = vmul.f32 %v3211, %v3595
      %v3724 = vmul.f32 %v3212, %v3596
      %v3725 = vmul.f32 %v3213, %v3597
      %v3726 = vmul.f32 %v3214, %v3598
      %v3727 = vmul.f32 %v3215, %v3599
      %v3728 = vmul.f32 %v3216, %v3600
      %v3729 = vmul.f32 %v3217, %v3601
      %v3730 = vmul.f32 %v3218, %v3602
      %v3731 = vmul.f32 %v3219, %v3603
      %v3732 = vmul.f32 %v3220, %v3604
      %v3733 = vmul.f32 %v3221, %v3605
      %v3734 = vmul.f32 %v3222, %v3606
      %v3735 = vmul.f32 %v3223, %v3607
      %v3736 = vmul.f32 %v3224, %v3608
      %v3737 = vmul.f32 %v3225, %v3609
      %v3738 = vmul.f32 %v3226, %v3610
      %v3739 = vmul.f32 %v3227, %v3611
      %v3740 = vmul.f32 %v3228, %v3612
      %v3741 = vmul.f32 %v3229, %v3613
      %v3742 = vmul.f32 %v3230, %v3614
      %v3743 = vmul.f32 %v3231, %v3615
      %v3744 = vmul.f32 %v3232, %v3616
      %v3745 = vmul.f32 %v3233, %v3617
      %v3746 = vmul.f32 %v3234, %v3618
      %v3747 = vmul.f32 %v3235, %v3619
      %v3748 = vmul.f32 %v3236, %v3620
      %v3749 = vmul.f32 %v3237, %v3621
      %v3750 = vmul.f32 %v3238, %v3622
      %v3751 = vmul.f32 %v3239, %v3623
      %v3752 = vmul.f32 %v3240, %v3624
      %v3753 = vmul.f32 %v3241, %v3625
      %v3754 = vmul.f32 %v3242, %v3626
      %v3755 = vmul.f32 %v3243, %v3627
      %v3756 = vmul.f32 %v3244, %v3628
      %v3757 = vmul.f32 %v3245, %v3629
      %v3758 = vld [vmem:[%s4] sm:$0xff]
      %v3759 = vld [vmem:[%s4 + $0x8] sm:$0xff]
      %v3760 = vld [vmem:[%s4 + $0x10] sm:$0xff]
      %v3761 = vld [vmem:[%s4 + $0x18] sm:$0xff]
      %v3762 = vld [vmem:[%s5] sm:$0x1]
      %v3764 = vlaneseq
      %v3765 = vshrl.u32 %v3764, 7
      %v3766 = vsub.s32 0, %v3765
      %v3767 = vrot.slane %v3762, %v3766
      %vm3769 = vcmask 261120
      %v3771 = vsel %vm3769, %v3630, 0
      %v3774 = vsel %vm3769, %v3631, 0
      %v3777 = vsel %vm3769, %v3632, 0
      %v3780 = vsel %vm3769, %v3633, 0
      %v3783 = vsel %vm3769, %v3634, 0
      %v3786 = vsel %vm3769, %v3635, 0
      %v3789 = vsel %vm3769, %v3636, 0
      %v3792 = vsel %vm3769, %v3637, 0
      %v3795 = vsel %vm3769, %v3638, 0
      %v3798 = vsel %vm3769, %v3639, 0
      %v3801 = vsel %vm3769, %v3640, 0
      %v3804 = vsel %vm3769, %v3641, 0
      %v3807 = vsel %vm3769, %v3642, 0
      %v3810 = vsel %vm3769, %v3643, 0
      %v3813 = vsel %vm3769, %v3644, 0
      %v3816 = vsel %vm3769, %v3645, 0
      %v3819 = vsel %vm3769, %v3646, 0
      %v3822 = vsel %vm3769, %v3647, 0
      %v3825 = vsel %vm3769, %v3648, 0
      %v3828 = vsel %vm3769, %v3649, 0
      %v3831 = vsel %vm3769, %v3650, 0
      %v3834 = vsel %vm3769, %v3651, 0
      %v3837 = vsel %vm3769, %v3652, 0
      %v3840 = vsel %vm3769, %v3653, 0
      %v3843 = vsel %vm3769, %v3654, 0
      %v3846 = vsel %vm3769, %v3655, 0
      %v3849 = vsel %vm3769, %v3656, 0
      %v3852 = vsel %vm3769, %v3657, 0
      %v3855 = vsel %vm3769, %v3658, 0
      %v3858 = vsel %vm3769, %v3659, 0
      %v3861 = vsel %vm3769, %v3660, 0
      %v3864 = vsel %vm3769, %v3661, 0
      %v3867 = vsel %vm3769, %v3662, 0
      %v3870 = vsel %vm3769, %v3663, 0
      %v3873 = vsel %vm3769, %v3664, 0
      %v3876 = vsel %vm3769, %v3665, 0
      %v3879 = vsel %vm3769, %v3666, 0
      %v3882 = vsel %vm3769, %v3667, 0
      %v3885 = vsel %vm3769, %v3668, 0
      %v3888 = vsel %vm3769, %v3669, 0
      %v3891 = vsel %vm3769, %v3670, 0
      %v3894 = vsel %vm3769, %v3671, 0
      %v3897 = vsel %vm3769, %v3672, 0
      %v3900 = vsel %vm3769, %v3673, 0
      %v3903 = vsel %vm3769, %v3674, 0
      %v3906 = vsel %vm3769, %v3675, 0
      %v3909 = vsel %vm3769, %v3676, 0
      %v3912 = vsel %vm3769, %v3677, 0
      %v3915 = vsel %vm3769, %v3678, 0
      %v3918 = vsel %vm3769, %v3679, 0
      %v3921 = vsel %vm3769, %v3680, 0
      %v3924 = vsel %vm3769, %v3681, 0
      %v3927 = vsel %vm3769, %v3682, 0
      %v3930 = vsel %vm3769, %v3683, 0
      %v3933 = vsel %vm3769, %v3684, 0
      %v3936 = vsel %vm3769, %v3685, 0
      %v3939 = vsel %vm3769, %v3686, 0
      %v3942 = vsel %vm3769, %v3687, 0
      %v3945 = vsel %vm3769, %v3688, 0
      %v3948 = vsel %vm3769, %v3689, 0
      %v3951 = vsel %vm3769, %v3690, 0
      %v3954 = vsel %vm3769, %v3691, 0
      %v3957 = vsel %vm3769, %v3692, 0
      %v3960 = vsel %vm3769, %v3693, 0
      %v3963 = vsel %vm3769, %v3694, 0
      %v3966 = vsel %vm3769, %v3695, 0
      %v3969 = vsel %vm3769, %v3696, 0
      %v3972 = vsel %vm3769, %v3697, 0
      %v3975 = vsel %vm3769, %v3698, 0
      %v3978 = vsel %vm3769, %v3699, 0
      %v3981 = vsel %vm3769, %v3700, 0
      %v3984 = vsel %vm3769, %v3701, 0
      %v3987 = vsel %vm3769, %v3702, 0
      %v3990 = vsel %vm3769, %v3703, 0
      %v3993 = vsel %vm3769, %v3704, 0
      %v3996 = vsel %vm3769, %v3705, 0
      %v3999 = vsel %vm3769, %v3706, 0
      %v4002 = vsel %vm3769, %v3707, 0
      %v4005 = vsel %vm3769, %v3708, 0
      %v4008 = vsel %vm3769, %v3709, 0
      %v4011 = vsel %vm3769, %v3710, 0
      %v4014 = vsel %vm3769, %v3711, 0
      %v4017 = vsel %vm3769, %v3712, 0
      %v4020 = vsel %vm3769, %v3713, 0
      %v4023 = vsel %vm3769, %v3714, 0
      %v4026 = vsel %vm3769, %v3715, 0
      %v4029 = vsel %vm3769, %v3716, 0
      %v4032 = vsel %vm3769, %v3717, 0
      %v4035 = vsel %vm3769, %v3718, 0
      %v4038 = vsel %vm3769, %v3719, 0
      %v4041 = vsel %vm3769, %v3720, 0
      %v4044 = vsel %vm3769, %v3721, 0
      %v4047 = vsel %vm3769, %v3722, 0
      %v4050 = vsel %vm3769, %v3723, 0
      %v4053 = vsel %vm3769, %v3724, 0
      %v4056 = vsel %vm3769, %v3725, 0
      %v4059 = vsel %vm3769, %v3726, 0
      %v4062 = vsel %vm3769, %v3727, 0
      %v4065 = vsel %vm3769, %v3728, 0
      %v4068 = vsel %vm3769, %v3729, 0
      %v4071 = vsel %vm3769, %v3730, 0
      %v4074 = vsel %vm3769, %v3731, 0
      %v4077 = vsel %vm3769, %v3732, 0
      %v4080 = vsel %vm3769, %v3733, 0
      %v4083 = vsel %vm3769, %v3734, 0
      %v4086 = vsel %vm3769, %v3735, 0
      %v4089 = vsel %vm3769, %v3736, 0
      %v4092 = vsel %vm3769, %v3737, 0
      %v4095 = vsel %vm3769, %v3738, 0
      %v4098 = vsel %vm3769, %v3739, 0
      %v4101 = vsel %vm3769, %v3740, 0
      %v4104 = vsel %vm3769, %v3741, 0
      %v4107 = vsel %vm3769, %v3742, 0
      %v4110 = vsel %vm3769, %v3743, 0
      %v4113 = vsel %vm3769, %v3744, 0
      %v4116 = vsel %vm3769, %v3745, 0
      %v4119 = vsel %vm3769, %v3746, 0
      %v4122 = vsel %vm3769, %v3747, 0
      %v4125 = vsel %vm3769, %v3748, 0
      %v4128 = vsel %vm3769, %v3749, 0
      %v4131 = vsel %vm3769, %v3750, 0
      %v4134 = vsel %vm3769, %v3751, 0
      %v4137 = vsel %vm3769, %v3752, 0
      %v4140 = vsel %vm3769, %v3753, 0
      %v4143 = vsel %vm3769, %v3754, 0
      %v4146 = vsel %vm3769, %v3755, 0
      %v4149 = vsel %vm3769, %v3756, 0
      %v4152 = vsel %vm3769, %v3757, 0
      %4154 = vmatprep.subr.mxu0 0.0
      %4155 = vmatpush1.msra.mxu0 0.0
      %4156 = vmatprep.subr.mxu0 0.0
      %4157 = vmatpush1.msra.mxu0 0.0
      %4158 = vmatprep.subr.mxu0 0.0
      %4159 = vmatpush1.msra.mxu0 0.0
      %4160 = vmatprep.subr.mxu0 0.0
      %4161 = vmatpush1.msra.mxu0 0.0
      %4162 = vmatprep.subr.mxu0 0.0
      %4163 = vmatpush1.msra.mxu0 0.0
      %4164 = vmatprep.subr.mxu0 0.0
      %4165 = vmatpush1.msra.mxu0 0.0
      %4166 = vmatprep.subr.mxu0 0.0
      %4167 = vmatpush1.msra.mxu0 0.0
      %4168 = vmatprep.subr.mxu0 0.0
      %4169 = vmatpush1.msra.mxu0 0.0
      %4170 = vmatprep.subr.mxu0 0.0
      %4171 = vmatpush1.msra.mxu0 0.0
      %4172 = vmatprep.subr.mxu0 0.0
      %4173 = vmatpush1.msra.mxu0 0.0
      %4174 = vmatprep.subr.mxu0 0.0
      %4175 = vmatpush1.msra.mxu0 0.0
      %4176 = vmatprep.subr.mxu0 0.0
      %4177 = vmatpush1.msra.mxu0 0.0
      %4178 = vmatprep.subr.mxu0 0.0
      %4179 = vmatpush1.msra.mxu0 %v3761
      %4180 = vmatprep.subr.mxu0 0.0
      %4181 = vmatpush1.msra.mxu0 %v3760
      %4182 = vmatprep.subr.mxu0 0.0
      %4183 = vmatpush1.msra.mxu0 %v3759
      %4184 = vmatprep.subr.mxu0 0.0
      %4185 = vmatpush1.msra.mxu0 %v3758
      %4186 = vmatprep.subr.mxu0 0.0
      %4187 = vmatpush2.msra.mxu0 0.0
      %4188 = vmatprep.subr.mxu0 0.0
      %4189 = vmatpush2.msra.mxu0 0.0
      %4190 = vmatprep.subr.mxu0 0.0
      %4191 = vmatpush2.msra.mxu0 0.0
      %4192 = vmatprep.subr.mxu0 0.0
      %4193 = vmatpush2.msra.mxu0 0.0
      %4194 = vmatprep.subr.mxu0 0.0
      %4195 = vmatpush2.msra.mxu0 0.0
      %4196 = vmatprep.subr.mxu0 0.0
      %4197 = vmatpush2.msra.mxu0 0.0
      %4198 = vmatprep.subr.mxu0 0.0
      %4199 = vmatpush2.msra.mxu0 0.0
      %4200 = vmatprep.subr.mxu0 0.0
      %4201 = vmatpush2.msra.mxu0 0.0
      %4202 = vmatprep.subr.mxu0 0.0
      %4203 = vmatpush2.msra.mxu0 0.0
      %4204 = vmatprep.subr.mxu0 0.0
      %4205 = vmatpush2.msra.mxu0 0.0
      %4206 = vmatprep.subr.mxu0 0.0
      %4207 = vmatpush2.msra.mxu0 0.0
      %4208 = vmatprep.subr.mxu0 0.0
      %4209 = vmatpush2.msra.mxu0 0.0
      %4210 = vmatprep.subr.mxu0 0.0
      %4211 = vmatpush2.msra.mxu0 0.0
      %4212 = vmatprep.subr.mxu0 0.0
      %4213 = vmatpush2.msra.mxu0 0.0
      %4214 = vmatprep.subr.mxu0 0.0
      %4215 = vmatpush2.msra.mxu0 0.0
      %4216 = vmatprep.subr.mxu0 0.0
      %4217 = vmatpush2.msra.mxu0 0.0
      %4218 = vmatprep.mubr.f32.mxu0 0.0
      %4219 = vmatmul.mubr.f32.gmra.mxu0 %v3771
      %v4220 = vpop.f32.mrf.mxu0
      %v4221 = vadd.f32 %v3767, %v4220
      %v4222 = vpop.f32.mrf.mxu0
      %4223 = vmatprep.mubr.f32.mxu0 0.0
      %4224 = vmatmul.mubr.f32.gmra.mxu0 %v3774
      %v4225 = vpop.f32.mrf.mxu0
      %v4226 = vadd.f32 %v3767, %v4225
      %v4227 = vpop.f32.mrf.mxu0
      %4228 = vmatprep.mubr.f32.mxu0 0.0
      %4229 = vmatmul.mubr.f32.gmra.mxu0 %v3777
      %v4230 = vpop.f32.mrf.mxu0
      %v4231 = vadd.f32 %v3767, %v4230
      %v4232 = vpop.f32.mrf.mxu0
      %4233 = vmatprep.mubr.f32.mxu0 0.0
      %4234 = vmatmul.mubr.f32.gmra.mxu0 %v3780
      %v4235 = vpop.f32.mrf.mxu0
      %v4236 = vadd.f32 %v3767, %v4235
      %v4237 = vpop.f32.mrf.mxu0
      %4238 = vmatprep.mubr.f32.mxu0 0.0
      %4239 = vmatmul.mubr.f32.gmra.mxu0 %v3783
      %v4240 = vpop.f32.mrf.mxu0
      %v4241 = vadd.f32 %v3767, %v4240
      %v4242 = vpop.f32.mrf.mxu0
      %4243 = vmatprep.mubr.f32.mxu0 0.0
      %4244 = vmatmul.mubr.f32.gmra.mxu0 %v3786
      %v4245 = vpop.f32.mrf.mxu0
      %v4246 = vadd.f32 %v3767, %v4245
      %v4247 = vpop.f32.mrf.mxu0
      %4248 = vmatprep.mubr.f32.mxu0 0.0
      %4249 = vmatmul.mubr.f32.gmra.mxu0 %v3789
      %v4250 = vpop.f32.mrf.mxu0
      %v4251 = vadd.f32 %v3767, %v4250
      %v4252 = vpop.f32.mrf.mxu0
      %4253 = vmatprep.mubr.f32.mxu0 0.0
      %4254 = vmatmul.mubr.f32.gmra.mxu0 %v3792
      %v4255 = vpop.f32.mrf.mxu0
      %v4256 = vadd.f32 %v3767, %v4255
      %v4257 = vpop.f32.mrf.mxu0
      %4258 = vmatprep.mubr.f32.mxu0 0.0
      %4259 = vmatmul.mubr.f32.gmra.mxu0 %v3795
      %v4260 = vpop.f32.mrf.mxu0
      %v4261 = vadd.f32 %v3767, %v4260
      %v4262 = vpop.f32.mrf.mxu0
      %4263 = vmatprep.mubr.f32.mxu0 0.0
      %4264 = vmatmul.mubr.f32.gmra.mxu0 %v3798
      %v4265 = vpop.f32.mrf.mxu0
      %v4266 = vadd.f32 %v3767, %v4265
      %v4267 = vpop.f32.mrf.mxu0
      %4268 = vmatprep.mubr.f32.mxu0 0.0
      %4269 = vmatmul.mubr.f32.gmra.mxu0 %v3801
      %v4270 = vpop.f32.mrf.mxu0
      %v4271 = vadd.f32 %v3767, %v4270
      %v4272 = vpop.f32.mrf.mxu0
      %4273 = vmatprep.mubr.f32.mxu0 0.0
      %4274 = vmatmul.mubr.f32.gmra.mxu0 %v3804
      %v4275 = vpop.f32.mrf.mxu0
      %v4276 = vadd.f32 %v3767, %v4275
      %v4277 = vpop.f32.mrf.mxu0
      %4278 = vmatprep.mubr.f32.mxu0 0.0
      %4279 = vmatmul.mubr.f32.gmra.mxu0 %v3807
      %v4280 = vpop.f32.mrf.mxu0
      %v4281 = vadd.f32 %v3767, %v4280
      %v4282 = vpop.f32.mrf.mxu0
      %4283 = vmatprep.mubr.f32.mxu0 0.0
      %4284 = vmatmul.mubr.f32.gmra.mxu0 %v3810
      %v4285 = vpop.f32.mrf.mxu0
      %v4286 = vadd.f32 %v3767, %v4285
      %v4287 = vpop.f32.mrf.mxu0
      %4288 = vmatprep.mubr.f32.mxu0 0.0
      %4289 = vmatmul.mubr.f32.gmra.mxu0 %v3813
      %v4290 = vpop.f32.mrf.mxu0
      %v4291 = vadd.f32 %v3767, %v4290
      %v4292 = vpop.f32.mrf.mxu0
      %4293 = vmatprep.mubr.f32.mxu0 0.0
      %4294 = vmatmul.mubr.f32.gmra.mxu0 %v3816
      %v4295 = vpop.f32.mrf.mxu0
      %v4296 = vadd.f32 %v3767, %v4295
      %v4297 = vpop.f32.mrf.mxu0
      %4298 = vmatprep.mubr.f32.mxu0 0.0
      %4299 = vmatmul.mubr.f32.gmra.mxu0 %v3819
      %v4300 = vpop.f32.mrf.mxu0
      %v4301 = vadd.f32 %v3767, %v4300
      %v4302 = vpop.f32.mrf.mxu0
      %4303 = vmatprep.mubr.f32.mxu0 0.0
      %4304 = vmatmul.mubr.f32.gmra.mxu0 %v3822
      %v4305 = vpop.f32.mrf.mxu0
      %v4306 = vadd.f32 %v3767, %v4305
      %v4307 = vpop.f32.mrf.mxu0
      %4308 = vmatprep.mubr.f32.mxu0 0.0
      %4309 = vmatmul.mubr.f32.gmra.mxu0 %v3825
      %v4310 = vpop.f32.mrf.mxu0
      %v4311 = vadd.f32 %v3767, %v4310
      %v4312 = vpop.f32.mrf.mxu0
      %4313 = vmatprep.mubr.f32.mxu0 0.0
      %4314 = vmatmul.mubr.f32.gmra.mxu0 %v3828
      %v4315 = vpop.f32.mrf.mxu0
      %v4316 = vadd.f32 %v3767, %v4315
      %v4317 = vpop.f32.mrf.mxu0
      %4318 = vmatprep.mubr.f32.mxu0 0.0
      %4319 = vmatmul.mubr.f32.gmra.mxu0 %v3831
      %v4320 = vpop.f32.mrf.mxu0
      %v4321 = vadd.f32 %v3767, %v4320
      %v4322 = vpop.f32.mrf.mxu0
      %4323 = vmatprep.mubr.f32.mxu0 0.0
      %4324 = vmatmul.mubr.f32.gmra.mxu0 %v3834
      %v4325 = vpop.f32.mrf.mxu0
      %v4326 = vadd.f32 %v3767, %v4325
      %v4327 = vpop.f32.mrf.mxu0
      %4328 = vmatprep.mubr.f32.mxu0 0.0
      %4329 = vmatmul.mubr.f32.gmra.mxu0 %v3837
      %v4330 = vpop.f32.mrf.mxu0
      %v4331 = vadd.f32 %v3767, %v4330
      %v4332 = vpop.f32.mrf.mxu0
      %4333 = vmatprep.mubr.f32.mxu0 0.0
      %4334 = vmatmul.mubr.f32.gmra.mxu0 %v3840
      %v4335 = vpop.f32.mrf.mxu0
      %v4336 = vadd.f32 %v3767, %v4335
      %v4337 = vpop.f32.mrf.mxu0
      %4338 = vmatprep.mubr.f32.mxu0 0.0
      %4339 = vmatmul.mubr.f32.gmra.mxu0 %v3843
      %v4340 = vpop.f32.mrf.mxu0
      %v4341 = vadd.f32 %v3767, %v4340
      %v4342 = vpop.f32.mrf.mxu0
      %4343 = vmatprep.mubr.f32.mxu0 0.0
      %4344 = vmatmul.mubr.f32.gmra.mxu0 %v3846
      %v4345 = vpop.f32.mrf.mxu0
      %v4346 = vadd.f32 %v3767, %v4345
      %v4347 = vpop.f32.mrf.mxu0
      %4348 = vmatprep.mubr.f32.mxu0 0.0
      %4349 = vmatmul.mubr.f32.gmra.mxu0 %v3849
      %v4350 = vpop.f32.mrf.mxu0
      %v4351 = vadd.f32 %v3767, %v4350
      %v4352 = vpop.f32.mrf.mxu0
      %4353 = vmatprep.mubr.f32.mxu0 0.0
      %4354 = vmatmul.mubr.f32.gmra.mxu0 %v3852
      %v4355 = vpop.f32.mrf.mxu0
      %v4356 = vadd.f32 %v3767, %v4355
      %v4357 = vpop.f32.mrf.mxu0
      %4358 = vmatprep.mubr.f32.mxu0 0.0
      %4359 = vmatmul.mubr.f32.gmra.mxu0 %v3855
      %v4360 = vpop.f32.mrf.mxu0
      %v4361 = vadd.f32 %v3767, %v4360
      %v4362 = vpop.f32.mrf.mxu0
      %4363 = vmatprep.mubr.f32.mxu0 0.0
      %4364 = vmatmul.mubr.f32.gmra.mxu0 %v3858
      %v4365 = vpop.f32.mrf.mxu0
      %v4366 = vadd.f32 %v3767, %v4365
      %v4367 = vpop.f32.mrf.mxu0
      %4368 = vmatprep.mubr.f32.mxu0 0.0
      %4369 = vmatmul.mubr.f32.gmra.mxu0 %v3861
      %v4370 = vpop.f32.mrf.mxu0
      %v4371 = vadd.f32 %v3767, %v4370
      %v4372 = vpop.f32.mrf.mxu0
      %4373 = vmatprep.mubr.f32.mxu0 0.0
      %4374 = vmatmul.mubr.f32.gmra.mxu0 %v3864
      %v4375 = vpop.f32.mrf.mxu0
      %v4376 = vadd.f32 %v3767, %v4375
      %v4377 = vpop.f32.mrf.mxu0
      %4378 = vmatprep.mubr.f32.mxu0 0.0
      %4379 = vmatmul.mubr.f32.gmra.mxu0 %v3867
      %v4380 = vpop.f32.mrf.mxu0
      %v4381 = vadd.f32 %v3767, %v4380
      %v4382 = vpop.f32.mrf.mxu0
      %4383 = vmatprep.mubr.f32.mxu0 0.0
      %4384 = vmatmul.mubr.f32.gmra.mxu0 %v3870
      %v4385 = vpop.f32.mrf.mxu0
      %v4386 = vadd.f32 %v3767, %v4385
      %v4387 = vpop.f32.mrf.mxu0
      %4388 = vmatprep.mubr.f32.mxu0 0.0
      %4389 = vmatmul.mubr.f32.gmra.mxu0 %v3873
      %v4390 = vpop.f32.mrf.mxu0
      %v4391 = vadd.f32 %v3767, %v4390
      %v4392 = vpop.f32.mrf.mxu0
      %4393 = vmatprep.mubr.f32.mxu0 0.0
      %4394 = vmatmul.mubr.f32.gmra.mxu0 %v3876
      %v4395 = vpop.f32.mrf.mxu0
      %v4396 = vadd.f32 %v3767, %v4395
      %v4397 = vpop.f32.mrf.mxu0
      %4398 = vmatprep.mubr.f32.mxu0 0.0
      %4399 = vmatmul.mubr.f32.gmra.mxu0 %v3879
      %v4400 = vpop.f32.mrf.mxu0
      %v4401 = vadd.f32 %v3767, %v4400
      %v4402 = vpop.f32.mrf.mxu0
      %4403 = vmatprep.mubr.f32.mxu0 0.0
      %4404 = vmatmul.mubr.f32.gmra.mxu0 %v3882
      %v4405 = vpop.f32.mrf.mxu0
      %v4406 = vadd.f32 %v3767, %v4405
      %v4407 = vpop.f32.mrf.mxu0
      %4408 = vmatprep.mubr.f32.mxu0 0.0
      %4409 = vmatmul.mubr.f32.gmra.mxu0 %v3885
      %v4410 = vpop.f32.mrf.mxu0
      %v4411 = vadd.f32 %v3767, %v4410
      %v4412 = vpop.f32.mrf.mxu0
      %4413 = vmatprep.mubr.f32.mxu0 0.0
      %4414 = vmatmul.mubr.f32.gmra.mxu0 %v3888
      %v4415 = vpop.f32.mrf.mxu0
      %v4416 = vadd.f32 %v3767, %v4415
      %v4417 = vpop.f32.mrf.mxu0
      %4418 = vmatprep.mubr.f32.mxu0 0.0
      %4419 = vmatmul.mubr.f32.gmra.mxu0 %v3891
      %v4420 = vpop.f32.mrf.mxu0
      %v4421 = vadd.f32 %v3767, %v4420
      %v4422 = vpop.f32.mrf.mxu0
      %4423 = vmatprep.mubr.f32.mxu0 0.0
      %4424 = vmatmul.mubr.f32.gmra.mxu0 %v3894
      %v4425 = vpop.f32.mrf.mxu0
      %v4426 = vadd.f32 %v3767, %v4425
      %v4427 = vpop.f32.mrf.mxu0
      %4428 = vmatprep.mubr.f32.mxu0 0.0
      %4429 = vmatmul.mubr.f32.gmra.mxu0 %v3897
      %v4430 = vpop.f32.mrf.mxu0
      %v4431 = vadd.f32 %v3767, %v4430
      %v4432 = vpop.f32.mrf.mxu0
      %4433 = vmatprep.mubr.f32.mxu0 0.0
      %4434 = vmatmul.mubr.f32.gmra.mxu0 %v3900
      %v4435 = vpop.f32.mrf.mxu0
      %v4436 = vadd.f32 %v3767, %v4435
      %v4437 = vpop.f32.mrf.mxu0
      %4438 = vmatprep.mubr.f32.mxu0 0.0
      %4439 = vmatmul.mubr.f32.gmra.mxu0 %v3903
      %v4440 = vpop.f32.mrf.mxu0
      %v4441 = vadd.f32 %v3767, %v4440
      %v4442 = vpop.f32.mrf.mxu0
      %4443 = vmatprep.mubr.f32.mxu0 0.0
      %4444 = vmatmul.mubr.f32.gmra.mxu0 %v3906
      %v4445 = vpop.f32.mrf.mxu0
      %v4446 = vadd.f32 %v3767, %v4445
      %v4447 = vpop.f32.mrf.mxu0
      %4448 = vmatprep.mubr.f32.mxu0 0.0
      %4449 = vmatmul.mubr.f32.gmra.mxu0 %v3909
      %v4450 = vpop.f32.mrf.mxu0
      %v4451 = vadd.f32 %v3767, %v4450
      %v4452 = vpop.f32.mrf.mxu0
      %4453 = vmatprep.mubr.f32.mxu0 0.0
      %4454 = vmatmul.mubr.f32.gmra.mxu0 %v3912
      %v4455 = vpop.f32.mrf.mxu0
      %v4456 = vadd.f32 %v3767, %v4455
      %v4457 = vpop.f32.mrf.mxu0
      %4458 = vmatprep.mubr.f32.mxu0 0.0
      %4459 = vmatmul.mubr.f32.gmra.mxu0 %v3915
      %v4460 = vpop.f32.mrf.mxu0
      %v4461 = vadd.f32 %v3767, %v4460
      %v4462 = vpop.f32.mrf.mxu0
      %4463 = vmatprep.mubr.f32.mxu0 0.0
      %4464 = vmatmul.mubr.f32.gmra.mxu0 %v3918
      %v4465 = vpop.f32.mrf.mxu0
      %v4466 = vadd.f32 %v3767, %v4465
      %v4467 = vpop.f32.mrf.mxu0
      %4468 = vmatprep.mubr.f32.mxu0 0.0
      %4469 = vmatmul.mubr.f32.gmra.mxu0 %v3921
      %v4470 = vpop.f32.mrf.mxu0
      %v4471 = vadd.f32 %v3767, %v4470
      %v4472 = vpop.f32.mrf.mxu0
      %4473 = vmatprep.mubr.f32.mxu0 0.0
      %4474 = vmatmul.mubr.f32.gmra.mxu0 %v3924
      %v4475 = vpop.f32.mrf.mxu0
      %v4476 = vadd.f32 %v3767, %v4475
      %v4477 = vpop.f32.mrf.mxu0
      %4478 = vmatprep.mubr.f32.mxu0 0.0
      %4479 = vmatmul.mubr.f32.gmra.mxu0 %v3927
      %v4480 = vpop.f32.mrf.mxu0
      %v4481 = vadd.f32 %v3767, %v4480
      %v4482 = vpop.f32.mrf.mxu0
      %4483 = vmatprep.mubr.f32.mxu0 0.0
      %4484 = vmatmul.mubr.f32.gmra.mxu0 %v3930
      %v4485 = vpop.f32.mrf.mxu0
      %v4486 = vadd.f32 %v3767, %v4485
      %v4487 = vpop.f32.mrf.mxu0
      %4488 = vmatprep.mubr.f32.mxu0 0.0
      %4489 = vmatmul.mubr.f32.gmra.mxu0 %v3933
      %v4490 = vpop.f32.mrf.mxu0
      %v4491 = vadd.f32 %v3767, %v4490
      %v4492 = vpop.f32.mrf.mxu0
      %4493 = vmatprep.mubr.f32.mxu0 0.0
      %4494 = vmatmul.mubr.f32.gmra.mxu0 %v3936
      %v4495 = vpop.f32.mrf.mxu0
      %v4496 = vadd.f32 %v3767, %v4495
      %v4497 = vpop.f32.mrf.mxu0
      %4498 = vmatprep.mubr.f32.mxu0 0.0
      %4499 = vmatmul.mubr.f32.gmra.mxu0 %v3939
      %v4500 = vpop.f32.mrf.mxu0
      %v4501 = vadd.f32 %v3767, %v4500
      %v4502 = vpop.f32.mrf.mxu0
      %4503 = vmatprep.mubr.f32.mxu0 0.0
      %4504 = vmatmul.mubr.f32.gmra.mxu0 %v3942
      %v4505 = vpop.f32.mrf.mxu0
      %v4506 = vadd.f32 %v3767, %v4505
      %v4507 = vpop.f32.mrf.mxu0
      %4508 = vmatprep.mubr.f32.mxu0 0.0
      %4509 = vmatmul.mubr.f32.gmra.mxu0 %v3945
      %v4510 = vpop.f32.mrf.mxu0
      %v4511 = vadd.f32 %v3767, %v4510
      %v4512 = vpop.f32.mrf.mxu0
      %4513 = vmatprep.mubr.f32.mxu0 0.0
      %4514 = vmatmul.mubr.f32.gmra.mxu0 %v3948
      %v4515 = vpop.f32.mrf.mxu0
      %v4516 = vadd.f32 %v3767, %v4515
      %v4517 = vpop.f32.mrf.mxu0
      %4518 = vmatprep.mubr.f32.mxu0 0.0
      %4519 = vmatmul.mubr.f32.gmra.mxu0 %v3951
      %v4520 = vpop.f32.mrf.mxu0
      %v4521 = vadd.f32 %v3767, %v4520
      %v4522 = vpop.f32.mrf.mxu0
      %4523 = vmatprep.mubr.f32.mxu0 0.0
      %4524 = vmatmul.mubr.f32.gmra.mxu0 %v3954
      %v4525 = vpop.f32.mrf.mxu0
      %v4526 = vadd.f32 %v3767, %v4525
      %v4527 = vpop.f32.mrf.mxu0
      %4528 = vmatprep.mubr.f32.mxu0 0.0
      %4529 = vmatmul.mubr.f32.gmra.mxu0 %v3957
      %v4530 = vpop.f32.mrf.mxu0
      %v4531 = vadd.f32 %v3767, %v4530
      %v4532 = vpop.f32.mrf.mxu0
      %4533 = vmatprep.mubr.f32.mxu0 0.0
      %4534 = vmatmul.mubr.f32.gmra.mxu0 %v3960
      %v4535 = vpop.f32.mrf.mxu0
      %v4536 = vadd.f32 %v3767, %v4535
      %v4537 = vpop.f32.mrf.mxu0
      %4538 = vmatprep.mubr.f32.mxu0 0.0
      %4539 = vmatmul.mubr.f32.gmra.mxu0 %v3963
      %v4540 = vpop.f32.mrf.mxu0
      %v4541 = vadd.f32 %v3767, %v4540
      %v4542 = vpop.f32.mrf.mxu0
      %4543 = vmatprep.mubr.f32.mxu0 0.0
      %4544 = vmatmul.mubr.f32.gmra.mxu0 %v3966
      %v4545 = vpop.f32.mrf.mxu0
      %v4546 = vadd.f32 %v3767, %v4545
      %v4547 = vpop.f32.mrf.mxu0
      %4548 = vmatprep.mubr.f32.mxu0 0.0
      %4549 = vmatmul.mubr.f32.gmra.mxu0 %v3969
      %v4550 = vpop.f32.mrf.mxu0
      %v4551 = vadd.f32 %v3767, %v4550
      %v4552 = vpop.f32.mrf.mxu0
      %4553 = vmatprep.mubr.f32.mxu0 0.0
      %4554 = vmatmul.mubr.f32.gmra.mxu0 %v3972
      %v4555 = vpop.f32.mrf.mxu0
      %v4556 = vadd.f32 %v3767, %v4555
      %v4557 = vpop.f32.mrf.mxu0
      %4558 = vmatprep.mubr.f32.mxu0 0.0
      %4559 = vmatmul.mubr.f32.gmra.mxu0 %v3975
      %v4560 = vpop.f32.mrf.mxu0
      %v4561 = vadd.f32 %v3767, %v4560
      %v4562 = vpop.f32.mrf.mxu0
      %4563 = vmatprep.mubr.f32.mxu0 0.0
      %4564 = vmatmul.mubr.f32.gmra.mxu0 %v3978
      %v4565 = vpop.f32.mrf.mxu0
      %v4566 = vadd.f32 %v3767, %v4565
      %v4567 = vpop.f32.mrf.mxu0
      %4568 = vmatprep.mubr.f32.mxu0 0.0
      %4569 = vmatmul.mubr.f32.gmra.mxu0 %v3981
      %v4570 = vpop.f32.mrf.mxu0
      %v4571 = vadd.f32 %v3767, %v4570
      %v4572 = vpop.f32.mrf.mxu0
      %4573 = vmatprep.mubr.f32.mxu0 0.0
      %4574 = vmatmul.mubr.f32.gmra.mxu0 %v3984
      %v4575 = vpop.f32.mrf.mxu0
      %v4576 = vadd.f32 %v3767, %v4575
      %v4577 = vpop.f32.mrf.mxu0
      %4578 = vmatprep.mubr.f32.mxu0 0.0
      %4579 = vmatmul.mubr.f32.gmra.mxu0 %v3987
      %v4580 = vpop.f32.mrf.mxu0
      %v4581 = vadd.f32 %v3767, %v4580
      %v4582 = vpop.f32.mrf.mxu0
      %4583 = vmatprep.mubr.f32.mxu0 0.0
      %4584 = vmatmul.mubr.f32.gmra.mxu0 %v3990
      %v4585 = vpop.f32.mrf.mxu0
      %v4586 = vadd.f32 %v3767, %v4585
      %v4587 = vpop.f32.mrf.mxu0
      %4588 = vmatprep.mubr.f32.mxu0 0.0
      %4589 = vmatmul.mubr.f32.gmra.mxu0 %v3993
      %v4590 = vpop.f32.mrf.mxu0
      %v4591 = vadd.f32 %v3767, %v4590
      %v4592 = vpop.f32.mrf.mxu0
      %4593 = vmatprep.mubr.f32.mxu0 0.0
      %4594 = vmatmul.mubr.f32.gmra.mxu0 %v3996
      %v4595 = vpop.f32.mrf.mxu0
      %v4596 = vadd.f32 %v3767, %v4595
      %v4597 = vpop.f32.mrf.mxu0
      %4598 = vmatprep.mubr.f32.mxu0 0.0
      %4599 = vmatmul.mubr.f32.gmra.mxu0 %v3999
      %v4600 = vpop.f32.mrf.mxu0
      %v4601 = vadd.f32 %v3767, %v4600
      %v4602 = vpop.f32.mrf.mxu0
      %4603 = vmatprep.mubr.f32.mxu0 0.0
      %4604 = vmatmul.mubr.f32.gmra.mxu0 %v4002
      %v4605 = vpop.f32.mrf.mxu0
      %v4606 = vadd.f32 %v3767, %v4605
      %v4607 = vpop.f32.mrf.mxu0
      %4608 = vmatprep.mubr.f32.mxu0 0.0
      %4609 = vmatmul.mubr.f32.gmra.mxu0 %v4005
      %v4610 = vpop.f32.mrf.mxu0
      %v4611 = vadd.f32 %v3767, %v4610
      %v4612 = vpop.f32.mrf.mxu0
      %4613 = vmatprep.mubr.f32.mxu0 0.0
      %4614 = vmatmul.mubr.f32.gmra.mxu0 %v4008
      %v4615 = vpop.f32.mrf.mxu0
      %v4616 = vadd.f32 %v3767, %v4615
      %v4617 = vpop.f32.mrf.mxu0
      %4618 = vmatprep.mubr.f32.mxu0 0.0
      %4619 = vmatmul.mubr.f32.gmra.mxu0 %v4011
      %v4620 = vpop.f32.mrf.mxu0
      %v4621 = vadd.f32 %v3767, %v4620
      %v4622 = vpop.f32.mrf.mxu0
      %4623 = vmatprep.mubr.f32.mxu0 0.0
      %4624 = vmatmul.mubr.f32.gmra.mxu0 %v4014
      %v4625 = vpop.f32.mrf.mxu0
      %v4626 = vadd.f32 %v3767, %v4625
      %v4627 = vpop.f32.mrf.mxu0
      %4628 = vmatprep.mubr.f32.mxu0 0.0
      %4629 = vmatmul.mubr.f32.gmra.mxu0 %v4017
      %v4630 = vpop.f32.mrf.mxu0
      %v4631 = vadd.f32 %v3767, %v4630
      %v4632 = vpop.f32.mrf.mxu0
      %4633 = vmatprep.mubr.f32.mxu0 0.0
      %4634 = vmatmul.mubr.f32.gmra.mxu0 %v4020
      %v4635 = vpop.f32.mrf.mxu0
      %v4636 = vadd.f32 %v3767, %v4635
      %v4637 = vpop.f32.mrf.mxu0
      %4638 = vmatprep.mubr.f32.mxu0 0.0
      %4639 = vmatmul.mubr.f32.gmra.mxu0 %v4023
      %v4640 = vpop.f32.mrf.mxu0
      %v4641 = vadd.f32 %v3767, %v4640
      %v4642 = vpop.f32.mrf.mxu0
      %4643 = vmatprep.mubr.f32.mxu0 0.0
      %4644 = vmatmul.mubr.f32.gmra.mxu0 %v4026
      %v4645 = vpop.f32.mrf.mxu0
      %v4646 = vadd.f32 %v3767, %v4645
      %v4647 = vpop.f32.mrf.mxu0
      %4648 = vmatprep.mubr.f32.mxu0 0.0
      %4649 = vmatmul.mubr.f32.gmra.mxu0 %v4029
      %v4650 = vpop.f32.mrf.mxu0
      %v4651 = vadd.f32 %v3767, %v4650
      %v4652 = vpop.f32.mrf.mxu0
      %4653 = vmatprep.mubr.f32.mxu0 0.0
      %4654 = vmatmul.mubr.f32.gmra.mxu0 %v4032
      %v4655 = vpop.f32.mrf.mxu0
      %v4656 = vadd.f32 %v3767, %v4655
      %v4657 = vpop.f32.mrf.mxu0
      %4658 = vmatprep.mubr.f32.mxu0 0.0
      %4659 = vmatmul.mubr.f32.gmra.mxu0 %v4035
      %v4660 = vpop.f32.mrf.mxu0
      %v4661 = vadd.f32 %v3767, %v4660
      %v4662 = vpop.f32.mrf.mxu0
      %4663 = vmatprep.mubr.f32.mxu0 0.0
      %4664 = vmatmul.mubr.f32.gmra.mxu0 %v4038
      %v4665 = vpop.f32.mrf.mxu0
      %v4666 = vadd.f32 %v3767, %v4665
      %v4667 = vpop.f32.mrf.mxu0
      %4668 = vmatprep.mubr.f32.mxu0 0.0
      %4669 = vmatmul.mubr.f32.gmra.mxu0 %v4041
      %v4670 = vpop.f32.mrf.mxu0
      %v4671 = vadd.f32 %v3767, %v4670
      %v4672 = vpop.f32.mrf.mxu0
      %4673 = vmatprep.mubr.f32.mxu0 0.0
      %4674 = vmatmul.mubr.f32.gmra.mxu0 %v4044
      %v4675 = vpop.f32.mrf.mxu0
      %v4676 = vadd.f32 %v3767, %v4675
      %v4677 = vpop.f32.mrf.mxu0
      %4678 = vmatprep.mubr.f32.mxu0 0.0
      %4679 = vmatmul.mubr.f32.gmra.mxu0 %v4047
      %v4680 = vpop.f32.mrf.mxu0
      %v4681 = vadd.f32 %v3767, %v4680
      %v4682 = vpop.f32.mrf.mxu0
      %4683 = vmatprep.mubr.f32.mxu0 0.0
      %4684 = vmatmul.mubr.f32.gmra.mxu0 %v4050
      %v4685 = vpop.f32.mrf.mxu0
      %v4686 = vadd.f32 %v3767, %v4685
      %v4687 = vpop.f32.mrf.mxu0
      %4688 = vmatprep.mubr.f32.mxu0 0.0
      %4689 = vmatmul.mubr.f32.gmra.mxu0 %v4053
      %v4690 = vpop.f32.mrf.mxu0
      %v4691 = vadd.f32 %v3767, %v4690
      %v4692 = vpop.f32.mrf.mxu0
      %4693 = vmatprep.mubr.f32.mxu0 0.0
      %4694 = vmatmul.mubr.f32.gmra.mxu0 %v4056
      %v4695 = vpop.f32.mrf.mxu0
      %v4696 = vadd.f32 %v3767, %v4695
      %v4697 = vpop.f32.mrf.mxu0
      %4698 = vmatprep.mubr.f32.mxu0 0.0
      %4699 = vmatmul.mubr.f32.gmra.mxu0 %v4059
      %v4700 = vpop.f32.mrf.mxu0
      %v4701 = vadd.f32 %v3767, %v4700
      %v4702 = vpop.f32.mrf.mxu0
      %4703 = vmatprep.mubr.f32.mxu0 0.0
      %4704 = vmatmul.mubr.f32.gmra.mxu0 %v4062
      %v4705 = vpop.f32.mrf.mxu0
      %v4706 = vadd.f32 %v3767, %v4705
      %v4707 = vpop.f32.mrf.mxu0
      %4708 = vmatprep.mubr.f32.mxu0 0.0
      %4709 = vmatmul.mubr.f32.gmra.mxu0 %v4065
      %v4710 = vpop.f32.mrf.mxu0
      %v4711 = vadd.f32 %v3767, %v4710
      %v4712 = vpop.f32.mrf.mxu0
      %4713 = vmatprep.mubr.f32.mxu0 0.0
      %4714 = vmatmul.mubr.f32.gmra.mxu0 %v4068
      %v4715 = vpop.f32.mrf.mxu0
      %v4716 = vadd.f32 %v3767, %v4715
      %v4717 = vpop.f32.mrf.mxu0
      %4718 = vmatprep.mubr.f32.mxu0 0.0
      %4719 = vmatmul.mubr.f32.gmra.mxu0 %v4071
      %v4720 = vpop.f32.mrf.mxu0
      %v4721 = vadd.f32 %v3767, %v4720
      %v4722 = vpop.f32.mrf.mxu0
      %4723 = vmatprep.mubr.f32.mxu0 0.0
      %4724 = vmatmul.mubr.f32.gmra.mxu0 %v4074
      %v4725 = vpop.f32.mrf.mxu0
      %v4726 = vadd.f32 %v3767, %v4725
      %v4727 = vpop.f32.mrf.mxu0
      %4728 = vmatprep.mubr.f32.mxu0 0.0
      %4729 = vmatmul.mubr.f32.gmra.mxu0 %v4077
      %v4730 = vpop.f32.mrf.mxu0
      %v4731 = vadd.f32 %v3767, %v4730
      %v4732 = vpop.f32.mrf.mxu0
      %4733 = vmatprep.mubr.f32.mxu0 0.0
      %4734 = vmatmul.mubr.f32.gmra.mxu0 %v4080
      %v4735 = vpop.f32.mrf.mxu0
      %v4736 = vadd.f32 %v3767, %v4735
      %v4737 = vpop.f32.mrf.mxu0
      %4738 = vmatprep.mubr.f32.mxu0 0.0
      %4739 = vmatmul.mubr.f32.gmra.mxu0 %v4083
      %v4740 = vpop.f32.mrf.mxu0
      %v4741 = vadd.f32 %v3767, %v4740
      %v4742 = vpop.f32.mrf.mxu0
      %4743 = vmatprep.mubr.f32.mxu0 0.0
      %4744 = vmatmul.mubr.f32.gmra.mxu0 %v4086
      %v4745 = vpop.f32.mrf.mxu0
      %v4746 = vadd.f32 %v3767, %v4745
      %v4747 = vpop.f32.mrf.mxu0
      %4748 = vmatprep.mubr.f32.mxu0 0.0
      %4749 = vmatmul.mubr.f32.gmra.mxu0 %v4089
      %v4750 = vpop.f32.mrf.mxu0
      %v4751 = vadd.f32 %v3767, %v4750
      %v4752 = vpop.f32.mrf.mxu0
      %4753 = vmatprep.mubr.f32.mxu0 0.0
      %4754 = vmatmul.mubr.f32.gmra.mxu0 %v4092
      %v4755 = vpop.f32.mrf.mxu0
      %v4756 = vadd.f32 %v3767, %v4755
      %v4757 = vpop.f32.mrf.mxu0
      %4758 = vmatprep.mubr.f32.mxu0 0.0
      %4759 = vmatmul.mubr.f32.gmra.mxu0 %v4095
      %v4760 = vpop.f32.mrf.mxu0
      %v4761 = vadd.f32 %v3767, %v4760
      %v4762 = vpop.f32.mrf.mxu0
      %4763 = vmatprep.mubr.f32.mxu0 0.0
      %4764 = vmatmul.mubr.f32.gmra.mxu0 %v4098
      %v4765 = vpop.f32.mrf.mxu0
      %v4766 = vadd.f32 %v3767, %v4765
      %v4767 = vpop.f32.mrf.mxu0
      %4768 = vmatprep.mubr.f32.mxu0 0.0
      %4769 = vmatmul.mubr.f32.gmra.mxu0 %v4101
      %v4770 = vpop.f32.mrf.mxu0
      %v4771 = vadd.f32 %v3767, %v4770
      %v4772 = vpop.f32.mrf.mxu0
      %4773 = vmatprep.mubr.f32.mxu0 0.0
      %4774 = vmatmul.mubr.f32.gmra.mxu0 %v4104
      %v4775 = vpop.f32.mrf.mxu0
      %v4776 = vadd.f32 %v3767, %v4775
      %v4777 = vpop.f32.mrf.mxu0
      %4778 = vmatprep.mubr.f32.mxu0 0.0
      %4779 = vmatmul.mubr.f32.gmra.mxu0 %v4107
      %v4780 = vpop.f32.mrf.mxu0
      %v4781 = vadd.f32 %v3767, %v4780
      %v4782 = vpop.f32.mrf.mxu0
      %4783 = vmatprep.mubr.f32.mxu0 0.0
      %4784 = vmatmul.mubr.f32.gmra.mxu0 %v4110
      %v4785 = vpop.f32.mrf.mxu0
      %v4786 = vadd.f32 %v3767, %v4785
      %v4787 = vpop.f32.mrf.mxu0
      %4788 = vmatprep.mubr.f32.mxu0 0.0
      %4789 = vmatmul.mubr.f32.gmra.mxu0 %v4113
      %v4790 = vpop.f32.mrf.mxu0
      %v4791 = vadd.f32 %v3767, %v4790
      %v4792 = vpop.f32.mrf.mxu0
      %4793 = vmatprep.mubr.f32.mxu0 0.0
      %4794 = vmatmul.mubr.f32.gmra.mxu0 %v4116
      %v4795 = vpop.f32.mrf.mxu0
      %v4796 = vadd.f32 %v3767, %v4795
      %v4797 = vpop.f32.mrf.mxu0
      %4798 = vmatprep.mubr.f32.mxu0 0.0
      %4799 = vmatmul.mubr.f32.gmra.mxu0 %v4119
      %v4800 = vpop.f32.mrf.mxu0
      %v4801 = vadd.f32 %v3767, %v4800
      %v4802 = vpop.f32.mrf.mxu0
      %4803 = vmatprep.mubr.f32.mxu0 0.0
      %4804 = vmatmul.mubr.f32.gmra.mxu0 %v4122
      %v4805 = vpop.f32.mrf.mxu0
      %v4806 = vadd.f32 %v3767, %v4805
      %v4807 = vpop.f32.mrf.mxu0
      %4808 = vmatprep.mubr.f32.mxu0 0.0
      %4809 = vmatmul.mubr.f32.gmra.mxu0 %v4125
      %v4810 = vpop.f32.mrf.mxu0
      %v4811 = vadd.f32 %v3767, %v4810
      %v4812 = vpop.f32.mrf.mxu0
      %4813 = vmatprep.mubr.f32.mxu0 0.0
      %4814 = vmatmul.mubr.f32.gmra.mxu0 %v4128
      %v4815 = vpop.f32.mrf.mxu0
      %v4816 = vadd.f32 %v3767, %v4815
      %v4817 = vpop.f32.mrf.mxu0
      %4818 = vmatprep.mubr.f32.mxu0 0.0
      %4819 = vmatmul.mubr.f32.gmra.mxu0 %v4131
      %v4820 = vpop.f32.mrf.mxu0
      %v4821 = vadd.f32 %v3767, %v4820
      %v4822 = vpop.f32.mrf.mxu0
      %4823 = vmatprep.mubr.f32.mxu0 0.0
      %4824 = vmatmul.mubr.f32.gmra.mxu0 %v4134
      %v4825 = vpop.f32.mrf.mxu0
      %v4826 = vadd.f32 %v3767, %v4825
      %v4827 = vpop.f32.mrf.mxu0
      %4828 = vmatprep.mubr.f32.mxu0 0.0
      %4829 = vmatmul.mubr.f32.gmra.mxu0 %v4137
      %v4830 = vpop.f32.mrf.mxu0
      %v4831 = vadd.f32 %v3767, %v4830
      %v4832 = vpop.f32.mrf.mxu0
      %4833 = vmatprep.mubr.f32.mxu0 0.0
      %4834 = vmatmul.mubr.f32.gmra.mxu0 %v4140
      %v4835 = vpop.f32.mrf.mxu0
      %v4836 = vadd.f32 %v3767, %v4835
      %v4837 = vpop.f32.mrf.mxu0
      %4838 = vmatprep.mubr.f32.mxu0 0.0
      %4839 = vmatmul.mubr.f32.gmra.mxu0 %v4143
      %v4840 = vpop.f32.mrf.mxu0
      %v4841 = vadd.f32 %v3767, %v4840
      %v4842 = vpop.f32.mrf.mxu0
      %4843 = vmatprep.mubr.f32.mxu0 0.0
      %4844 = vmatmul.mubr.f32.gmra.mxu0 %v4146
      %v4845 = vpop.f32.mrf.mxu0
      %v4846 = vadd.f32 %v3767, %v4845
      %v4847 = vpop.f32.mrf.mxu0
      %4848 = vmatprep.mubr.f32.mxu0 0.0
      %4849 = vmatmul.mubr.f32.gmra.mxu0 %v4149
      %v4850 = vpop.f32.mrf.mxu0
      %v4851 = vadd.f32 %v3767, %v4850
      %v4852 = vpop.f32.mrf.mxu0
      %4853 = vmatprep.mubr.f32.mxu0 0.0
      %4854 = vmatmul.mubr.f32.gmra.mxu0 %v4152
      %v4855 = vpop.f32.mrf.mxu0
      %v4856 = vadd.f32 %v3767, %v4855
      %v4857 = vpop.f32.mrf.mxu0
      %4858 = vdwg.mxu0
      %4859 = vst.msk [vmem:[%s256] sm:$0xff] %vm3769, %v4221
      %4860 = vst.msk [vmem:[%s256 + $0x8] sm:$0xff] %vm3769, %v4226
      %4861 = vst.msk [vmem:[%s256 + $0x10] sm:$0xff] %vm3769, %v4231
      %4862 = vst.msk [vmem:[%s256 + $0x18] sm:$0xff] %vm3769, %v4236
      %4863 = vst.msk [vmem:[%s256 + $0x20] sm:$0xff] %vm3769, %v4241
      %4864 = vst.msk [vmem:[%s256 + $0x28] sm:$0xff] %vm3769, %v4246
      %4865 = vst.msk [vmem:[%s256 + $0x30] sm:$0xff] %vm3769, %v4251
      %4866 = vst.msk [vmem:[%s256 + $0x38] sm:$0xff] %vm3769, %v4256
      %4867 = vst.msk [vmem:[%s256 + $0x40] sm:$0xff] %vm3769, %v4261
      %4868 = vst.msk [vmem:[%s256 + $0x48] sm:$0xff] %vm3769, %v4266
      %4869 = vst.msk [vmem:[%s256 + $0x50] sm:$0xff] %vm3769, %v4271
      %4870 = vst.msk [vmem:[%s256 + $0x58] sm:$0xff] %vm3769, %v4276
      %4871 = vst.msk [vmem:[%s256 + $0x60] sm:$0xff] %vm3769, %v4281
      %4872 = vst.msk [vmem:[%s256 + $0x68] sm:$0xff] %vm3769, %v4286
      %4873 = vst.msk [vmem:[%s256 + $0x70] sm:$0xff] %vm3769, %v4291
      %4874 = vst.msk [vmem:[%s256 + $0x78] sm:$0xff] %vm3769, %v4296
      %4875 = vst.msk [vmem:[%s256 + $0x80] sm:$0xff] %vm3769, %v4301
      %4876 = vst.msk [vmem:[%s256 + $0x88] sm:$0xff] %vm3769, %v4306
      %4877 = vst.msk [vmem:[%s256 + $0x90] sm:$0xff] %vm3769, %v4311
      %4878 = vst.msk [vmem:[%s256 + $0x98] sm:$0xff] %vm3769, %v4316
      %4879 = vst.msk [vmem:[%s256 + $0xa0] sm:$0xff] %vm3769, %v4321
      %4880 = vst.msk [vmem:[%s256 + $0xa8] sm:$0xff] %vm3769, %v4326
      %4881 = vst.msk [vmem:[%s256 + $0xb0] sm:$0xff] %vm3769, %v4331
      %4882 = vst.msk [vmem:[%s256 + $0xb8] sm:$0xff] %vm3769, %v4336
      %4883 = vst.msk [vmem:[%s256 + $0xc0] sm:$0xff] %vm3769, %v4341
      %4884 = vst.msk [vmem:[%s256 + $0xc8] sm:$0xff] %vm3769, %v4346
      %4885 = vst.msk [vmem:[%s256 + $0xd0] sm:$0xff] %vm3769, %v4351
      %4886 = vst.msk [vmem:[%s256 + $0xd8] sm:$0xff] %vm3769, %v4356
      %4887 = vst.msk [vmem:[%s256 + $0xe0] sm:$0xff] %vm3769, %v4361
      %4888 = vst.msk [vmem:[%s256 + $0xe8] sm:$0xff] %vm3769, %v4366
      %4889 = vst.msk [vmem:[%s256 + $0xf0] sm:$0xff] %vm3769, %v4371
      %4890 = vst.msk [vmem:[%s256 + $0xf8] sm:$0xff] %vm3769, %v4376
      %4891 = vst.msk [vmem:[%s256 + $0x100] sm:$0xff] %vm3769, %v4381
      %4892 = vst.msk [vmem:[%s256 + $0x108] sm:$0xff] %vm3769, %v4386
      %4893 = vst.msk [vmem:[%s256 + $0x110] sm:$0xff] %vm3769, %v4391
      %4894 = vst.msk [vmem:[%s256 + $0x118] sm:$0xff] %vm3769, %v4396
      %4895 = vst.msk [vmem:[%s256 + $0x120] sm:$0xff] %vm3769, %v4401
      %4896 = vst.msk [vmem:[%s256 + $0x128] sm:$0xff] %vm3769, %v4406
      %4897 = vst.msk [vmem:[%s256 + $0x130] sm:$0xff] %vm3769, %v4411
      %4898 = vst.msk [vmem:[%s256 + $0x138] sm:$0xff] %vm3769, %v4416
      %4899 = vst.msk [vmem:[%s256 + $0x140] sm:$0xff] %vm3769, %v4421
      %4900 = vst.msk [vmem:[%s256 + $0x148] sm:$0xff] %vm3769, %v4426
      %4901 = vst.msk [vmem:[%s256 + $0x150] sm:$0xff] %vm3769, %v4431
      %4902 = vst.msk [vmem:[%s256 + $0x158] sm:$0xff] %vm3769, %v4436
      %4903 = vst.msk [vmem:[%s256 + $0x160] sm:$0xff] %vm3769, %v4441
      %4904 = vst.msk [vmem:[%s256 + $0x168] sm:$0xff] %vm3769, %v4446
      %4905 = vst.msk [vmem:[%s256 + $0x170] sm:$0xff] %vm3769, %v4451
      %4906 = vst.msk [vmem:[%s256 + $0x178] sm:$0xff] %vm3769, %v4456
      %4907 = vst.msk [vmem:[%s256 + $0x180] sm:$0xff] %vm3769, %v4461
      %4908 = vst.msk [vmem:[%s256 + $0x188] sm:$0xff] %vm3769, %v4466
      %4909 = vst.msk [vmem:[%s256 + $0x190] sm:$0xff] %vm3769, %v4471
      %4910 = vst.msk [vmem:[%s256 + $0x198] sm:$0xff] %vm3769, %v4476
      %4911 = vst.msk [vmem:[%s256 + $0x1a0] sm:$0xff] %vm3769, %v4481
      %4912 = vst.msk [vmem:[%s256 + $0x1a8] sm:$0xff] %vm3769, %v4486
      %4913 = vst.msk [vmem:[%s256 + $0x1b0] sm:$0xff] %vm3769, %v4491
      %4914 = vst.msk [vmem:[%s256 + $0x1b8] sm:$0xff] %vm3769, %v4496
      %4915 = vst.msk [vmem:[%s256 + $0x1c0] sm:$0xff] %vm3769, %v4501
      %4916 = vst.msk [vmem:[%s256 + $0x1c8] sm:$0xff] %vm3769, %v4506
      %4917 = vst.msk [vmem:[%s256 + $0x1d0] sm:$0xff] %vm3769, %v4511
      %4918 = vst.msk [vmem:[%s256 + $0x1d8] sm:$0xff] %vm3769, %v4516
      %4919 = vst.msk [vmem:[%s256 + $0x1e0] sm:$0xff] %vm3769, %v4521
      %4920 = vst.msk [vmem:[%s256 + $0x1e8] sm:$0xff] %vm3769, %v4526
      %4921 = vst.msk [vmem:[%s256 + $0x1f0] sm:$0xff] %vm3769, %v4531
      %4922 = vst.msk [vmem:[%s256 + $0x1f8] sm:$0xff] %vm3769, %v4536
      %4923 = vst.msk [vmem:[%s256 + $0x200] sm:$0xff] %vm3769, %v4541
      %4924 = vst.msk [vmem:[%s256 + $0x208] sm:$0xff] %vm3769, %v4546
      %4925 = vst.msk [vmem:[%s256 + $0x210] sm:$0xff] %vm3769, %v4551
      %4926 = vst.msk [vmem:[%s256 + $0x218] sm:$0xff] %vm3769, %v4556
      %4927 = vst.msk [vmem:[%s256 + $0x220] sm:$0xff] %vm3769, %v4561
      %4928 = vst.msk [vmem:[%s256 + $0x228] sm:$0xff] %vm3769, %v4566
      %4929 = vst.msk [vmem:[%s256 + $0x230] sm:$0xff] %vm3769, %v4571
      %4930 = vst.msk [vmem:[%s256 + $0x238] sm:$0xff] %vm3769, %v4576
      %4931 = vst.msk [vmem:[%s256 + $0x240] sm:$0xff] %vm3769, %v4581
      %4932 = vst.msk [vmem:[%s256 + $0x248] sm:$0xff] %vm3769, %v4586
      %4933 = vst.msk [vmem:[%s256 + $0x250] sm:$0xff] %vm3769, %v4591
      %4934 = vst.msk [vmem:[%s256 + $0x258] sm:$0xff] %vm3769, %v4596
      %4935 = vst.msk [vmem:[%s256 + $0x260] sm:$0xff] %vm3769, %v4601
      %4936 = vst.msk [vmem:[%s256 + $0x268] sm:$0xff] %vm3769, %v4606
      %4937 = vst.msk [vmem:[%s256 + $0x270] sm:$0xff] %vm3769, %v4611
      %4938 = vst.msk [vmem:[%s256 + $0x278] sm:$0xff] %vm3769, %v4616
      %4939 = vst.msk [vmem:[%s256 + $0x280] sm:$0xff] %vm3769, %v4621
      %4940 = vst.msk [vmem:[%s256 + $0x288] sm:$0xff] %vm3769, %v4626
      %4941 = vst.msk [vmem:[%s256 + $0x290] sm:$0xff] %vm3769, %v4631
      %4942 = vst.msk [vmem:[%s256 + $0x298] sm:$0xff] %vm3769, %v4636
      %4943 = vst.msk [vmem:[%s256 + $0x2a0] sm:$0xff] %vm3769, %v4641
      %4944 = vst.msk [vmem:[%s256 + $0x2a8] sm:$0xff] %vm3769, %v4646
      %4945 = vst.msk [vmem:[%s256 + $0x2b0] sm:$0xff] %vm3769, %v4651
      %4946 = vst.msk [vmem:[%s256 + $0x2b8] sm:$0xff] %vm3769, %v4656
      %4947 = vst.msk [vmem:[%s256 + $0x2c0] sm:$0xff] %vm3769, %v4661
      %4948 = vst.msk [vmem:[%s256 + $0x2c8] sm:$0xff] %vm3769, %v4666
      %4949 = vst.msk [vmem:[%s256 + $0x2d0] sm:$0xff] %vm3769, %v4671
      %4950 = vst.msk [vmem:[%s256 + $0x2d8] sm:$0xff] %vm3769, %v4676
      %4951 = vst.msk [vmem:[%s256 + $0x2e0] sm:$0xff] %vm3769, %v4681
      %4952 = vst.msk [vmem:[%s256 + $0x2e8] sm:$0xff] %vm3769, %v4686
      %4953 = vst.msk [vmem:[%s256 + $0x2f0] sm:$0xff] %vm3769, %v4691
      %4954 = vst.msk [vmem:[%s256 + $0x2f8] sm:$0xff] %vm3769, %v4696
      %4955 = vst.msk [vmem:[%s256 + $0x300] sm:$0xff] %vm3769, %v4701
      %4956 = vst.msk [vmem:[%s256 + $0x308] sm:$0xff] %vm3769, %v4706
      %4957 = vst.msk [vmem:[%s256 + $0x310] sm:$0xff] %vm3769, %v4711
      %4958 = vst.msk [vmem:[%s256 + $0x318] sm:$0xff] %vm3769, %v4716
      %4959 = vst.msk [vmem:[%s256 + $0x320] sm:$0xff] %vm3769, %v4721
      %4960 = vst.msk [vmem:[%s256 + $0x328] sm:$0xff] %vm3769, %v4726
      %4961 = vst.msk [vmem:[%s256 + $0x330] sm:$0xff] %vm3769, %v4731
      %4962 = vst.msk [vmem:[%s256 + $0x338] sm:$0xff] %vm3769, %v4736
      %4963 = vst.msk [vmem:[%s256 + $0x340] sm:$0xff] %vm3769, %v4741
      %4964 = vst.msk [vmem:[%s256 + $0x348] sm:$0xff] %vm3769, %v4746
      %4965 = vst.msk [vmem:[%s256 + $0x350] sm:$0xff] %vm3769, %v4751
      %4966 = vst.msk [vmem:[%s256 + $0x358] sm:$0xff] %vm3769, %v4756
      %4967 = vst.msk [vmem:[%s256 + $0x360] sm:$0xff] %vm3769, %v4761
      %4968 = vst.msk [vmem:[%s256 + $0x368] sm:$0xff] %vm3769, %v4766
      %4969 = vst.msk [vmem:[%s256 + $0x370] sm:$0xff] %vm3769, %v4771
      %4970 = vst.msk [vmem:[%s256 + $0x378] sm:$0xff] %vm3769, %v4776
      %4971 = vst.msk [vmem:[%s256 + $0x380] sm:$0xff] %vm3769, %v4781
      %4972 = vst.msk [vmem:[%s256 + $0x388] sm:$0xff] %vm3769, %v4786
      %4973 = vst.msk [vmem:[%s256 + $0x390] sm:$0xff] %vm3769, %v4791
      %4974 = vst.msk [vmem:[%s256 + $0x398] sm:$0xff] %vm3769, %v4796
      %4975 = vst.msk [vmem:[%s256 + $0x3a0] sm:$0xff] %vm3769, %v4801
      %4976 = vst.msk [vmem:[%s256 + $0x3a8] sm:$0xff] %vm3769, %v4806
      %4977 = vst.msk [vmem:[%s256 + $0x3b0] sm:$0xff] %vm3769, %v4811
      %4978 = vst.msk [vmem:[%s256 + $0x3b8] sm:$0xff] %vm3769, %v4816
      %4979 = vst.msk [vmem:[%s256 + $0x3c0] sm:$0xff] %vm3769, %v4821
      %4980 = vst.msk [vmem:[%s256 + $0x3c8] sm:$0xff] %vm3769, %v4826
      %4981 = vst.msk [vmem:[%s256 + $0x3d0] sm:$0xff] %vm3769, %v4831
      %4982 = vst.msk [vmem:[%s256 + $0x3d8] sm:$0xff] %vm3769, %v4836
      %4983 = vst.msk [vmem:[%s256 + $0x3e0] sm:$0xff] %vm3769, %v4841
      %4984 = vst.msk [vmem:[%s256 + $0x3e8] sm:$0xff] %vm3769, %v4846
      %4985 = vst.msk [vmem:[%s256 + $0x3f0] sm:$0xff] %vm3769, %v4851
      %4986 = vst.msk [vmem:[%s256 + $0x3f8] sm:$0xff] %vm3769, %v4856
      %s4987 = smul.u32 128, %s17
      %p4988 = scmp.lt.s32.totalorder %s4987, 255
      %s4989 = scalar_select %p4988, %s4987, 255
      %s4990 = smul.addr %s4989, 8
      %s4991 = scalar_lea.vmem %s6, %s4990
      // Predicated region
      $region45: #{encoder_head_pallas.1} parent=43 // pred_check
        %p4992 = pneg %p166
      $region46: #{encoder_head_pallas.1} parent=43 // pred_check_branch
        %4994 = sbr.rel (%p4992) target = $region48
      $region47: #{encoder_head_pallas.1} parent=43 // pred_region
        %s4995 = smul.u32 128, %s17
      $region48: #{encoder_head_pallas.1} parent=43 // pred_fallthru
        _
    $region44: #{encoder_head_pallas.1} parent=5 // pred_fallthru
      _
    %p4996 = scmp.le.s32.totalorder 2, %s12
    // Predicated region
    $region49: #{encoder_head_pallas.1} parent=5 // pred_check
      %p4997 = pneg %p4996
    $region50: #{encoder_head_pallas.1} parent=5 // pred_check_branch
      %4999 = sbr.rel (%p4997) target = $region52
    $region51: #{encoder_head_pallas.1} parent=5 // pred_region
      %s5000 = ssub.s32 %s12, 2
      // Predicated region
      $region53: #{encoder_head_pallas.1} parent=51 // pred_check
        %p5001 = pneg %p172
      $region54: #{encoder_head_pallas.1} parent=51 // pred_check_branch
        %5003 = sbr.rel (%p5001) target = $region56
      $region55: #{encoder_head_pallas.1} parent=51 // pred_region
        %s5004 = smul.u32 128, %s18
        %p5005 = scmp.lt.s32.totalorder %s5004, 255
        %s5006 = scalar_select %p5005, %s5004, 255
        %s5007 = smul.addr %s5006, 8
        %s5008 = scalar_lea.vmem %s6, %s5007
      $region56: #{encoder_head_pallas.1} parent=51 // pred_fallthru
        _
    $region52: #{encoder_head_pallas.1} parent=5 // pred_fallthru
      _
  $region6: #{encoder_head_pallas.1} parent=0 // loop_footer
    %s16 = sadd.s32 1, %s12
  $region7: #{encoder_head_pallas.1} parent=0 // loop_footer_branch
    %11 = sbr.rel target = $region3
  $region8: #{encoder_head_pallas.1} parent=0 // loop_exit
    _

</llo_original>
